<compile_context>
chip_gen: v5e
topology: v5e:2x2
jax: 0.10.0
libtpu: 0.0.40
codegen_flags: <defaults>
</compile_context>

<pallas_src>
import functools

import jax
import jax.numpy as jnp
import numpy as np
from jax.experimental import pallas as pl
from jax.experimental.pallas import tpu as pltpu


def _cdiv(a, b):
    return -(-a // b)


def _ru(x, m):
    return _cdiv(x, m) * m


def _column_attn_kernel(*refs, num_heads, head_dim, group_block,
                        compute_dtype, has_mask, approx_recip):
    """One grid step = GB (column,batch) groups.

    x_ref    : (GB, R, E)        tokens of these groups (all rows of each MSA column)
    mask_ref : (GB, 1, R)        1.0 where the key row is padding (only when has_mask)
    w*T_ref  : (E, E)            pre-transposed linear weights (y = x @ W^T == x @ wT)
    b*_ref   : (1, E)            f32 biases (q-scaling already folded into bq)
    out_ref  : (GB, R, E)
    attn_ref : (H, GB, R*R)      lane-dense, head-major attention block
    o_scr    : (GB*R, E) f32     VMEM scratch for the concatenated head outputs
    """
    if has_mask:
        (x_ref, mask_ref, wqT_ref, bq_ref, wkT_ref, bk_ref,
         wvT_ref, bv_ref, woT_ref, bo_ref, out_ref, attn_ref, o_scr) = refs
    else:
        (x_ref, wqT_ref, bq_ref, wkT_ref, bk_ref,
         wvT_ref, bv_ref, woT_ref, bo_ref, out_ref, attn_ref, o_scr) = refs
        mask_ref = None

    H, Dh, GB = num_heads, head_dim, group_block
    R = x_ref.shape[1]
    E = x_ref.shape[2]

    # QKV projections: one big (GB*R, E) x (E, E) MXU matmul each, f32 accumulation.
    x2 = x_ref[...].reshape(GB * R, E).astype(compute_dtype)
    q = jnp.dot(x2, wqT_ref[...], preferred_element_type=jnp.float32) + bq_ref[...]
    k = jnp.dot(x2, wkT_ref[...], preferred_element_type=jnp.float32) + bk_ref[...]
    v = jnp.dot(x2, wvT_ref[...], preferred_element_type=jnp.float32) + bv_ref[...]

    q3 = q.astype(compute_dtype).reshape(GB, R, E)
    k3 = k.astype(compute_dtype).reshape(GB, R, E)
    v3 = v.astype(compute_dtype).reshape(GB, R, E)

    if has_mask:
        # Hoisted out of the head loop: the broadcast/compare is emitted once, not H times
        # (JAX does not CSE broadcast_in_dim).  Exact masked_fill(-10000) semantics are kept
        # below so the all-padding-row case matches the PyTorch reference (uniform softmax).
        mask_full = jnp.broadcast_to(mask_ref[...] > 0.5, (GB, R, R))

    for h in range(H):                                   # static unroll; H is small
        sl = slice(h * Dh, (h + 1) * Dh)
        qh, kh, vh = q3[:, :, sl], k3[:, :, sl], v3[:, :, sl]   # (GB, R, Dh)

        # Batched (over GB groups) R x R scores for this head.
        s = jnp.einsum('grd,gsd->grs', qh, kh,
                       preferred_element_type=jnp.float32)      # (GB, R, R) f32
        if has_mask:
            s = jnp.where(mask_full, jnp.float32(-10000.0), s)

        m = jnp.max(s, axis=-1, keepdims=True)
        e = jnp.exp(s - m)
        denom = jnp.sum(e, axis=-1, keepdims=True)
        if approx_recip:
            p = e * pl.reciprocal(denom, approx=True)           # EUP slot, frees VALU
        else:
            p = e / denom

        # Lane-dense attn store: (GB, R, R) -> (GB, R*R).  This matches the row-major layout
        # of the final (H, G, R, R) tensor, so the reshape outside the kernel stays free.
        attn_ref[h] = p.reshape(GB, R * R).astype(attn_ref.dtype)

        pv = jnp.einsum('grs,gsd->grd', p.astype(compute_dtype), vh,
                        preferred_element_type=jnp.float32)     # (GB, R, Dh) f32
        # Write this head's output into its slice of the scratch (no lane-concat of H pieces).
        o_scr[:, h * Dh:(h + 1) * Dh] = pv.reshape(GB * R, Dh)

    o2 = jnp.dot(o_scr[...].astype(compute_dtype), woT_ref[...],
                 preferred_element_type=jnp.float32) + bo_ref[...]
    out_ref[...] = o2.reshape(GB, R, E).astype(out_ref.dtype)


def _vmem_limit_bytes():
    """Generation-aware scoped-VMEM limit (~5/8 of physical per-TensorCore VMEM)."""
    try:
        cap = int(pltpu.get_tpu_info().vmem_capacity_bytes)
    except Exception:
        cap = 64 * 1024 * 1024            # conservative fallback (v7x per-TC VMEM)
    # 128 MiB (v5e/v6e) -> 80 MiB limit; 64 MiB (v7x) -> 40 MiB limit.
    return int(min(max(cap * 5 // 8, 16 * 1024 * 1024), 100 * 1024 * 1024))


def _choose_group_block(G, R, E, H, x_bytes, out_bytes, attn_bytes, c_bytes,
                        has_mask, vmem_limit, row_target=256):
    """How many (column,batch) groups to process per grid step (multiple of 8, or G)."""
    Rp8 = _ru(R, 8)
    Ep = _ru(E, 128)
    RRp = _ru(R * R, 128)
    Rl = _ru(R, 128)

    # Double-buffered pipeline blocks, per group.
    per_group = (2 * Rp8 * Ep * x_bytes          # x block
                 + 2 * Rp8 * Ep * out_bytes      # out block
                 + 2 * H * RRp * attn_bytes)     # attn block (lane-dense layout)
    if has_mask:
        per_group += 2 * 8 * Rl * 4              # mask block
    # Single-copy intermediates: q/k/v + o_scratch (f32), compute-dtype copies, per-head temps.
    per_group += R * Ep * (4 * 4 + 4 * c_bytes) + 6 * Rp8 * Rl * 4

    # Grid-invariant residents: single-buffered weights, double-buffered biases, margin.
    resident = 4 * _ru(E, 8) * Ep * c_bytes + 2 * 4 * 8 * Ep * 4 + 2 * 1024 * 1024
    budget = max(vmem_limit - resident, 8 * per_group)
    cap = max(8, (int(budget // per_group) // 8) * 8)

    if G <= 8:
        return G

    want = _ru(max(1, _cdiv(row_target, R)), 8)   # fill the 256-row MXU (v6e/v7x)
    gb = min(want, cap)
    # Prefer >= 4 grid steps (>= 2 per TensorCore under megacore) while keeping >= 128 MXU rows.
    while gb > 8 and _cdiv(G, gb) < 4 and (gb - 8) * R >= 128:
        gb -= 8
    if gb >= G:
        return G
    # Prefer an exact divisor of G close to gb (avoids the zero-padding pass over x).
    for d in range(gb, max(gb // 2, 7), -8):
        if G % d == 0:
            return d
    return gb


def column_self_attention(x, params, num_heads,
                          self_attention_padding_mask=None,
                          compute_dtype=jnp.float32,
                          attn_dtype=None,
                          approx_reciprocal=True):
    """x: (R, C, N, E).  Returns (out (R,C,N,E) in x.dtype, attn (H,C,N,R,R)).

    compute_dtype   : dtype fed to the MXU matmuls (jnp.float32 or jnp.bfloat16);
                      accumulation and softmax are always f32.
    attn_dtype      : dtype of the returned attention tensor (default: x.dtype).
    approx_reciprocal: use the EUP approximate reciprocal for the softmax denominator
                      (rows sum to 1 only approximately); set False for exact division.

    The PyTorch num_rows==1 special case (attention := ones) is reproduced by the general
    kernel up to reciprocal accuracy, since softmax over a single key is 1 and q*k scaling
    cancels.  self_attention_mask is unsupported (NotImplementedError in the reference).
    """
    R, C, N, E = x.shape
    H = num_heads
    assert E % H == 0, "emb_dim must be divisible by num_heads"
    Dh = E // H
    G = C * N
    scaling = Dh ** (-0.5)
    has_mask = self_attention_padding_mask is not None
    attn_dt = x.dtype if attn_dtype is None else attn_dtype
    cbytes = jnp.dtype(compute_dtype).itemsize
    xbytes = jnp.dtype(x.dtype).itemsize
    abytes = jnp.dtype(attn_dt).itemsize

    vmem_limit = _vmem_limit_bytes()
    GB = _choose_group_block(G, R, E, H, xbytes, xbytes, abytes, cbytes,
                             has_mask, vmem_limit)
    Gp = _ru(G, GB)
    grid = (Gp // GB,)

    # Group-major layout: (R,C,N,E) -> (C,N,R,E) -> (G,R,E), group g = c*N + n.
    # TODO(synk): fold this transpose (and the inverse one on `out`) into the kernel via an
    # in-kernel pltpu.einshape on (R, GB, E) blocks to save ~4x|x| bytes of HBM traffic; kept
    # as an XLA transpose here for lowering robustness across v5e/v6e/v7x.
    xg = jnp.transpose(x, (1, 2, 0, 3)).reshape(G, R, E)
    if Gp > G:
        xg = jnp.pad(xg, ((0, Gp - G), (0, 0), (0, 0)))

    inputs = [xg]
    in_specs = [pl.BlockSpec((GB, R, E), lambda g: (g, 0, 0))]
    if has_mask:
        # padding mask: (N, R, C) bool -> (C, N, R) -> (G, 1, R) float
        maskg = jnp.transpose(self_attention_padding_mask.astype(jnp.float32),
                              (2, 0, 1)).reshape(G, 1, R)
        if Gp > G:
            maskg = jnp.pad(maskg, ((0, Gp - G), (0, 0), (0, 0)))
        inputs.append(maskg)
        in_specs.append(pl.BlockSpec((GB, 1, R), lambda g: (g, 0, 0)))

    # Fold head_dim**-0.5 into the q projection (weights AND bias) once.
    wqT = (params["wq"].T * scaling).astype(compute_dtype)
    bq = (params["bq"] * scaling).reshape(1, E).astype(jnp.float32)
    wkT = params["wk"].T.astype(compute_dtype)
    bk = params["bk"].reshape(1, E).astype(jnp.float32)
    wvT = params["wv"].T.astype(compute_dtype)
    bv = params["bv"].reshape(1, E).astype(jnp.float32)
    woT = params["wo"].T.astype(compute_dtype)
    bo = params["bo"].reshape(1, E).astype(jnp.float32)

    # Weights never change across the grid: single-buffer them (reclaims VMEM, esp. on v7x).
    w_spec = pl.BlockSpec((E, E), lambda g: (0, 0),
                          pipeline_mode=pl.Buffered(buffer_count=1))
    b_spec = pl.BlockSpec((1, E), lambda g: (0, 0))
    inputs += [wqT, bq, wkT, bk, wvT, bv, woT, bo]
    in_specs += [w_spec, b_spec, w_spec, b_spec, w_spec, b_spec, w_spec, b_spec]

    kernel = functools.partial(_column_attn_kernel, num_heads=H, head_dim=Dh,
                               group_block=GB, compute_dtype=compute_dtype,
                               has_mask=has_mask, approx_recip=approx_reciprocal)

    flops = Gp * (4 * 2 * R * E * E + H * 2 * 2 * R * R * Dh)
    bytes_accessed = (Gp * R * E * xbytes               # x
                      + Gp * R * E * xbytes             # out
                      + H * Gp * R * R * abytes         # attn (dominant)
                      + (Gp * R * 4 if has_mask else 0)
                      + 4 * E * E * cbytes + 4 * E * 4)
    cost = pl.CostEstimate(flops=flops, transcendentals=Gp * H * R * R,
                           bytes_accessed=bytes_accessed)

    # TODO(synk): for very large R on v7x (64 MiB VMEM), add a second grid axis tiling attn
    # over query rows (block (H, GB, Tq*R)) so the attn out buffer stops dominating VMEM.
    out_g, attn_g = pl.pallas_call(
        kernel,
        out_shape=(
            jax.ShapeDtypeStruct((Gp, R, E), x.dtype),
            jax.ShapeDtypeStruct((H, Gp, R * R), attn_dt),
        ),
        grid_spec=pltpu.PrefetchScalarGridSpec(
            num_scalar_prefetch=0,
            grid=grid,
            in_specs=in_specs,
            out_specs=[
                pl.BlockSpec((GB, R, E), lambda g: (g, 0, 0)),
                pl.BlockSpec((H, GB, R * R), lambda g: (0, g, 0)),
            ],
            scratch_shapes=[pltpu.VMEM((GB * R, E), jnp.float32)],
        ),
        compiler_params=pltpu.CompilerParams(
            dimension_semantics=("parallel",),
            vmem_limit_bytes=vmem_limit),
        cost_estimate=cost,
    )(*inputs)

    if Gp > G:
        out_g = out_g[:G]
        attn_g = attn_g[:, :G]
    # `out`: (G,R,E) -> (C,N,R,E) -> (R,C,N,E).
    out = jnp.transpose(out_g.reshape(C, N, R, E), (2, 0, 1, 3))
    # `attn` (dominant traffic) is already head-major and lane-dense: free reshape only.
    attn = attn_g.reshape(H, C, N, R, R)
    return out, attn


def _reference(x, params, num_heads, padding_mask=None):
    """Pure-JAX mirror of ColumnSelfAttention.compute_output (for verification)."""
    R, C, N, E = x.shape
    H, Dh = num_heads, E // num_heads
    lin = lambda x_, w, b: x_ @ w.T + b
    q = lin(x, params["wq"], params["bq"]).reshape(R, C, N, H, Dh) * Dh ** -0.5
    k = lin(x, params["wk"], params["bk"]).reshape(R, C, N, H, Dh)
    v = lin(x, params["wv"], params["bv"]).reshape(R, C, N, H, Dh)
    attn = jnp.einsum("icnhd,jcnhd->hcnij", q, k)
    if padding_mask is not None:
        m = jnp.transpose(padding_mask, (2, 0, 1))[None, :, :, None, :]
        attn = jnp.where(m, -10000.0, attn)
    attn = jax.nn.softmax(attn, axis=-1)
    out = jnp.einsum("hcnij,jcnhd->icnhd", attn, v).reshape(R, C, N, E)
    out = lin(out, params["wo"], params["bo"])
    return out, attn


if __name__ == "__main__":
    R, C, N, E, H = 8, 16, 2, 32, 4

    key = jax.random.PRNGKey(0)
    keys = jax.random.split(key, 10)
    params = {
        "wq": jax.random.normal(keys[0], (E, E), jnp.float32) * 0.05,
        "bq": jax.random.normal(keys[1], (E,), jnp.float32) * 0.01,
        "wk": jax.random.normal(keys[2], (E, E), jnp.float32) * 0.05,
        "bk": jax.random.normal(keys[3], (E,), jnp.float32) * 0.01,
        "wv": jax.random.normal(keys[4], (E, E), jnp.float32) * 0.05,
        "bv": jax.random.normal(keys[5], (E,), jnp.float32) * 0.01,
        "wo": jax.random.normal(keys[6], (E, E), jnp.float32) * 0.05,
        "bo": jax.random.normal(keys[7], (E,), jnp.float32) * 0.01,
    }
    x = jax.random.normal(keys[8], (R, C, N, E), jnp.float32)
    pad_mask = jax.random.bernoulli(keys[9], 0.2, (N, R, C))   # True = padding row

    # --- f32 compute path, no mask ---
    out, attn = column_self_attention(x, params, H)
    out = jax.block_until_ready(out)
    attn = jax.block_until_ready(attn)
    ref_out, ref_attn = _reference(x, params, H)
    np.testing.assert_allclose(np.asarray(out), np.asarray(ref_out), rtol=1e-3, atol=1e-3)
    np.testing.assert_allclose(np.asarray(attn), np.asarray(ref_attn), rtol=1e-3, atol=1e-3)
    assert out.shape == (R, C, N, E) and attn.shape == (H, C, N, R, R)

    # --- f32 compute path, with padding mask ---
    out_m, attn_m = column_self_attention(x, params, H,
                                          self_attention_padding_mask=pad_mask)
    out_m = jax.block_until_ready(out_m)
    attn_m = jax.block_until_ready(attn_m)
    ref_out_m, ref_attn_m = _reference(x, params, H, padding_mask=pad_mask)
    np.testing.assert_allclose(np.asarray(out_m), np.asarray(ref_out_m), rtol=1e-3, atol=1e-3)
    np.testing.assert_allclose(np.asarray(attn_m), np.asarray(ref_attn_m), rtol=1e-3, atol=1e-3)

    # --- bf16 MXU compute path (f32 accumulation / softmax), looser tolerance ---
    out_b, attn_b = column_self_attention(x, params, H, compute_dtype=jnp.bfloat16)
    out_b = jax.block_until_ready(out_b)
    attn_b = jax.block_until_ready(attn_b)
    np.testing.assert_allclose(np.asarray(out_b), np.asarray(ref_out), rtol=3e-2, atol=3e-2)
    np.testing.assert_allclose(np.asarray(attn_b), np.asarray(ref_attn), rtol=3e-2, atol=3e-2)

    # --- non-divisible C*N (exercises the group padding path) + exact softmax division ---
    Cp = 15
    xp = jax.random.normal(keys[8], (R, Cp, N, E), jnp.float32)
    out_p, attn_p = column_self_attention(xp, params, H, approx_reciprocal=False)
    out_p = jax.block_until_ready(out_p)
    attn_p = jax.block_until_ready(attn_p)
    ref_out_p, ref_attn_p = _reference(xp, params, H)
    np.testing.assert_allclose(np.asarray(out_p), np.asarray(ref_out_p), rtol=1e-3, atol=1e-3)
    np.testing.assert_allclose(np.asarray(attn_p), np.asarray(ref_attn_p), rtol=1e-3, atol=1e-3)
    assert out_p.shape == (R, Cp, N, E) and attn_p.shape == (H, Cp, N, R, R)

    print("KERNEL_OK")
</pallas_src>

<mosaic_0001>
module attributes {stable_mosaic.version = 11 : i64} {
  func.func @_column_attn_kernel(%arg0: i32, %arg1: memref<16x8x32xf32, #tpu.memory_space<vmem>>, %arg2: memref<32x32xf32, #tpu.memory_space<vmem>>, %arg3: memref<1x32xf32, #tpu.memory_space<vmem>>, %arg4: memref<32x32xf32, #tpu.memory_space<vmem>>, %arg5: memref<1x32xf32, #tpu.memory_space<vmem>>, %arg6: memref<32x32xf32, #tpu.memory_space<vmem>>, %arg7: memref<1x32xf32, #tpu.memory_space<vmem>>, %arg8: memref<32x32xf32, #tpu.memory_space<vmem>>, %arg9: memref<1x32xf32, #tpu.memory_space<vmem>>, %arg10: memref<16x8x32xf32, #tpu.memory_space<vmem>>, %arg11: memref<4x16x64xf32, #tpu.memory_space<vmem>>, %arg12: memref<128x32xf32, #tpu.memory_space<vmem>>) attributes {dimension_semantics = [#tpu.dimension_semantics<parallel>], iteration_bounds = array<i64: 2>, scalar_prefetch = 0 : i64, scratch_operands = 1 : i64, tpu.core_type = #tpu.core_type<tc>, window_params = [{transform_indices = @transform_0, window_bounds = array<i64: 16, 8, 32>}, {pipeline_mode = #tpu.pipeline_mode<synchronous>, transform_indices = @transform_1, window_bounds = array<i64: 32, 32>}, {pipeline_mode = #tpu.pipeline_mode<synchronous>, transform_indices = @transform_2, window_bounds = array<i64: 1, 32>}, {pipeline_mode = #tpu.pipeline_mode<synchronous>, transform_indices = @transform_3, window_bounds = array<i64: 32, 32>}, {pipeline_mode = #tpu.pipeline_mode<synchronous>, transform_indices = @transform_4, window_bounds = array<i64: 1, 32>}, {pipeline_mode = #tpu.pipeline_mode<synchronous>, transform_indices = @transform_5, window_bounds = array<i64: 32, 32>}, {pipeline_mode = #tpu.pipeline_mode<synchronous>, transform_indices = @transform_6, window_bounds = array<i64: 1, 32>}, {pipeline_mode = #tpu.pipeline_mode<synchronous>, transform_indices = @transform_7, window_bounds = array<i64: 32, 32>}, {pipeline_mode = #tpu.pipeline_mode<synchronous>, transform_indices = @transform_8, window_bounds = array<i64: 1, 32>}, {transform_indices = @transform_9, window_bounds = array<i64: 16, 8, 32>}, {transform_indices = @transform_10, window_bounds = array<i64: 4, 16, 64>}]} {
    %c0 = arith.constant 0 : index
    %c0_0 = arith.constant 0 : index
    %c0_1 = arith.constant 0 : index
    %0 = vector.load %arg1[%c0, %c0_0, %c0_1] : memref<16x8x32xf32, #tpu.memory_space<vmem>>, vector<16x8x32xf32>
    %1 = vector.shape_cast %0 : vector<16x8x32xf32> to vector<128x32xf32>
    %c0_2 = arith.constant 0 : index
    %c0_3 = arith.constant 0 : index
    %2 = vector.load %arg2[%c0_2, %c0_3] : memref<32x32xf32, #tpu.memory_space<vmem>>, vector<32x32xf32>
    %cst = arith.constant dense<0.000000e+00> : vector<128x32xf32>
    %3 = tpu.matmul %1, %2, %cst {dimension_numbers = #tpu.dot_dimension_numbers<[1], [0], [0], [1], [0, 0, 1, 1], [], []>} : vector<128x32xf32>, vector<32x32xf32>, vector<128x32xf32> -> vector<128x32xf32>
    %c0_4 = arith.constant 0 : index
    %c0_5 = arith.constant 0 : index
    %4 = vector.load %arg3[%c0_4, %c0_5] : memref<1x32xf32, #tpu.memory_space<vmem>>, vector<1x32xf32>
    %5 = vector.broadcast %4 : vector<1x32xf32> to vector<128x32xf32>
    %6 = arith.addf %3, %5 : vector<128x32xf32>
    %c0_6 = arith.constant 0 : index
    %c0_7 = arith.constant 0 : index
    %7 = vector.load %arg4[%c0_6, %c0_7] : memref<32x32xf32, #tpu.memory_space<vmem>>, vector<32x32xf32>
    %cst_8 = arith.constant dense<0.000000e+00> : vector<128x32xf32>
    %8 = tpu.matmul %1, %7, %cst_8 {dimension_numbers = #tpu.dot_dimension_numbers<[1], [0], [0], [1], [0, 0, 1, 1], [], []>} : vector<128x32xf32>, vector<32x32xf32>, vector<128x32xf32> -> vector<128x32xf32>
    %c0_9 = arith.constant 0 : index
    %c0_10 = arith.constant 0 : index
    %9 = vector.load %arg5[%c0_9, %c0_10] : memref<1x32xf32, #tpu.memory_space<vmem>>, vector<1x32xf32>
    %10 = vector.broadcast %9 : vector<1x32xf32> to vector<128x32xf32>
    %11 = arith.addf %8, %10 : vector<128x32xf32>
    %c0_11 = arith.constant 0 : index
    %c0_12 = arith.constant 0 : index
    %12 = vector.load %arg6[%c0_11, %c0_12] : memref<32x32xf32, #tpu.memory_space<vmem>>, vector<32x32xf32>
    %cst_13 = arith.constant dense<0.000000e+00> : vector<128x32xf32>
    %13 = tpu.matmul %1, %12, %cst_13 {dimension_numbers = #tpu.dot_dimension_numbers<[1], [0], [0], [1], [0, 0, 1, 1], [], []>} : vector<128x32xf32>, vector<32x32xf32>, vector<128x32xf32> -> vector<128x32xf32>
    %c0_14 = arith.constant 0 : index
    %c0_15 = arith.constant 0 : index
    %14 = vector.load %arg7[%c0_14, %c0_15] : memref<1x32xf32, #tpu.memory_space<vmem>>, vector<1x32xf32>
    %15 = vector.broadcast %14 : vector<1x32xf32> to vector<128x32xf32>
    %16 = arith.addf %13, %15 : vector<128x32xf32>
    %17 = vector.shape_cast %6 : vector<128x32xf32> to vector<16x8x32xf32>
    %18 = vector.shape_cast %11 : vector<128x32xf32> to vector<16x8x32xf32>
    %19 = vector.shape_cast %16 : vector<128x32xf32> to vector<16x8x32xf32>
    %20 = vector.extract_strided_slice %17 {offsets = [0, 0, 0], sizes = [16, 8, 8], strides = [1, 1, 1]} : vector<16x8x32xf32> to vector<16x8x8xf32>
    %21 = vector.extract_strided_slice %18 {offsets = [0, 0, 0], sizes = [16, 8, 8], strides = [1, 1, 1]} : vector<16x8x32xf32> to vector<16x8x8xf32>
    %22 = vector.extract_strided_slice %19 {offsets = [0, 0, 0], sizes = [16, 8, 8], strides = [1, 1, 1]} : vector<16x8x32xf32> to vector<16x8x8xf32>
    "tpu.trace_start"() <{level = 10 : i32, message = "grd,gsd->grs"}> : () -> ()
    %cst_16 = arith.constant dense<0.000000e+00> : vector<16x8x8xf32>
    %23 = tpu.matmul %20, %21, %cst_16 {dimension_numbers = #tpu.dot_dimension_numbers<[2], [2], [1], [1], [0, 0, 0, 1, 1, 1], [0], [0]>} : vector<16x8x8xf32>, vector<16x8x8xf32>, vector<16x8x8xf32> -> vector<16x8x8xf32>
    "tpu.trace_stop"() : () -> ()
    %cst_17 = arith.constant dense<0xFF800000> : vector<16x8xf32>
    %24 = vector.multi_reduction <maximumf>, %23, %cst_17 [2] : vector<16x8x8xf32> to vector<16x8xf32>
    %25 = vector.shape_cast %24 : vector<16x8xf32> to vector<16x8x1xf32>
    %26 = vector.broadcast %25 : vector<16x8x1xf32> to vector<16x8x8xf32>
    %27 = arith.subf %23, %26 : vector<16x8x8xf32>
    %28 = math.exp %27 : vector<16x8x8xf32>
    %cst_18 = arith.constant dense<0.000000e+00> : vector<16x8xf32>
    %29 = vector.multi_reduction <add>, %28, %cst_18 [2] : vector<16x8x8xf32> to vector<16x8xf32>
    %30 = vector.shape_cast %29 : vector<16x8xf32> to vector<16x8x1xf32>
    %31 = tpu.reciprocal %30 {approx = true} : vector<16x8x1xf32> -> vector<16x8x1xf32>
    %32 = vector.broadcast %31 : vector<16x8x1xf32> to vector<16x8x8xf32>
    %33 = arith.mulf %28, %32 : vector<16x8x8xf32>
    %34 = vector.shape_cast %33 : vector<16x8x8xf32> to vector<16x64xf32>
    %c0_19 = arith.constant 0 : index
    %c0_20 = arith.constant 0 : index
    %c0_21 = arith.constant 0 : index
    %35 = vector.load %arg11[%c0_19, %c0_20, %c0_21] : memref<4x16x64xf32, #tpu.memory_space<vmem>>, vector<1x16x64xf32>
    %36 = vector.shape_cast %35 : vector<1x16x64xf32> to vector<16x64xf32>
    %37 = vector.shape_cast %34 : vector<16x64xf32> to vector<1x16x64xf32>
    tpu.vector_store %arg11[%c0_19, %c0_20, %c0_21], %37 {strides = array<i32>} : memref<4x16x64xf32, #tpu.memory_space<vmem>>, vector<1x16x64xf32>,
    "tpu.trace_start"() <{level = 10 : i32, message = "grs,gsd->grd"}> : () -> ()
    %cst_22 = arith.constant dense<0.000000e+00> : vector<16x8x8xf32>
    %38 = tpu.matmul %33, %22, %cst_22 {dimension_numbers = #tpu.dot_dimension_numbers<[2], [1], [1], [2], [0, 0, 0, 1, 1, 2], [0], [0]>} : vector<16x8x8xf32>, vector<16x8x8xf32>, vector<16x8x8xf32> -> vector<16x8x8xf32>
    "tpu.trace_stop"() : () -> ()
    %39 = vector.shape_cast %38 : vector<16x8x8xf32> to vector<128x8xf32>
    %c0_23 = arith.constant 0 : index
    %c0_24 = arith.constant 0 : index
    %40 = vector.load %arg12[%c0_23, %c0_24] : memref<128x32xf32, #tpu.memory_space<vmem>>, vector<128x8xf32>
    tpu.vector_store %arg12[%c0_23, %c0_24], %39 {strides = array<i32>} : memref<128x32xf32, #tpu.memory_space<vmem>>, vector<128x8xf32>,
    %41 = vector.extract_strided_slice %17 {offsets = [0, 0, 8], sizes = [16, 8, 8], strides = [1, 1, 1]} : vector<16x8x32xf32> to vector<16x8x8xf32>
    %42 = vector.extract_strided_slice %18 {offsets = [0, 0, 8], sizes = [16, 8, 8], strides = [1, 1, 1]} : vector<16x8x32xf32> to vector<16x8x8xf32>
    %43 = vector.extract_strided_slice %19 {offsets = [0, 0, 8], sizes = [16, 8, 8], strides = [1, 1, 1]} : vector<16x8x32xf32> to vector<16x8x8xf32>
    "tpu.trace_start"() <{level = 10 : i32, message = "grd,gsd->grs"}> : () -> ()
    %cst_25 = arith.constant dense<0.000000e+00> : vector<16x8x8xf32>
    %44 = tpu.matmul %41, %42, %cst_25 {dimension_numbers = #tpu.dot_dimension_numbers<[2], [2], [1], [1], [0, 0, 0, 1, 1, 1], [0], [0]>} : vector<16x8x8xf32>, vector<16x8x8xf32>, vector<16x8x8xf32> -> vector<16x8x8xf32>
    "tpu.trace_stop"() : () -> ()
    %cst_26 = arith.constant dense<0xFF800000> : vector<16x8xf32>
    %45 = vector.multi_reduction <maximumf>, %44, %cst_26 [2] : vector<16x8x8xf32> to vector<16x8xf32>
    %46 = vector.shape_cast %45 : vector<16x8xf32> to vector<16x8x1xf32>
    %47 = vector.broadcast %46 : vector<16x8x1xf32> to vector<16x8x8xf32>
    %48 = arith.subf %44, %47 : vector<16x8x8xf32>
    %49 = math.exp %48 : vector<16x8x8xf32>
    %cst_27 = arith.constant dense<0.000000e+00> : vector<16x8xf32>
    %50 = vector.multi_reduction <add>, %49, %cst_27 [2] : vector<16x8x8xf32> to vector<16x8xf32>
    %51 = vector.shape_cast %50 : vector<16x8xf32> to vector<16x8x1xf32>
    %52 = tpu.reciprocal %51 {approx = true} : vector<16x8x1xf32> -> vector<16x8x1xf32>
    %53 = vector.broadcast %52 : vector<16x8x1xf32> to vector<16x8x8xf32>
    %54 = arith.mulf %49, %53 : vector<16x8x8xf32>
    %55 = vector.shape_cast %54 : vector<16x8x8xf32> to vector<16x64xf32>
    %c1 = arith.constant 1 : index
    %c0_28 = arith.constant 0 : index
    %c0_29 = arith.constant 0 : index
    %56 = vector.load %arg11[%c1, %c0_28, %c0_29] : memref<4x16x64xf32, #tpu.memory_space<vmem>>, vector<1x16x64xf32>
    %57 = vector.shape_cast %56 : vector<1x16x64xf32> to vector<16x64xf32>
    %58 = vector.shape_cast %55 : vector<16x64xf32> to vector<1x16x64xf32>
    tpu.vector_store %arg11[%c1, %c0_28, %c0_29], %58 {strides = array<i32>} : memref<4x16x64xf32, #tpu.memory_space<vmem>>, vector<1x16x64xf32>,
    "tpu.trace_start"() <{level = 10 : i32, message = "grs,gsd->grd"}> : () -> ()
    %cst_30 = arith.constant dense<0.000000e+00> : vector<16x8x8xf32>
    %59 = tpu.matmul %54, %43, %cst_30 {dimension_numbers = #tpu.dot_dimension_numbers<[2], [1], [1], [2], [0, 0, 0, 1, 1, 2], [0], [0]>} : vector<16x8x8xf32>, vector<16x8x8xf32>, vector<16x8x8xf32> -> vector<16x8x8xf32>
    "tpu.trace_stop"() : () -> ()
    %60 = vector.shape_cast %59 : vector<16x8x8xf32> to vector<128x8xf32>
    %c0_31 = arith.constant 0 : index
    %c8 = arith.constant 8 : index
    %61 = vector.load %arg12[%c0_31, %c8] : memref<128x32xf32, #tpu.memory_space<vmem>>, vector<128x8xf32>
    tpu.vector_store %arg12[%c0_31, %c8], %60 {strides = array<i32>} : memref<128x32xf32, #tpu.memory_space<vmem>>, vector<128x8xf32>,
    %62 = vector.extract_strided_slice %17 {offsets = [0, 0, 16], sizes = [16, 8, 8], strides = [1, 1, 1]} : vector<16x8x32xf32> to vector<16x8x8xf32>
    %63 = vector.extract_strided_slice %18 {offsets = [0, 0, 16], sizes = [16, 8, 8], strides = [1, 1, 1]} : vector<16x8x32xf32> to vector<16x8x8xf32>
    %64 = vector.extract_strided_slice %19 {offsets = [0, 0, 16], sizes = [16, 8, 8], strides = [1, 1, 1]} : vector<16x8x32xf32> to vector<16x8x8xf32>
    "tpu.trace_start"() <{level = 10 : i32, message = "grd,gsd->grs"}> : () -> ()
    %cst_32 = arith.constant dense<0.000000e+00> : vector<16x8x8xf32>
    %65 = tpu.matmul %62, %63, %cst_32 {dimension_numbers = #tpu.dot_dimension_numbers<[2], [2], [1], [1], [0, 0, 0, 1, 1, 1], [0], [0]>} : vector<16x8x8xf32>, vector<16x8x8xf32>, vector<16x8x8xf32> -> vector<16x8x8xf32>
    "tpu.trace_stop"() : () -> ()
    %cst_33 = arith.constant dense<0xFF800000> : vector<16x8xf32>
    %66 = vector.multi_reduction <maximumf>, %65, %cst_33 [2] : vector<16x8x8xf32> to vector<16x8xf32>
    %67 = vector.shape_cast %66 : vector<16x8xf32> to vector<16x8x1xf32>
    %68 = vector.broadcast %67 : vector<16x8x1xf32> to vector<16x8x8xf32>
    %69 = arith.subf %65, %68 : vector<16x8x8xf32>
    %70 = math.exp %69 : vector<16x8x8xf32>
    %cst_34 = arith.constant dense<0.000000e+00> : vector<16x8xf32>
    %71 = vector.multi_reduction <add>, %70, %cst_34 [2] : vector<16x8x8xf32> to vector<16x8xf32>
    %72 = vector.shape_cast %71 : vector<16x8xf32> to vector<16x8x1xf32>
    %73 = tpu.reciprocal %72 {approx = true} : vector<16x8x1xf32> -> vector<16x8x1xf32>
    %74 = vector.broadcast %73 : vector<16x8x1xf32> to vector<16x8x8xf32>
    %75 = arith.mulf %70, %74 : vector<16x8x8xf32>
    %76 = vector.shape_cast %75 : vector<16x8x8xf32> to vector<16x64xf32>
    %c2 = arith.constant 2 : index
    %c0_35 = arith.constant 0 : index
    %c0_36 = arith.constant 0 : index
    %77 = vector.load %arg11[%c2, %c0_35, %c0_36] : memref<4x16x64xf32, #tpu.memory_space<vmem>>, vector<1x16x64xf32>
    %78 = vector.shape_cast %77 : vector<1x16x64xf32> to vector<16x64xf32>
    %79 = vector.shape_cast %76 : vector<16x64xf32> to vector<1x16x64xf32>
    tpu.vector_store %arg11[%c2, %c0_35, %c0_36], %79 {strides = array<i32>} : memref<4x16x64xf32, #tpu.memory_space<vmem>>, vector<1x16x64xf32>,
    "tpu.trace_start"() <{level = 10 : i32, message = "grs,gsd->grd"}> : () -> ()
    %cst_37 = arith.constant dense<0.000000e+00> : vector<16x8x8xf32>
    %80 = tpu.matmul %75, %64, %cst_37 {dimension_numbers = #tpu.dot_dimension_numbers<[2], [1], [1], [2], [0, 0, 0, 1, 1, 2], [0], [0]>} : vector<16x8x8xf32>, vector<16x8x8xf32>, vector<16x8x8xf32> -> vector<16x8x8xf32>
    "tpu.trace_stop"() : () -> ()
    %81 = vector.shape_cast %80 : vector<16x8x8xf32> to vector<128x8xf32>
    %c0_38 = arith.constant 0 : index
    %c16 = arith.constant 16 : index
    %82 = vector.load %arg12[%c0_38, %c16] : memref<128x32xf32, #tpu.memory_space<vmem>>, vector<128x8xf32>
    tpu.vector_store %arg12[%c0_38, %c16], %81 {strides = array<i32>} : memref<128x32xf32, #tpu.memory_space<vmem>>, vector<128x8xf32>,
    %83 = vector.extract_strided_slice %17 {offsets = [0, 0, 24], sizes = [16, 8, 8], strides = [1, 1, 1]} : vector<16x8x32xf32> to vector<16x8x8xf32>
    %84 = vector.extract_strided_slice %18 {offsets = [0, 0, 24], sizes = [16, 8, 8], strides = [1, 1, 1]} : vector<16x8x32xf32> to vector<16x8x8xf32>
    %85 = vector.extract_strided_slice %19 {offsets = [0, 0, 24], sizes = [16, 8, 8], strides = [1, 1, 1]} : vector<16x8x32xf32> to vector<16x8x8xf32>
    "tpu.trace_start"() <{level = 10 : i32, message = "grd,gsd->grs"}> : () -> ()
    %cst_39 = arith.constant dense<0.000000e+00> : vector<16x8x8xf32>
    %86 = tpu.matmul %83, %84, %cst_39 {dimension_numbers = #tpu.dot_dimension_numbers<[2], [2], [1], [1], [0, 0, 0, 1, 1, 1], [0], [0]>} : vector<16x8x8xf32>, vector<16x8x8xf32>, vector<16x8x8xf32> -> vector<16x8x8xf32>
    "tpu.trace_stop"() : () -> ()
    %cst_40 = arith.constant dense<0xFF800000> : vector<16x8xf32>
    %87 = vector.multi_reduction <maximumf>, %86, %cst_40 [2] : vector<16x8x8xf32> to vector<16x8xf32>
    %88 = vector.shape_cast %87 : vector<16x8xf32> to vector<16x8x1xf32>
    %89 = vector.broadcast %88 : vector<16x8x1xf32> to vector<16x8x8xf32>
    %90 = arith.subf %86, %89 : vector<16x8x8xf32>
    %91 = math.exp %90 : vector<16x8x8xf32>
    %cst_41 = arith.constant dense<0.000000e+00> : vector<16x8xf32>
    %92 = vector.multi_reduction <add>, %91, %cst_41 [2] : vector<16x8x8xf32> to vector<16x8xf32>
    %93 = vector.shape_cast %92 : vector<16x8xf32> to vector<16x8x1xf32>
    %94 = tpu.reciprocal %93 {approx = true} : vector<16x8x1xf32> -> vector<16x8x1xf32>
    %95 = vector.broadcast %94 : vector<16x8x1xf32> to vector<16x8x8xf32>
    %96 = arith.mulf %91, %95 : vector<16x8x8xf32>
    %97 = vector.shape_cast %96 : vector<16x8x8xf32> to vector<16x64xf32>
    %c3 = arith.constant 3 : index
    %c0_42 = arith.constant 0 : index
    %c0_43 = arith.constant 0 : index
    %98 = vector.load %arg11[%c3, %c0_42, %c0_43] : memref<4x16x64xf32, #tpu.memory_space<vmem>>, vector<1x16x64xf32>
    %99 = vector.shape_cast %98 : vector<1x16x64xf32> to vector<16x64xf32>
    %100 = vector.shape_cast %97 : vector<16x64xf32> to vector<1x16x64xf32>
    tpu.vector_store %arg11[%c3, %c0_42, %c0_43], %100 {strides = array<i32>} : memref<4x16x64xf32, #tpu.memory_space<vmem>>, vector<1x16x64xf32>,
    "tpu.trace_start"() <{level = 10 : i32, message = "grs,gsd->grd"}> : () -> ()
    %cst_44 = arith.constant dense<0.000000e+00> : vector<16x8x8xf32>
    %101 = tpu.matmul %96, %85, %cst_44 {dimension_numbers = #tpu.dot_dimension_numbers<[2], [1], [1], [2], [0, 0, 0, 1, 1, 2], [0], [0]>} : vector<16x8x8xf32>, vector<16x8x8xf32>, vector<16x8x8xf32> -> vector<16x8x8xf32>
    "tpu.trace_stop"() : () -> ()
    %102 = vector.shape_cast %101 : vector<16x8x8xf32> to vector<128x8xf32>
    %c0_45 = arith.constant 0 : index
    %c24 = arith.constant 24 : index
    %103 = vector.load %arg12[%c0_45, %c24] : memref<128x32xf32, #tpu.memory_space<vmem>>, vector<128x8xf32>
    tpu.vector_store %arg12[%c0_45, %c24], %102 {strides = array<i32>} : memref<128x32xf32, #tpu.memory_space<vmem>>, vector<128x8xf32>,
    %c0_46 = arith.constant 0 : index
    %c0_47 = arith.constant 0 : index
    %104 = vector.load %arg12[%c0_46, %c0_47] : memref<128x32xf32, #tpu.memory_space<vmem>>, vector<128x32xf32>
    %c0_48 = arith.constant 0 : index
    %c0_49 = arith.constant 0 : index
    %105 = vector.load %arg8[%c0_48, %c0_49] : memref<32x32xf32, #tpu.memory_space<vmem>>, vector<32x32xf32>
    %cst_50 = arith.constant dense<0.000000e+00> : vector<128x32xf32>
    %106 = tpu.matmul %104, %105, %cst_50 {dimension_numbers = #tpu.dot_dimension_numbers<[1], [0], [0], [1], [0, 0, 1, 1], [], []>} : vector<128x32xf32>, vector<32x32xf32>, vector<128x32xf32> -> vector<128x32xf32>
    %c0_51 = arith.constant 0 : index
    %c0_52 = arith.constant 0 : index
    %107 = vector.load %arg9[%c0_51, %c0_52] : memref<1x32xf32, #tpu.memory_space<vmem>>, vector<1x32xf32>
    %108 = vector.broadcast %107 : vector<1x32xf32> to vector<128x32xf32>
    %109 = arith.addf %106, %108 : vector<128x32xf32>
    %110 = vector.shape_cast %109 : vector<128x32xf32> to vector<16x8x32xf32>
    %c0_53 = arith.constant 0 : index
    %c0_54 = arith.constant 0 : index
    %c0_55 = arith.constant 0 : index
    %111 = vector.load %arg10[%c0_53, %c0_54, %c0_55] : memref<16x8x32xf32, #tpu.memory_space<vmem>>, vector<16x8x32xf32>
    tpu.vector_store %arg10[%c0_53, %c0_54, %c0_55], %110 {strides = array<i32>} : memref<16x8x32xf32, #tpu.memory_space<vmem>>, vector<16x8x32xf32>,
    return
  }
  func.func @transform_0(%arg0: i32) -> (i32, i32, i32) {
    %c0_i32 = arith.constant 0 : i32
    %c0_i32_0 = arith.constant 0 : i32
    %c0_i32_1 = arith.constant 0 : i32
    return %arg0, %c0_i32, %c0_i32_0 : i32, i32, i32
  }
  func.func @transform_1(%arg0: i32) -> (i32, i32) {
    %c0_i32 = arith.constant 0 : i32
    %c0_i32_0 = arith.constant 0 : i32
    %c0_i32_1 = arith.constant 0 : i32
    return %c0_i32, %c0_i32_0 : i32, i32
  }
  func.func @transform_2(%arg0: i32) -> (i32, i32) {
    %c0_i32 = arith.constant 0 : i32
    %c0_i32_0 = arith.constant 0 : i32
    %c0_i32_1 = arith.constant 0 : i32
    return %c0_i32, %c0_i32_0 : i32, i32
  }
  func.func @transform_3(%arg0: i32) -> (i32, i32) {
    %c0_i32 = arith.constant 0 : i32
    %c0_i32_0 = arith.constant 0 : i32
    %c0_i32_1 = arith.constant 0 : i32
    return %c0_i32, %c0_i32_0 : i32, i32
  }
  func.func @transform_4(%arg0: i32) -> (i32, i32) {
    %c0_i32 = arith.constant 0 : i32
    %c0_i32_0 = arith.constant 0 : i32
    %c0_i32_1 = arith.constant 0 : i32
    return %c0_i32, %c0_i32_0 : i32, i32
  }
  func.func @transform_5(%arg0: i32) -> (i32, i32) {
    %c0_i32 = arith.constant 0 : i32
    %c0_i32_0 = arith.constant 0 : i32
    %c0_i32_1 = arith.constant 0 : i32
    return %c0_i32, %c0_i32_0 : i32, i32
  }
  func.func @transform_6(%arg0: i32) -> (i32, i32) {
    %c0_i32 = arith.constant 0 : i32
    %c0_i32_0 = arith.constant 0 : i32
    %c0_i32_1 = arith.constant 0 : i32
    return %c0_i32, %c0_i32_0 : i32, i32
  }
  func.func @transform_7(%arg0: i32) -> (i32, i32) {
    %c0_i32 = arith.constant 0 : i32
    %c0_i32_0 = arith.constant 0 : i32
    %c0_i32_1 = arith.constant 0 : i32
    return %c0_i32, %c0_i32_0 : i32, i32
  }
  func.func @transform_8(%arg0: i32) -> (i32, i32) {
    %c0_i32 = arith.constant 0 : i32
    %c0_i32_0 = arith.constant 0 : i32
    %c0_i32_1 = arith.constant 0 : i32
    return %c0_i32, %c0_i32_0 : i32, i32
  }
  func.func @transform_9(%arg0: i32) -> (i32, i32, i32) {
    %c0_i32 = arith.constant 0 : i32
    %c0_i32_0 = arith.constant 0 : i32
    %c0_i32_1 = arith.constant 0 : i32
    return %arg0, %c0_i32, %c0_i32_0 : i32, i32, i32
  }
  func.func @transform_10(%arg0: i32) -> (i32, i32, i32) {
    %c0_i32 = arith.constant 0 : i32
    %c0_i32_0 = arith.constant 0 : i32
    %c0_i32_1 = arith.constant 0 : i32
    return %c0_i32, %arg0, %c0_i32_0 : i32, i32, i32
  }
}

</mosaic_0001>

<llo_original>
// kernel: tpu_custom_call.1
$region0: #{tpu_custom_call.1}
  #allocation0 [shape = 'u32[]', space=smem, size = 0x4, offset = 0x4, fixed_abs, tag = 'smem constant byte address 0x4 - core index']
  #allocation1 [shape = 'u32[72,128]{1,0:T(1,128)}', space=vmem, size = 0x9000, scoped, tag = 'internal scratch']
  #allocation2 [shape = 'f32[128,32]{1,0:T(8,128)}', space=vmem, size = 0x10000, scoped, tag = 'scratch operand']
  #allocation15 [shape = 's32[]', space=sflag, size = 0x4, offset = 0, fixed_abs, tag = 'sflag constant byte address 0x0 - dummy sync flag']
  %s0 = inlined_call_operand.hbm [shape: f32[32,8,32], index: 0, kind: input, shape index: {}]
  %s1 = inlined_call_operand.hbm [shape: f32[32,32], index: 1, kind: input, shape index: {}]
  %s2 = inlined_call_operand.vmem [shape: f32[1,32], index: 2, kind: input, shape index: {}]
  %s3 = inlined_call_operand.hbm [shape: f32[32,32], index: 3, kind: input, shape index: {}]
  %s4 = inlined_call_operand.vmem [shape: f32[1,32], index: 4, kind: input, shape index: {}]
  %s5 = inlined_call_operand.hbm [shape: f32[32,32], index: 5, kind: input, shape index: {}]
  %s6 = inlined_call_operand.vmem [shape: f32[1,32], index: 6, kind: input, shape index: {}]
  %s7 = inlined_call_operand.hbm [shape: f32[32,32], index: 7, kind: input, shape index: {}]
  %s8 = inlined_call_operand.vmem [shape: f32[1,32], index: 8, kind: input, shape index: {}]
  %s9 = inlined_call_operand.hbm [shape: f32[32,8,32], index: 9, kind: output, shape index: {0}]
  %s10 = inlined_call_operand.hbm [shape: f32[4,32,64], index: 10, kind: output, shape index: {1}]
  %11 = xla_tuple %s9, %s10
  %s12 = sld [smem:[#allocation0]]
  $region97: #{tpu_custom_call.1} parent=0
    _
  %s14 = ssub.s32 1, %s12
  %s15 = scalar_select 0, %s14, %s12
  $region1: #{tpu_custom_call.1} parent=0
    #allocation3 [shape = 'u8[131072]{0}', space=vmem, size = 0x20000, scoped, tag = 'input window, operand 0']
    #allocation4 [shape = 's32[2]{0}', space=sflag, size = 0x8, scoped, tag = 'scoped memory for tpu_custom_call.1']
    #allocation5 [shape = 's32[2]{0}', space=sflag, size = 0x8, scoped, tag = 'scoped memory for tpu_custom_call.1']
    #allocation6 [shape = 'u8[16384]{0}', space=vmem, size = 0x4000, scoped, tag = 'input window, operand 1, single buffered']
    #allocation7 [shape = 's32[1]{0}', space=sflag, size = 0x4, scoped, tag = 'scoped memory for tpu_custom_call.1']
    #allocation8 [shape = 'u8[16384]{0}', space=vmem, size = 0x4000, scoped, tag = 'input window, operand 3, single buffered']
    #allocation9 [shape = 'u8[16384]{0}', space=vmem, size = 0x4000, scoped, tag = 'input window, operand 5, single buffered']
    #allocation10 [shape = 's32[1]{0}', space=sflag, size = 0x4, scoped, tag = 'scoped memory for tpu_custom_call.1']
    #allocation11 [shape = 'u8[16384]{0}', space=vmem, size = 0x4000, scoped, tag = 'input window, operand 7, single buffered']
    #allocation12 [shape = 'u8[131072]{0}', space=vmem, size = 0x20000, scoped, tag = 'output window, operand 0']
    #allocation13 [shape = 'u8[65536]{0}', space=vmem, size = 0x10000, scoped, tag = 'output window, operand 1']
    #allocation14 [shape = 's32[2]{0}', space=sflag, size = 0x8, scoped, tag = 'scoped memory for tpu_custom_call.1']
    %16 = vsyncpa [#allocation4], 0
    %s17 = scalar_lea.sflag [#allocation4], 1
    %18 = vsyncpa %s17, 0
    %19 = vsyncpa [#allocation7], 0
    %20 = vsyncpa [#allocation10], 0
    %21 = vsyncpa [#allocation5], 0
    %s22 = scalar_lea.sflag [#allocation5], 1
    %23 = vsyncpa %s22, 0
    %24 = vsyncpa [#allocation14], 0
    %s25 = scalar_lea.sflag [#allocation14], 1
    %26 = vsyncpa %s25, 0
    loop: start=0, step=1, limit=4
    $region2: #{tpu_custom_call.1} parent=1 // loop_pre_header
      _
    $region3: #{tpu_custom_call.1} parent=1 // loop_header
      %s28 = sphi 0, %s32
      %p29 = scmp.ge.s32.totalorder %s28, 4
      %s38 = sphi 0, %s40
      %s41 = sphi 0, %s38
      %s42 = sphi 0, %s41
      %s58 = sphi 0, %s42
      %s62 = sphi 0, %s62
      %s64 = sphi 0, %s62
      %s65 = sphi 0, %s64
      %s79 = sphi 0, %s65
      %s83 = sphi 0, %s83
      %s85 = sphi 0, %s83
      %s86 = sphi 0, %s85
      %s100 = sphi 0, %s86
      %s104 = sphi 0, %s104
      %s106 = sphi 0, %s104
      %s107 = sphi 0, %s106
      %s121 = sphi 0, %s107
      %s125 = sphi 0, %s125
      %s127 = sphi 0, %s125
      %s128 = sphi 0, %s127
      %s142 = sphi 0, %s128
      %s146 = sphi 0, %s146
      %s148 = sphi 0, %s146
      %s149 = sphi 0, %s148
      %s163 = sphi 0, %s149
      %s167 = sphi 0, %s167
      %s169 = sphi 0, %s167
      %s170 = sphi 0, %s169
      %s184 = sphi 0, %s170
      %s188 = sphi 0, %s188
      %s190 = sphi 0, %s188
      %s191 = sphi 0, %s190
      %s205 = sphi 0, %s191
      %s209 = sphi 0, %s209
      %s211 = sphi 0, %s209
      %s212 = sphi 0, %s211
      %s226 = sphi 0, %s212
      %s232 = sphi 0, %s234
      %s235 = sphi 0, %s232
      %s236 = sphi 0, %s235
      %s252 = sphi 0, %s236
      %s258 = sphi 0, %s260
      %s261 = sphi 0, %s258
      %s262 = sphi 0, %s261
      %s278 = sphi 0, %s262
    $region4: #{tpu_custom_call.1} parent=1 // loop_header_branch
      %31 = sbr.rel (%p29) target = $region8
    $region5: #{tpu_custom_call.1} parent=1 // loop_body
      %s33 = ssub.s32 %s28, 1
      %s34 = ssub.s32 %s28, 2
      %s35 = sadd.s32 %s28, 1
      %s36 = ssub.s32 %s28, %s35
      %p37 = scmp.eq.s32.totalorder %s36, 0
      %s39 = sadd.s32 %s38, 1
      %s40 = scalar_select %p37, %s38, %s39
      %p43 = pneg %p37
      %p44 = scmp.eq.s32.totalorder %s28, 1
      %p45 = por %p43, %p44
      %p46 = scmp.ne.s32.totalorder %s38, %s41
      %p47 = scmp.eq.s32.totalorder %s28, 0
      %p48 = por %p46, %p47
      %p49 = scmp.ne.s32.totalorder %s38, %s41
      %p50 = scmp.eq.s32.totalorder %s33, 1
      %p51 = por %p49, %p50
      %p52 = scmp.ne.s32.totalorder %s41, %s42
      %p53 = scmp.eq.s32.totalorder %s33, 0
      %p54 = por %p52, %p53
      %p55 = scmp.ne.s32.totalorder %s41, %s42
      %p56 = scmp.eq.s32.totalorder %s34, 1
      %p57 = por %p55, %p56
      %p59 = scmp.ne.s32.totalorder %s42, %s58
      %p60 = scmp.eq.s32.totalorder %s34, 0
      %p61 = por %p59, %p60
      %s63 = sadd.s32 %s62, 1
      %p66 = scmp.eq.s32.totalorder %s28, 1
      %p67 = scmp.ne.s32.totalorder %s62, %s64
      %p68 = scmp.eq.s32.totalorder %s28, 0
      %p69 = por %p67, %p68
      %p70 = scmp.ne.s32.totalorder %s62, %s64
      %p71 = scmp.eq.s32.totalorder %s33, 1
      %p72 = por %p70, %p71
      %p73 = scmp.ne.s32.totalorder %s64, %s65
      %p74 = scmp.eq.s32.totalorder %s33, 0
      %p75 = por %p73, %p74
      %p76 = scmp.ne.s32.totalorder %s64, %s65
      %p77 = scmp.eq.s32.totalorder %s34, 1
      %p78 = por %p76, %p77
      %p80 = scmp.ne.s32.totalorder %s65, %s79
      %p81 = scmp.eq.s32.totalorder %s34, 0
      %p82 = por %p80, %p81
      %s84 = sadd.s32 %s83, 1
      %p87 = scmp.eq.s32.totalorder %s28, 1
      %p88 = scmp.ne.s32.totalorder %s83, %s85
      %p89 = scmp.eq.s32.totalorder %s28, 0
      %p90 = por %p88, %p89
      %p91 = scmp.ne.s32.totalorder %s83, %s85
      %p92 = scmp.eq.s32.totalorder %s33, 1
      %p93 = por %p91, %p92
      %p94 = scmp.ne.s32.totalorder %s85, %s86
      %p95 = scmp.eq.s32.totalorder %s33, 0
      %p96 = por %p94, %p95
      %p97 = scmp.ne.s32.totalorder %s85, %s86
      %p98 = scmp.eq.s32.totalorder %s34, 1
      %p99 = por %p97, %p98
      %p101 = scmp.ne.s32.totalorder %s86, %s100
      %p102 = scmp.eq.s32.totalorder %s34, 0
      %p103 = por %p101, %p102
      %s105 = sadd.s32 %s104, 1
      %p108 = scmp.eq.s32.totalorder %s28, 1
      %p109 = scmp.ne.s32.totalorder %s104, %s106
      %p110 = scmp.eq.s32.totalorder %s28, 0
      %p111 = por %p109, %p110
      %p112 = scmp.ne.s32.totalorder %s104, %s106
      %p113 = scmp.eq.s32.totalorder %s33, 1
      %p114 = por %p112, %p113
      %p115 = scmp.ne.s32.totalorder %s106, %s107
      %p116 = scmp.eq.s32.totalorder %s33, 0
      %p117 = por %p115, %p116
      %p118 = scmp.ne.s32.totalorder %s106, %s107
      %p119 = scmp.eq.s32.totalorder %s34, 1
      %p120 = por %p118, %p119
      %p122 = scmp.ne.s32.totalorder %s107, %s121
      %p123 = scmp.eq.s32.totalorder %s34, 0
      %p124 = por %p122, %p123
      %s126 = sadd.s32 %s125, 1
      %p129 = scmp.eq.s32.totalorder %s28, 1
      %p130 = scmp.ne.s32.totalorder %s125, %s127
      %p131 = scmp.eq.s32.totalorder %s28, 0
      %p132 = por %p130, %p131
      %p133 = scmp.ne.s32.totalorder %s125, %s127
      %p134 = scmp.eq.s32.totalorder %s33, 1
      %p135 = por %p133, %p134
      %p136 = scmp.ne.s32.totalorder %s127, %s128
      %p137 = scmp.eq.s32.totalorder %s33, 0
      %p138 = por %p136, %p137
      %p139 = scmp.ne.s32.totalorder %s127, %s128
      %p140 = scmp.eq.s32.totalorder %s34, 1
      %p141 = por %p139, %p140
      %p143 = scmp.ne.s32.totalorder %s128, %s142
      %p144 = scmp.eq.s32.totalorder %s34, 0
      %p145 = por %p143, %p144
      %s147 = sadd.s32 %s146, 1
      %p150 = scmp.eq.s32.totalorder %s28, 1
      %p151 = scmp.ne.s32.totalorder %s146, %s148
      %p152 = scmp.eq.s32.totalorder %s28, 0
      %p153 = por %p151, %p152
      %p154 = scmp.ne.s32.totalorder %s146, %s148
      %p155 = scmp.eq.s32.totalorder %s33, 1
      %p156 = por %p154, %p155
      %p157 = scmp.ne.s32.totalorder %s148, %s149
      %p158 = scmp.eq.s32.totalorder %s33, 0
      %p159 = por %p157, %p158
      %p160 = scmp.ne.s32.totalorder %s148, %s149
      %p161 = scmp.eq.s32.totalorder %s34, 1
      %p162 = por %p160, %p161
      %p164 = scmp.ne.s32.totalorder %s149, %s163
      %p165 = scmp.eq.s32.totalorder %s34, 0
      %p166 = por %p164, %p165
      %s168 = sadd.s32 %s167, 1
      %p171 = scmp.eq.s32.totalorder %s28, 1
      %p172 = scmp.ne.s32.totalorder %s167, %s169
      %p173 = scmp.eq.s32.totalorder %s28, 0
      %p174 = por %p172, %p173
      %p175 = scmp.ne.s32.totalorder %s167, %s169
      %p176 = scmp.eq.s32.totalorder %s33, 1
      %p177 = por %p175, %p176
      %p178 = scmp.ne.s32.totalorder %s169, %s170
      %p179 = scmp.eq.s32.totalorder %s33, 0
      %p180 = por %p178, %p179
      %p181 = scmp.ne.s32.totalorder %s169, %s170
      %p182 = scmp.eq.s32.totalorder %s34, 1
      %p183 = por %p181, %p182
      %p185 = scmp.ne.s32.totalorder %s170, %s184
      %p186 = scmp.eq.s32.totalorder %s34, 0
      %p187 = por %p185, %p186
      %s189 = sadd.s32 %s188, 1
      %p192 = scmp.eq.s32.totalorder %s28, 1
      %p193 = scmp.ne.s32.totalorder %s188, %s190
      %p194 = scmp.eq.s32.totalorder %s28, 0
      %p195 = por %p193, %p194
      %p196 = scmp.ne.s32.totalorder %s188, %s190
      %p197 = scmp.eq.s32.totalorder %s33, 1
      %p198 = por %p196, %p197
      %p199 = scmp.ne.s32.totalorder %s190, %s191
      %p200 = scmp.eq.s32.totalorder %s33, 0
      %p201 = por %p199, %p200
      %p202 = scmp.ne.s32.totalorder %s190, %s191
      %p203 = scmp.eq.s32.totalorder %s34, 1
      %p204 = por %p202, %p203
      %p206 = scmp.ne.s32.totalorder %s191, %s205
      %p207 = scmp.eq.s32.totalorder %s34, 0
      %p208 = por %p206, %p207
      %s210 = sadd.s32 %s209, 1
      %p213 = scmp.eq.s32.totalorder %s28, 1
      %p214 = scmp.ne.s32.totalorder %s209, %s211
      %p215 = scmp.eq.s32.totalorder %s28, 0
      %p216 = por %p214, %p215
      %p217 = scmp.ne.s32.totalorder %s209, %s211
      %p218 = scmp.eq.s32.totalorder %s33, 1
      %p219 = por %p217, %p218
      %p220 = scmp.ne.s32.totalorder %s211, %s212
      %p221 = scmp.eq.s32.totalorder %s33, 0
      %p222 = por %p220, %p221
      %p223 = scmp.ne.s32.totalorder %s211, %s212
      %p224 = scmp.eq.s32.totalorder %s34, 1
      %p225 = por %p223, %p224
      %p227 = scmp.ne.s32.totalorder %s212, %s226
      %p228 = scmp.eq.s32.totalorder %s34, 0
      %p229 = por %p227, %p228
      %s230 = ssub.s32 %s28, %s35
      %p231 = scmp.eq.s32.totalorder %s230, 0
      %s233 = sadd.s32 %s232, 1
      %s234 = scalar_select %p231, %s232, %s233
      %p237 = pneg %p231
      %p238 = scmp.eq.s32.totalorder %s28, 1
      %p239 = por %p237, %p238
      %p240 = scmp.ne.s32.totalorder %s232, %s235
      %p241 = scmp.eq.s32.totalorder %s28, 0
      %p242 = por %p240, %p241
      %p243 = scmp.ne.s32.totalorder %s232, %s235
      %p244 = scmp.eq.s32.totalorder %s33, 1
      %p245 = por %p243, %p244
      %p246 = scmp.ne.s32.totalorder %s235, %s236
      %p247 = scmp.eq.s32.totalorder %s33, 0
      %p248 = por %p246, %p247
      %p249 = scmp.ne.s32.totalorder %s235, %s236
      %p250 = scmp.eq.s32.totalorder %s34, 1
      %p251 = por %p249, %p250
      %p253 = scmp.ne.s32.totalorder %s236, %s252
      %p254 = scmp.eq.s32.totalorder %s34, 0
      %p255 = por %p253, %p254
      %s256 = ssub.s32 %s28, %s35
      %p257 = scmp.eq.s32.totalorder %s256, 0
      %s259 = sadd.s32 %s258, 1
      %s260 = scalar_select %p257, %s258, %s259
      %p263 = pneg %p257
      %p264 = scmp.eq.s32.totalorder %s28, 1
      %p265 = por %p263, %p264
      %p266 = scmp.ne.s32.totalorder %s258, %s261
      %p267 = scmp.eq.s32.totalorder %s28, 0
      %p268 = por %p266, %p267
      %p269 = scmp.ne.s32.totalorder %s258, %s261
      %p270 = scmp.eq.s32.totalorder %s33, 1
      %p271 = por %p269, %p270
      %p272 = scmp.ne.s32.totalorder %s261, %s262
      %p273 = scmp.eq.s32.totalorder %s33, 0
      %p274 = por %p272, %p273
      %p275 = scmp.ne.s32.totalorder %s261, %s262
      %p276 = scmp.eq.s32.totalorder %s34, 1
      %p277 = por %p275, %p276
      %p279 = scmp.ne.s32.totalorder %s262, %s278
      %p280 = scmp.eq.s32.totalorder %s34, 0
      %p281 = por %p279, %p280
      %p282 = scmp.le.s32.totalorder 1, %s28
      %p283 = scmp.lt.s32.totalorder %s28, 3
      %p284 = pnand %p282, %p283
      %p285 = pneg %p284
      // Predicated region
      $region9: #{tpu_custom_call.1} parent=5 // pred_check
        _
      $region10: #{tpu_custom_call.1} parent=5 // pred_check_branch
        %287 = sbr.rel (%p284) target = $region12
      $region11: #{tpu_custom_call.1} parent=5 // pred_region
        %s288 = ssub.s32 %s28, 1
        // Predicated region
        $region13: #{tpu_custom_call.1} parent=11 // pred_check
          %p289 = pneg %p75
        $region14: #{tpu_custom_call.1} parent=11 // pred_check_branch
          %291 = sbr.rel (%p289) target = $region16
        $region15: #{tpu_custom_call.1} parent=11 // pred_region
          %293 = vsyncadd [#allocation7], 0
          %s294 = sshll.u32 %s1, 4
          %s295 = int_to_ptr.hbm [resolvable:$true] %s294
          %s296 = sshll.u32 [#allocation6], 4
          %s297 = int_to_ptr.vmem [resolvable:$true] %s296
          %302 = dma.hbm_to_vmem [thread:$0]  %s295, 512, %s297, [#allocation7], 128, 128, 8
        $region16: #{tpu_custom_call.1} parent=11 // pred_fallthru
          _
        // Predicated region
        $region17: #{tpu_custom_call.1} parent=11 // pred_check
          %p303 = pneg %p96
        $region18: #{tpu_custom_call.1} parent=11 // pred_check_branch
          %305 = sbr.rel (%p303) target = $region20
        $region19: #{tpu_custom_call.1} parent=11 // pred_region
          _
        $region20: #{tpu_custom_call.1} parent=11 // pred_fallthru
          _
        // Predicated region
        $region21: #{tpu_custom_call.1} parent=11 // pred_check
          %p306 = pneg %p117
        $region22: #{tpu_custom_call.1} parent=11 // pred_check_branch
          %308 = sbr.rel (%p306) target = $region24
        $region23: #{tpu_custom_call.1} parent=11 // pred_region
          %310 = vsyncadd [#allocation7], 0
          %s311 = sshll.u32 %s3, 4
          %s312 = int_to_ptr.hbm [resolvable:$true] %s311
          %s313 = sshll.u32 [#allocation8], 4
          %s314 = int_to_ptr.vmem [resolvable:$true] %s313
          %319 = dma.hbm_to_vmem [thread:$0]  %s312, 512, %s314, [#allocation7], 128, 128, 8
        $region24: #{tpu_custom_call.1} parent=11 // pred_fallthru
          _
        // Predicated region
        $region25: #{tpu_custom_call.1} parent=11 // pred_check
          %p320 = pneg %p138
        $region26: #{tpu_custom_call.1} parent=11 // pred_check_branch
          %322 = sbr.rel (%p320) target = $region28
        $region27: #{tpu_custom_call.1} parent=11 // pred_region
          _
        $region28: #{tpu_custom_call.1} parent=11 // pred_fallthru
          _
        // Predicated region
        $region29: #{tpu_custom_call.1} parent=11 // pred_check
          %p323 = pneg %p159
        $region30: #{tpu_custom_call.1} parent=11 // pred_check_branch
          %325 = sbr.rel (%p323) target = $region32
        $region31: #{tpu_custom_call.1} parent=11 // pred_region
          %327 = vsyncadd [#allocation10], 0
          %s328 = sshll.u32 %s5, 4
          %s329 = int_to_ptr.hbm [resolvable:$true] %s328
          %s330 = sshll.u32 [#allocation9], 4
          %s331 = int_to_ptr.vmem [resolvable:$true] %s330
          %336 = dma.hbm_to_vmem [thread:$0]  %s329, 512, %s331, [#allocation10], 128, 128, 8
        $region32: #{tpu_custom_call.1} parent=11 // pred_fallthru
          _
        // Predicated region
        $region33: #{tpu_custom_call.1} parent=11 // pred_check
          %p337 = pneg %p180
        $region34: #{tpu_custom_call.1} parent=11 // pred_check_branch
          %339 = sbr.rel (%p337) target = $region36
        $region35: #{tpu_custom_call.1} parent=11 // pred_region
          _
        $region36: #{tpu_custom_call.1} parent=11 // pred_fallthru
          _
        // Predicated region
        $region37: #{tpu_custom_call.1} parent=11 // pred_check
          %p340 = pneg %p201
        $region38: #{tpu_custom_call.1} parent=11 // pred_check_branch
          %342 = sbr.rel (%p340) target = $region40
        $region39: #{tpu_custom_call.1} parent=11 // pred_region
          %344 = vsyncadd [#allocation10], 0
          %s345 = sshll.u32 %s7, 4
          %s346 = int_to_ptr.hbm [resolvable:$true] %s345
          %s347 = sshll.u32 [#allocation11], 4
          %s348 = int_to_ptr.vmem [resolvable:$true] %s347
          %353 = dma.hbm_to_vmem [thread:$0]  %s346, 512, %s348, [#allocation10], 128, 128, 8
        $region40: #{tpu_custom_call.1} parent=11 // pred_fallthru
          _
        // Predicated region
        $region41: #{tpu_custom_call.1} parent=11 // pred_check
          %p354 = pneg %p222
        $region42: #{tpu_custom_call.1} parent=11 // pred_check_branch
          %356 = sbr.rel (%p354) target = $region44
        $region43: #{tpu_custom_call.1} parent=11 // pred_region
          _
        $region44: #{tpu_custom_call.1} parent=11 // pred_fallthru
          _
      $region12: #{tpu_custom_call.1} parent=5 // pred_fallthru
        _
      %p357 = scmp.lt.s32.totalorder %s28, 2
      // Predicated region
      $region45: #{tpu_custom_call.1} parent=5 // pred_check
        %p358 = pneg %p357
      $region46: #{tpu_custom_call.1} parent=5 // pred_check_branch
        %360 = sbr.rel (%p358) target = $region48
      $region47: #{tpu_custom_call.1} parent=5 // pred_region
        // Predicated region
        $region49: #{tpu_custom_call.1} parent=47 // pred_check
          %p361 = pneg %p48
        $region50: #{tpu_custom_call.1} parent=47 // pred_check_branch
          %363 = sbr.rel (%p361) target = $region52
        $region51: #{tpu_custom_call.1} parent=47 // pred_region
          %s364 = sand.u32 %s38, 1
          %s365 = scalar_lea.sflag [#allocation4], %s364
          %s366 = sand.u32 %s38, 1
          %s367 = smul.addr %s366, 128
          %s368 = scalar_lea.vmem [#allocation3], %s367
          %s369 = smul.u32 16, %s28
          %371 = vsyncadd %s365, 0
          %s372 = smul.addr %s369, 8
          %s373 = scalar_lea.hbm %s0, %s372
          %s374 = sshll.u32 %s373, 4
          %s375 = int_to_ptr.hbm [resolvable:$true] %s374
          %s376 = sshll.u32 %s368, 4
          %s377 = int_to_ptr.vmem [resolvable:$true] %s376
          %382 = dma.hbm_to_vmem [thread:$0]  %s375, 2048, %s377, %s365, 128, 128, 8
        $region52: #{tpu_custom_call.1} parent=47 // pred_fallthru
          _
      $region48: #{tpu_custom_call.1} parent=5 // pred_fallthru
        _
      %p383 = scmp.le.s32.totalorder 1, %s28
      %p384 = scmp.lt.s32.totalorder %s28, 3
      %p385 = pnand %p383, %p384
      %p386 = pneg %p385
      // Predicated region
      $region53: #{tpu_custom_call.1} parent=5 // pred_check
        _
      $region54: #{tpu_custom_call.1} parent=5 // pred_check_branch
        %388 = sbr.rel (%p385) target = $region56
      $region55: #{tpu_custom_call.1} parent=5 // pred_region
        %s389 = ssub.s32 %s28, 1
        %s390 = sand.u32 %s41, 1
        %s391 = scalar_lea.sflag [#allocation4], %s390
        %s392 = sand.u32 %s41, 1
        %s393 = smul.addr %s392, 128
        %s394 = scalar_lea.vmem [#allocation3], %s393
        // Predicated region
        $region57: #{tpu_custom_call.1} parent=55 // pred_check
          %p395 = pneg %p54
        $region58: #{tpu_custom_call.1} parent=55 // pred_check_branch
          %397 = sbr.rel (%p395) target = $region60
        $region59: #{tpu_custom_call.1} parent=55 // pred_region
          %399 = dma.done %s391, 2048
        $region60: #{tpu_custom_call.1} parent=55 // pred_fallthru
          _
        // Predicated region
        $region61: #{tpu_custom_call.1} parent=55 // pred_check
          %p400 = pneg %p75
        $region62: #{tpu_custom_call.1} parent=55 // pred_check_branch
          %402 = sbr.rel (%p400) target = $region64
        $region63: #{tpu_custom_call.1} parent=55 // pred_region
          %404 = dma.done [#allocation7], 512
        $region64: #{tpu_custom_call.1} parent=55 // pred_fallthru
          _
        // Predicated region
        $region65: #{tpu_custom_call.1} parent=55 // pred_check
          %p405 = pneg %p117
        $region66: #{tpu_custom_call.1} parent=55 // pred_check_branch
          %407 = sbr.rel (%p405) target = $region68
        $region67: #{tpu_custom_call.1} parent=55 // pred_region
          %409 = dma.done [#allocation7], 512
        $region68: #{tpu_custom_call.1} parent=55 // pred_fallthru
          _
        // Predicated region
        $region69: #{tpu_custom_call.1} parent=55 // pred_check
          %p410 = pneg %p159
        $region70: #{tpu_custom_call.1} parent=55 // pred_check_branch
          %412 = sbr.rel (%p410) target = $region72
        $region71: #{tpu_custom_call.1} parent=55 // pred_region
          %414 = dma.done [#allocation10], 512
        $region72: #{tpu_custom_call.1} parent=55 // pred_fallthru
          _
        // Predicated region
        $region73: #{tpu_custom_call.1} parent=55 // pred_check
          %p415 = pneg %p201
        $region74: #{tpu_custom_call.1} parent=55 // pred_check_branch
          %417 = sbr.rel (%p415) target = $region76
        $region75: #{tpu_custom_call.1} parent=55 // pred_region
          %419 = dma.done [#allocation10], 512
        $region76: #{tpu_custom_call.1} parent=55 // pred_fallthru
          _
        %s420 = sand.u32 %s41, 1
        %s421 = scalar_lea.sflag [#allocation4], %s420
        %s422 = sand.u32 %s41, 1
        %s423 = smul.addr %s422, 128
        %s424 = scalar_lea.vmem [#allocation3], %s423
        %p425 = pneg %p54
        %p426 = pneg %p51
        %p427 = pneg %p75
        %p428 = pneg %p72
        %p429 = pneg %p96
        %p430 = pneg %p93
        %p431 = pneg %p117
        %p432 = pneg %p114
        %p433 = pneg %p138
        %p434 = pneg %p135
        %p435 = pneg %p159
        %p436 = pneg %p156
        %p437 = pneg %p180
        %p438 = pneg %p177
        %p439 = pneg %p201
        %p440 = pneg %p198
        %p441 = pneg %p222
        %p442 = pneg %p219
        %p443 = pneg %p248
        %p444 = pneg %p245
        %s445 = sand.u32 %s235, 1
        %s446 = scalar_lea.sflag [#allocation5], %s445
        %s447 = sand.u32 %s235, 1
        %s448 = smul.addr %s447, 128
        %s449 = scalar_lea.vmem [#allocation12], %s448
        %p450 = pneg %p274
        %p451 = pneg %p271
        %s452 = sand.u32 %s261, 1
        %s453 = scalar_lea.sflag [#allocation14], %s452
        %s454 = sand.u32 %s261, 1
        %s455 = smul.addr %s454, 64
        %s456 = scalar_lea.vmem [#allocation13], %s455
        %s457 = smul.u32 16, %s33
        %s458 = smul.u32 16, %s33
        %s459 = smul.u32 2, %s33
        %v460 = vld [vmem:[%s394] sm:$0xff]
        %v461 = vld [vmem:[%s394 + $0x8] sm:$0xff]
        %v462 = vld [vmem:[%s394 + $0x10] sm:$0xff]
        %v463 = vld [vmem:[%s394 + $0x18] sm:$0xff]
        %v464 = vld [vmem:[%s394 + $0x20] sm:$0xff]
        %v465 = vld [vmem:[%s394 + $0x28] sm:$0xff]
        %v466 = vld [vmem:[%s394 + $0x30] sm:$0xff]
        %v467 = vld [vmem:[%s394 + $0x38] sm:$0xff]
        %v468 = vld [vmem:[%s394 + $0x40] sm:$0xff]
        %v469 = vld [vmem:[%s394 + $0x48] sm:$0xff]
        %v470 = vld [vmem:[%s394 + $0x50] sm:$0xff]
        %v471 = vld [vmem:[%s394 + $0x58] sm:$0xff]
        %v472 = vld [vmem:[%s394 + $0x60] sm:$0xff]
        %v473 = vld [vmem:[%s394 + $0x68] sm:$0xff]
        %v474 = vld [vmem:[%s394 + $0x70] sm:$0xff]
        %v475 = vld [vmem:[%s394 + $0x78] sm:$0xff]
        %v476 = vld [vmem:[#allocation6] sm:$0xff]
        %v477 = vld [vmem:[#allocation6 + $0x8] sm:$0xff]
        %v478 = vld [vmem:[#allocation6 + $0x10] sm:$0xff]
        %v479 = vld [vmem:[#allocation6 + $0x18] sm:$0xff]
        %v480 = vld [vmem:[%s2] sm:$0x1]
        %v482 = vperm.slane %v480, 0
        %vm484 = vcmask 261120
        %v486 = vsel %vm484, %v460, 0
        %v489 = vsel %vm484, %v461, 0
        %v492 = vsel %vm484, %v462, 0
        %v495 = vsel %vm484, %v463, 0
        %v498 = vsel %vm484, %v464, 0
        %v501 = vsel %vm484, %v465, 0
        %v504 = vsel %vm484, %v466, 0
        %v507 = vsel %vm484, %v467, 0
        %v510 = vsel %vm484, %v468, 0
        %v513 = vsel %vm484, %v469, 0
        %v516 = vsel %vm484, %v470, 0
        %v519 = vsel %vm484, %v471, 0
        %v522 = vsel %vm484, %v472, 0
        %v525 = vsel %vm484, %v473, 0
        %v528 = vsel %vm484, %v474, 0
        %v531 = vsel %vm484, %v475, 0
        %533 = vmatpush.msra.mxu0 0.0
        %534 = vmatpush.msra.mxu0 0.0
        %535 = vmatpush.msra.mxu0 0.0
        %536 = vmatpush.msra.mxu0 0.0
        %537 = vmatpush.msra.mxu0 0.0
        %538 = vmatpush.msra.mxu0 0.0
        %539 = vmatpush.msra.mxu0 0.0
        %540 = vmatpush.msra.mxu0 0.0
        %541 = vmatpush.msra.mxu0 0.0
        %542 = vmatpush.msra.mxu0 0.0
        %543 = vmatpush.msra.mxu0 0.0
        %544 = vmatpush.msra.mxu0 0.0
        %545 = vmatpush.msra.mxu0 %v479
        %546 = vmatpush.msra.mxu0 %v478
        %547 = vmatpush.msra.mxu0 %v477
        %548 = vmatpush.msra.mxu0 %v476
        %549 = vmatmul.f32.gmra.mxu0 %v486
        %v550 = vpop.f32.mrf.mxu0
        %v551 = vadd.f32 %v482, %v550
        %552 = vmatmul.f32.gmra.mxu0 %v489
        %v553 = vpop.f32.mrf.mxu0
        %v554 = vadd.f32 %v482, %v553
        %555 = vmatmul.f32.gmra.mxu0 %v492
        %v556 = vpop.f32.mrf.mxu0
        %v557 = vadd.f32 %v482, %v556
        %558 = vmatmul.f32.gmra.mxu0 %v495
        %v559 = vpop.f32.mrf.mxu0
        %v560 = vadd.f32 %v482, %v559
        %561 = vmatmul.f32.gmra.mxu0 %v498
        %v562 = vpop.f32.mrf.mxu0
        %v563 = vadd.f32 %v482, %v562
        %564 = vmatmul.f32.gmra.mxu0 %v501
        %v565 = vpop.f32.mrf.mxu0
        %v566 = vadd.f32 %v482, %v565
        %567 = vmatmul.f32.gmra.mxu0 %v504
        %v568 = vpop.f32.mrf.mxu0
        %v569 = vadd.f32 %v482, %v568
        %570 = vmatmul.f32.gmra.mxu0 %v507
        %v571 = vpop.f32.mrf.mxu0
        %v572 = vadd.f32 %v482, %v571
        %573 = vmatmul.f32.gmra.mxu0 %v510
        %v574 = vpop.f32.mrf.mxu0
        %v575 = vadd.f32 %v482, %v574
        %576 = vmatmul.f32.gmra.mxu0 %v513
        %v577 = vpop.f32.mrf.mxu0
        %v578 = vadd.f32 %v482, %v577
        %579 = vmatmul.f32.gmra.mxu0 %v516
        %v580 = vpop.f32.mrf.mxu0
        %v581 = vadd.f32 %v482, %v580
        %582 = vmatmul.f32.gmra.mxu0 %v519
        %v583 = vpop.f32.mrf.mxu0
        %v584 = vadd.f32 %v482, %v583
        %585 = vmatmul.f32.gmra.mxu0 %v522
        %v586 = vpop.f32.mrf.mxu0
        %v587 = vadd.f32 %v482, %v586
        %588 = vmatmul.f32.gmra.mxu0 %v525
        %v589 = vpop.f32.mrf.mxu0
        %v590 = vadd.f32 %v482, %v589
        %591 = vmatmul.f32.gmra.mxu0 %v528
        %v592 = vpop.f32.mrf.mxu0
        %v593 = vadd.f32 %v482, %v592
        %594 = vmatmul.f32.gmra.mxu0 %v531
        %v595 = vpop.f32.mrf.mxu0
        %v596 = vadd.f32 %v482, %v595
        %597 = vdwg.mxu0
        %v598 = vld [vmem:[#allocation8] sm:$0xff]
        %v599 = vld [vmem:[#allocation8 + $0x8] sm:$0xff]
        %v600 = vld [vmem:[#allocation8 + $0x10] sm:$0xff]
        %v601 = vld [vmem:[#allocation8 + $0x18] sm:$0xff]
        %v602 = vld [vmem:[%s4] sm:$0x1]
        %v604 = vperm.slane %v602, 0
        %606 = vmatpush.msra.mxu0 0.0
        %607 = vmatpush.msra.mxu0 0.0
        %608 = vmatpush.msra.mxu0 0.0
        %609 = vmatpush.msra.mxu0 0.0
        %610 = vmatpush.msra.mxu0 0.0
        %611 = vmatpush.msra.mxu0 0.0
        %612 = vmatpush.msra.mxu0 0.0
        %613 = vmatpush.msra.mxu0 0.0
        %614 = vmatpush.msra.mxu0 0.0
        %615 = vmatpush.msra.mxu0 0.0
        %616 = vmatpush.msra.mxu0 0.0
        %617 = vmatpush.msra.mxu0 0.0
        %618 = vmatpush.msra.mxu0 %v601
        %619 = vmatpush.msra.mxu0 %v600
        %620 = vmatpush.msra.mxu0 %v599
        %621 = vmatpush.msra.mxu0 %v598
        %622 = vmatmul.f32.gmra.mxu0 %v486
        %v623 = vpop.f32.mrf.mxu0
        %v624 = vadd.f32 %v604, %v623
        %625 = vmatmul.f32.gmra.mxu0 %v489
        %v626 = vpop.f32.mrf.mxu0
        %v627 = vadd.f32 %v604, %v626
        %628 = vmatmul.f32.gmra.mxu0 %v492
        %v629 = vpop.f32.mrf.mxu0
        %v630 = vadd.f32 %v604, %v629
        %631 = vmatmul.f32.gmra.mxu0 %v495
        %v632 = vpop.f32.mrf.mxu0
        %v633 = vadd.f32 %v604, %v632
        %634 = vmatmul.f32.gmra.mxu0 %v498
        %v635 = vpop.f32.mrf.mxu0
        %v636 = vadd.f32 %v604, %v635
        %637 = vmatmul.f32.gmra.mxu0 %v501
        %v638 = vpop.f32.mrf.mxu0
        %v639 = vadd.f32 %v604, %v638
        %640 = vmatmul.f32.gmra.mxu0 %v504
        %v641 = vpop.f32.mrf.mxu0
        %v642 = vadd.f32 %v604, %v641
        %643 = vmatmul.f32.gmra.mxu0 %v507
        %v644 = vpop.f32.mrf.mxu0
        %v645 = vadd.f32 %v604, %v644
        %646 = vmatmul.f32.gmra.mxu0 %v510
        %v647 = vpop.f32.mrf.mxu0
        %v648 = vadd.f32 %v604, %v647
        %649 = vmatmul.f32.gmra.mxu0 %v513
        %v650 = vpop.f32.mrf.mxu0
        %v651 = vadd.f32 %v604, %v650
        %652 = vmatmul.f32.gmra.mxu0 %v516
        %v653 = vpop.f32.mrf.mxu0
        %v654 = vadd.f32 %v604, %v653
        %655 = vmatmul.f32.gmra.mxu0 %v519
        %v656 = vpop.f32.mrf.mxu0
        %v657 = vadd.f32 %v604, %v656
        %658 = vmatmul.f32.gmra.mxu0 %v522
        %v659 = vpop.f32.mrf.mxu0
        %v660 = vadd.f32 %v604, %v659
        %661 = vmatmul.f32.gmra.mxu0 %v525
        %v662 = vpop.f32.mrf.mxu0
        %v663 = vadd.f32 %v604, %v662
        %664 = vmatmul.f32.gmra.mxu0 %v528
        %v665 = vpop.f32.mrf.mxu0
        %v666 = vadd.f32 %v604, %v665
        %667 = vmatmul.f32.gmra.mxu0 %v531
        %v668 = vpop.f32.mrf.mxu0
        %v669 = vadd.f32 %v604, %v668
        %670 = vdwg.mxu0
        %v671 = vld [vmem:[#allocation9] sm:$0xff]
        %v672 = vld [vmem:[#allocation9 + $0x8] sm:$0xff]
        %v673 = vld [vmem:[#allocation9 + $0x10] sm:$0xff]
        %v674 = vld [vmem:[#allocation9 + $0x18] sm:$0xff]
        %v675 = vld [vmem:[%s6] sm:$0x1]
        %v677 = vperm.slane %v675, 0
        %679 = vmatpush.msra.mxu0 0.0
        %680 = vmatpush.msra.mxu0 0.0
        %681 = vmatpush.msra.mxu0 0.0
        %682 = vmatpush.msra.mxu0 0.0
        %683 = vmatpush.msra.mxu0 0.0
        %684 = vmatpush.msra.mxu0 0.0
        %685 = vmatpush.msra.mxu0 0.0
        %686 = vmatpush.msra.mxu0 0.0
        %687 = vmatpush.msra.mxu0 0.0
        %688 = vmatpush.msra.mxu0 0.0
        %689 = vmatpush.msra.mxu0 0.0
        %690 = vmatpush.msra.mxu0 0.0
        %691 = vmatpush.msra.mxu0 %v674
        %692 = vmatpush.msra.mxu0 %v673
        %693 = vmatpush.msra.mxu0 %v672
        %694 = vmatpush.msra.mxu0 %v671
        %695 = vmatmul.f32.gmra.mxu0 %v486
        %v696 = vpop.f32.mrf.mxu0
        %v697 = vadd.f32 %v677, %v696
        %698 = vmatmul.f32.gmra.mxu0 %v489
        %v699 = vpop.f32.mrf.mxu0
        %v700 = vadd.f32 %v677, %v699
        %701 = vmatmul.f32.gmra.mxu0 %v492
        %v702 = vpop.f32.mrf.mxu0
        %v703 = vadd.f32 %v677, %v702
        %704 = vmatmul.f32.gmra.mxu0 %v495
        %v705 = vpop.f32.mrf.mxu0
        %v706 = vadd.f32 %v677, %v705
        %707 = vmatmul.f32.gmra.mxu0 %v498
        %v708 = vpop.f32.mrf.mxu0
        %v709 = vadd.f32 %v677, %v708
        %710 = vmatmul.f32.gmra.mxu0 %v501
        %v711 = vpop.f32.mrf.mxu0
        %v712 = vadd.f32 %v677, %v711
        %713 = vmatmul.f32.gmra.mxu0 %v504
        %v714 = vpop.f32.mrf.mxu0
        %v715 = vadd.f32 %v677, %v714
        %716 = vmatmul.f32.gmra.mxu0 %v507
        %v717 = vpop.f32.mrf.mxu0
        %v718 = vadd.f32 %v677, %v717
        %719 = vmatmul.f32.gmra.mxu0 %v510
        %v720 = vpop.f32.mrf.mxu0
        %v721 = vadd.f32 %v677, %v720
        %722 = vmatmul.f32.gmra.mxu0 %v513
        %v723 = vpop.f32.mrf.mxu0
        %v724 = vadd.f32 %v677, %v723
        %725 = vmatmul.f32.gmra.mxu0 %v516
        %v726 = vpop.f32.mrf.mxu0
        %v727 = vadd.f32 %v677, %v726
        %728 = vmatmul.f32.gmra.mxu0 %v519
        %v729 = vpop.f32.mrf.mxu0
        %v730 = vadd.f32 %v677, %v729
        %731 = vmatmul.f32.gmra.mxu0 %v522
        %v732 = vpop.f32.mrf.mxu0
        %v733 = vadd.f32 %v677, %v732
        %734 = vmatmul.f32.gmra.mxu0 %v525
        %v735 = vpop.f32.mrf.mxu0
        %v736 = vadd.f32 %v677, %v735
        %737 = vmatmul.f32.gmra.mxu0 %v528
        %v738 = vpop.f32.mrf.mxu0
        %v739 = vadd.f32 %v677, %v738
        %740 = vmatmul.f32.gmra.mxu0 %v531
        %v741 = vpop.f32.mrf.mxu0
        %v742 = vadd.f32 %v677, %v741
        %743 = vdwg.mxu0
        %vm744 = vcmask 64512
        %v746 = vsel %vm744, %v551, 0
        %v749 = vsel %vm744, %v624, 0
        %751 = vmatpush.xpose.msra.mxu0 0.0
        %752 = vmatpush.xpose.msra.mxu0 0.0
        %753 = vmatpush.xpose.msra.mxu0 0.0
        %754 = vmatpush.xpose.msra.mxu0 0.0
        %755 = vmatpush.xpose.msra.mxu0 0.0
        %756 = vmatpush.xpose.msra.mxu0 0.0
        %757 = vmatpush.xpose.msra.mxu0 0.0
        %758 = vmatpush.xpose.msra.mxu0 0.0
        %759 = vmatpush.xpose.msra.mxu0 0.0
        %760 = vmatpush.xpose.msra.mxu0 0.0
        %761 = vmatpush.xpose.msra.mxu0 0.0
        %762 = vmatpush.xpose.msra.mxu0 0.0
        %763 = vmatpush.xpose.msra.mxu0 0.0
        %764 = vmatpush.xpose.msra.mxu0 0.0
        %765 = vmatpush.xpose.msra.mxu0 0.0
        %766 = vmatpush.xpose.msra.mxu0 %v749
        %767 = vmatmul.f32.gmra.mxu0 %v746
        %v768 = vpop.f32.mrf.mxu0
        %v769 = vadd.f32 0.0, %v768
        %770 = vdwg.mxu0
        %v772 = vsel %vm744, %v554, 0
        %v775 = vsel %vm744, %v627, 0
        %777 = vmatpush.xpose.msra.mxu0 0.0
        %778 = vmatpush.xpose.msra.mxu0 0.0
        %779 = vmatpush.xpose.msra.mxu0 0.0
        %780 = vmatpush.xpose.msra.mxu0 0.0
        %781 = vmatpush.xpose.msra.mxu0 0.0
        %782 = vmatpush.xpose.msra.mxu0 0.0
        %783 = vmatpush.xpose.msra.mxu0 0.0
        %784 = vmatpush.xpose.msra.mxu0 0.0
        %785 = vmatpush.xpose.msra.mxu0 0.0
        %786 = vmatpush.xpose.msra.mxu0 0.0
        %787 = vmatpush.xpose.msra.mxu0 0.0
        %788 = vmatpush.xpose.msra.mxu0 0.0
        %789 = vmatpush.xpose.msra.mxu0 0.0
        %790 = vmatpush.xpose.msra.mxu0 0.0
        %791 = vmatpush.xpose.msra.mxu0 0.0
        %792 = vmatpush.xpose.msra.mxu0 %v775
        %793 = vmatmul.f32.gmra.mxu0 %v772
        %v794 = vpop.f32.mrf.mxu0
        %v795 = vadd.f32 0.0, %v794
        %796 = vdwg.mxu0
        %v798 = vsel %vm744, %v557, 0
        %v801 = vsel %vm744, %v630, 0
        %803 = vmatpush.xpose.msra.mxu0 0.0
        %804 = vmatpush.xpose.msra.mxu0 0.0
        %805 = vmatpush.xpose.msra.mxu0 0.0
        %806 = vmatpush.xpose.msra.mxu0 0.0
        %807 = vmatpush.xpose.msra.mxu0 0.0
        %808 = vmatpush.xpose.msra.mxu0 0.0
        %809 = vmatpush.xpose.msra.mxu0 0.0
        %810 = vmatpush.xpose.msra.mxu0 0.0
        %811 = vmatpush.xpose.msra.mxu0 0.0
        %812 = vmatpush.xpose.msra.mxu0 0.0
        %813 = vmatpush.xpose.msra.mxu0 0.0
        %814 = vmatpush.xpose.msra.mxu0 0.0
        %815 = vmatpush.xpose.msra.mxu0 0.0
        %816 = vmatpush.xpose.msra.mxu0 0.0
        %817 = vmatpush.xpose.msra.mxu0 0.0
        %818 = vmatpush.xpose.msra.mxu0 %v801
        %819 = vmatmul.f32.gmra.mxu0 %v798
        %v820 = vpop.f32.mrf.mxu0
        %v821 = vadd.f32 0.0, %v820
        %822 = vdwg.mxu0
        %v824 = vsel %vm744, %v560, 0
        %v827 = vsel %vm744, %v633, 0
        %829 = vmatpush.xpose.msra.mxu0 0.0
        %830 = vmatpush.xpose.msra.mxu0 0.0
        %831 = vmatpush.xpose.msra.mxu0 0.0
        %832 = vmatpush.xpose.msra.mxu0 0.0
        %833 = vmatpush.xpose.msra.mxu0 0.0
        %834 = vmatpush.xpose.msra.mxu0 0.0
        %835 = vmatpush.xpose.msra.mxu0 0.0
        %836 = vmatpush.xpose.msra.mxu0 0.0
        %837 = vmatpush.xpose.msra.mxu0 0.0
        %838 = vmatpush.xpose.msra.mxu0 0.0
        %839 = vmatpush.xpose.msra.mxu0 0.0
        %840 = vmatpush.xpose.msra.mxu0 0.0
        %841 = vmatpush.xpose.msra.mxu0 0.0
        %842 = vmatpush.xpose.msra.mxu0 0.0
        %843 = vmatpush.xpose.msra.mxu0 0.0
        %844 = vmatpush.xpose.msra.mxu0 %v827
        %845 = vmatmul.f32.gmra.mxu0 %v824
        %v846 = vpop.f32.mrf.mxu0
        %v847 = vadd.f32 0.0, %v846
        %848 = vdwg.mxu0
        %v850 = vsel %vm744, %v563, 0
        %v853 = vsel %vm744, %v636, 0
        %855 = vmatpush.xpose.msra.mxu0 0.0
        %856 = vmatpush.xpose.msra.mxu0 0.0
        %857 = vmatpush.xpose.msra.mxu0 0.0
        %858 = vmatpush.xpose.msra.mxu0 0.0
        %859 = vmatpush.xpose.msra.mxu0 0.0
        %860 = vmatpush.xpose.msra.mxu0 0.0
        %861 = vmatpush.xpose.msra.mxu0 0.0
        %862 = vmatpush.xpose.msra.mxu0 0.0
        %863 = vmatpush.xpose.msra.mxu0 0.0
        %864 = vmatpush.xpose.msra.mxu0 0.0
        %865 = vmatpush.xpose.msra.mxu0 0.0
        %866 = vmatpush.xpose.msra.mxu0 0.0
        %867 = vmatpush.xpose.msra.mxu0 0.0
        %868 = vmatpush.xpose.msra.mxu0 0.0
        %869 = vmatpush.xpose.msra.mxu0 0.0
        %870 = vmatpush.xpose.msra.mxu0 %v853
        %871 = vmatmul.f32.gmra.mxu0 %v850
        %v872 = vpop.f32.mrf.mxu0
        %v873 = vadd.f32 0.0, %v872
        %874 = vdwg.mxu0
        %v876 = vsel %vm744, %v566, 0
        %v879 = vsel %vm744, %v639, 0
        %881 = vmatpush.xpose.msra.mxu0 0.0
        %882 = vmatpush.xpose.msra.mxu0 0.0
        %883 = vmatpush.xpose.msra.mxu0 0.0
        %884 = vmatpush.xpose.msra.mxu0 0.0
        %885 = vmatpush.xpose.msra.mxu0 0.0
        %886 = vmatpush.xpose.msra.mxu0 0.0
        %887 = vmatpush.xpose.msra.mxu0 0.0
        %888 = vmatpush.xpose.msra.mxu0 0.0
        %889 = vmatpush.xpose.msra.mxu0 0.0
        %890 = vmatpush.xpose.msra.mxu0 0.0
        %891 = vmatpush.xpose.msra.mxu0 0.0
        %892 = vmatpush.xpose.msra.mxu0 0.0
        %893 = vmatpush.xpose.msra.mxu0 0.0
        %894 = vmatpush.xpose.msra.mxu0 0.0
        %895 = vmatpush.xpose.msra.mxu0 0.0
        %896 = vmatpush.xpose.msra.mxu0 %v879
        %897 = vmatmul.f32.gmra.mxu0 %v876
        %v898 = vpop.f32.mrf.mxu0
        %v899 = vadd.f32 0.0, %v898
        %900 = vdwg.mxu0
        %v902 = vsel %vm744, %v569, 0
        %v905 = vsel %vm744, %v642, 0
        %907 = vmatpush.xpose.msra.mxu0 0.0
        %908 = vmatpush.xpose.msra.mxu0 0.0
        %909 = vmatpush.xpose.msra.mxu0 0.0
        %910 = vmatpush.xpose.msra.mxu0 0.0
        %911 = vmatpush.xpose.msra.mxu0 0.0
        %912 = vmatpush.xpose.msra.mxu0 0.0
        %913 = vmatpush.xpose.msra.mxu0 0.0
        %914 = vmatpush.xpose.msra.mxu0 0.0
        %915 = vmatpush.xpose.msra.mxu0 0.0
        %916 = vmatpush.xpose.msra.mxu0 0.0
        %917 = vmatpush.xpose.msra.mxu0 0.0
        %918 = vmatpush.xpose.msra.mxu0 0.0
        %919 = vmatpush.xpose.msra.mxu0 0.0
        %920 = vmatpush.xpose.msra.mxu0 0.0
        %921 = vmatpush.xpose.msra.mxu0 0.0
        %922 = vmatpush.xpose.msra.mxu0 %v905
        %923 = vmatmul.f32.gmra.mxu0 %v902
        %v924 = vpop.f32.mrf.mxu0
        %v925 = vadd.f32 0.0, %v924
        %926 = vdwg.mxu0
        %v928 = vsel %vm744, %v572, 0
        %v931 = vsel %vm744, %v645, 0
        %933 = vmatpush.xpose.msra.mxu0 0.0
        %934 = vmatpush.xpose.msra.mxu0 0.0
        %935 = vmatpush.xpose.msra.mxu0 0.0
        %936 = vmatpush.xpose.msra.mxu0 0.0
        %937 = vmatpush.xpose.msra.mxu0 0.0
        %938 = vmatpush.xpose.msra.mxu0 0.0
        %939 = vmatpush.xpose.msra.mxu0 0.0
        %940 = vmatpush.xpose.msra.mxu0 0.0
        %941 = vmatpush.xpose.msra.mxu0 0.0
        %942 = vmatpush.xpose.msra.mxu0 0.0
        %943 = vmatpush.xpose.msra.mxu0 0.0
        %944 = vmatpush.xpose.msra.mxu0 0.0
        %945 = vmatpush.xpose.msra.mxu0 0.0
        %946 = vmatpush.xpose.msra.mxu0 0.0
        %947 = vmatpush.xpose.msra.mxu0 0.0
        %948 = vmatpush.xpose.msra.mxu0 %v931
        %949 = vmatmul.f32.gmra.mxu0 %v928
        %v950 = vpop.f32.mrf.mxu0
        %v951 = vadd.f32 0.0, %v950
        %952 = vdwg.mxu0
        %v954 = vsel %vm744, %v575, 0
        %v957 = vsel %vm744, %v648, 0
        %959 = vmatpush.xpose.msra.mxu0 0.0
        %960 = vmatpush.xpose.msra.mxu0 0.0
        %961 = vmatpush.xpose.msra.mxu0 0.0
        %962 = vmatpush.xpose.msra.mxu0 0.0
        %963 = vmatpush.xpose.msra.mxu0 0.0
        %964 = vmatpush.xpose.msra.mxu0 0.0
        %965 = vmatpush.xpose.msra.mxu0 0.0
        %966 = vmatpush.xpose.msra.mxu0 0.0
        %967 = vmatpush.xpose.msra.mxu0 0.0
        %968 = vmatpush.xpose.msra.mxu0 0.0
        %969 = vmatpush.xpose.msra.mxu0 0.0
        %970 = vmatpush.xpose.msra.mxu0 0.0
        %971 = vmatpush.xpose.msra.mxu0 0.0
        %972 = vmatpush.xpose.msra.mxu0 0.0
        %973 = vmatpush.xpose.msra.mxu0 0.0
        %974 = vmatpush.xpose.msra.mxu0 %v957
        %975 = vmatmul.f32.gmra.mxu0 %v954
        %v976 = vpop.f32.mrf.mxu0
        %v977 = vadd.f32 0.0, %v976
        %978 = vdwg.mxu0
        %v980 = vsel %vm744, %v578, 0
        %v983 = vsel %vm744, %v651, 0
        %985 = vmatpush.xpose.msra.mxu0 0.0
        %986 = vmatpush.xpose.msra.mxu0 0.0
        %987 = vmatpush.xpose.msra.mxu0 0.0
        %988 = vmatpush.xpose.msra.mxu0 0.0
        %989 = vmatpush.xpose.msra.mxu0 0.0
        %990 = vmatpush.xpose.msra.mxu0 0.0
        %991 = vmatpush.xpose.msra.mxu0 0.0
        %992 = vmatpush.xpose.msra.mxu0 0.0
        %993 = vmatpush.xpose.msra.mxu0 0.0
        %994 = vmatpush.xpose.msra.mxu0 0.0
        %995 = vmatpush.xpose.msra.mxu0 0.0
        %996 = vmatpush.xpose.msra.mxu0 0.0
        %997 = vmatpush.xpose.msra.mxu0 0.0
        %998 = vmatpush.xpose.msra.mxu0 0.0
        %999 = vmatpush.xpose.msra.mxu0 0.0
        %1000 = vmatpush.xpose.msra.mxu0 %v983
        %1001 = vmatmul.f32.gmra.mxu0 %v980
        %v1002 = vpop.f32.mrf.mxu0
        %v1003 = vadd.f32 0.0, %v1002
        %1004 = vdwg.mxu0
        %v1006 = vsel %vm744, %v581, 0
        %v1009 = vsel %vm744, %v654, 0
        %1011 = vmatpush.xpose.msra.mxu0 0.0
        %1012 = vmatpush.xpose.msra.mxu0 0.0
        %1013 = vmatpush.xpose.msra.mxu0 0.0
        %1014 = vmatpush.xpose.msra.mxu0 0.0
        %1015 = vmatpush.xpose.msra.mxu0 0.0
        %1016 = vmatpush.xpose.msra.mxu0 0.0
        %1017 = vmatpush.xpose.msra.mxu0 0.0
        %1018 = vmatpush.xpose.msra.mxu0 0.0
        %1019 = vmatpush.xpose.msra.mxu0 0.0
        %1020 = vmatpush.xpose.msra.mxu0 0.0
        %1021 = vmatpush.xpose.msra.mxu0 0.0
        %1022 = vmatpush.xpose.msra.mxu0 0.0
        %1023 = vmatpush.xpose.msra.mxu0 0.0
        %1024 = vmatpush.xpose.msra.mxu0 0.0
        %1025 = vmatpush.xpose.msra.mxu0 0.0
        %1026 = vmatpush.xpose.msra.mxu0 %v1009
        %1027 = vmatmul.f32.gmra.mxu0 %v1006
        %v1028 = vpop.f32.mrf.mxu0
        %v1029 = vadd.f32 0.0, %v1028
        %1030 = vdwg.mxu0
        %v1032 = vsel %vm744, %v584, 0
        %v1035 = vsel %vm744, %v657, 0
        %1037 = vmatpush.xpose.msra.mxu0 0.0
        %1038 = vmatpush.xpose.msra.mxu0 0.0
        %1039 = vmatpush.xpose.msra.mxu0 0.0
        %1040 = vmatpush.xpose.msra.mxu0 0.0
        %1041 = vmatpush.xpose.msra.mxu0 0.0
        %1042 = vmatpush.xpose.msra.mxu0 0.0
        %1043 = vmatpush.xpose.msra.mxu0 0.0
        %1044 = vmatpush.xpose.msra.mxu0 0.0
        %1045 = vmatpush.xpose.msra.mxu0 0.0
        %1046 = vmatpush.xpose.msra.mxu0 0.0
        %1047 = vmatpush.xpose.msra.mxu0 0.0
        %1048 = vmatpush.xpose.msra.mxu0 0.0
        %1049 = vmatpush.xpose.msra.mxu0 0.0
        %1050 = vmatpush.xpose.msra.mxu0 0.0
        %1051 = vmatpush.xpose.msra.mxu0 0.0
        %1052 = vmatpush.xpose.msra.mxu0 %v1035
        %1053 = vmatmul.f32.gmra.mxu0 %v1032
        %v1054 = vpop.f32.mrf.mxu0
        %v1055 = vadd.f32 0.0, %v1054
        %1056 = vdwg.mxu0
        %v1058 = vsel %vm744, %v587, 0
        %v1061 = vsel %vm744, %v660, 0
        %1063 = vmatpush.xpose.msra.mxu0 0.0
        %1064 = vmatpush.xpose.msra.mxu0 0.0
        %1065 = vmatpush.xpose.msra.mxu0 0.0
        %1066 = vmatpush.xpose.msra.mxu0 0.0
        %1067 = vmatpush.xpose.msra.mxu0 0.0
        %1068 = vmatpush.xpose.msra.mxu0 0.0
        %1069 = vmatpush.xpose.msra.mxu0 0.0
        %1070 = vmatpush.xpose.msra.mxu0 0.0
        %1071 = vmatpush.xpose.msra.mxu0 0.0
        %1072 = vmatpush.xpose.msra.mxu0 0.0
        %1073 = vmatpush.xpose.msra.mxu0 0.0
        %1074 = vmatpush.xpose.msra.mxu0 0.0
        %1075 = vmatpush.xpose.msra.mxu0 0.0
        %1076 = vmatpush.xpose.msra.mxu0 0.0
        %1077 = vmatpush.xpose.msra.mxu0 0.0
        %1078 = vmatpush.xpose.msra.mxu0 %v1061
        %1079 = vmatmul.f32.gmra.mxu0 %v1058
        %v1080 = vpop.f32.mrf.mxu0
        %v1081 = vadd.f32 0.0, %v1080
        %1082 = vdwg.mxu0
        %v1084 = vsel %vm744, %v590, 0
        %v1087 = vsel %vm744, %v663, 0
        %1089 = vmatpush.xpose.msra.mxu0 0.0
        %1090 = vmatpush.xpose.msra.mxu0 0.0
        %1091 = vmatpush.xpose.msra.mxu0 0.0
        %1092 = vmatpush.xpose.msra.mxu0 0.0
        %1093 = vmatpush.xpose.msra.mxu0 0.0
        %1094 = vmatpush.xpose.msra.mxu0 0.0
        %1095 = vmatpush.xpose.msra.mxu0 0.0
        %1096 = vmatpush.xpose.msra.mxu0 0.0
        %1097 = vmatpush.xpose.msra.mxu0 0.0
        %1098 = vmatpush.xpose.msra.mxu0 0.0
        %1099 = vmatpush.xpose.msra.mxu0 0.0
        %1100 = vmatpush.xpose.msra.mxu0 0.0
        %1101 = vmatpush.xpose.msra.mxu0 0.0
        %1102 = vmatpush.xpose.msra.mxu0 0.0
        %1103 = vmatpush.xpose.msra.mxu0 0.0
        %1104 = vmatpush.xpose.msra.mxu0 %v1087
        %1105 = vmatmul.f32.gmra.mxu0 %v1084
        %v1106 = vpop.f32.mrf.mxu0
        %v1107 = vadd.f32 0.0, %v1106
        %1108 = vdwg.mxu0
        %v1110 = vsel %vm744, %v593, 0
        %v1113 = vsel %vm744, %v666, 0
        %1115 = vmatpush.xpose.msra.mxu0 0.0
        %1116 = vmatpush.xpose.msra.mxu0 0.0
        %1117 = vmatpush.xpose.msra.mxu0 0.0
        %1118 = vmatpush.xpose.msra.mxu0 0.0
        %1119 = vmatpush.xpose.msra.mxu0 0.0
        %1120 = vmatpush.xpose.msra.mxu0 0.0
        %1121 = vmatpush.xpose.msra.mxu0 0.0
        %1122 = vmatpush.xpose.msra.mxu0 0.0
        %1123 = vmatpush.xpose.msra.mxu0 0.0
        %1124 = vmatpush.xpose.msra.mxu0 0.0
        %1125 = vmatpush.xpose.msra.mxu0 0.0
        %1126 = vmatpush.xpose.msra.mxu0 0.0
        %1127 = vmatpush.xpose.msra.mxu0 0.0
        %1128 = vmatpush.xpose.msra.mxu0 0.0
        %1129 = vmatpush.xpose.msra.mxu0 0.0
        %1130 = vmatpush.xpose.msra.mxu0 %v1113
        %1131 = vmatmul.f32.gmra.mxu0 %v1110
        %v1132 = vpop.f32.mrf.mxu0
        %v1133 = vadd.f32 0.0, %v1132
        %1134 = vdwg.mxu0
        %v1136 = vsel %vm744, %v596, 0
        %v1139 = vsel %vm744, %v669, 0
        %1141 = vmatpush.xpose.msra.mxu0 0.0
        %1142 = vmatpush.xpose.msra.mxu0 0.0
        %1143 = vmatpush.xpose.msra.mxu0 0.0
        %1144 = vmatpush.xpose.msra.mxu0 0.0
        %1145 = vmatpush.xpose.msra.mxu0 0.0
        %1146 = vmatpush.xpose.msra.mxu0 0.0
        %1147 = vmatpush.xpose.msra.mxu0 0.0
        %1148 = vmatpush.xpose.msra.mxu0 0.0
        %1149 = vmatpush.xpose.msra.mxu0 0.0
        %1150 = vmatpush.xpose.msra.mxu0 0.0
        %1151 = vmatpush.xpose.msra.mxu0 0.0
        %1152 = vmatpush.xpose.msra.mxu0 0.0
        %1153 = vmatpush.xpose.msra.mxu0 0.0
        %1154 = vmatpush.xpose.msra.mxu0 0.0
        %1155 = vmatpush.xpose.msra.mxu0 0.0
        %1156 = vmatpush.xpose.msra.mxu0 %v1139
        %1157 = vmatmul.f32.gmra.mxu0 %v1136
        %v1158 = vpop.f32.mrf.mxu0
        %v1159 = vadd.f32 0.0, %v1158
        %1160 = vdwg.mxu0
        %v1161 = vsel %vm744, %v769, -inf
        %1162 = vmax.xlane.f32.xlu0 %v1161
        %v1163 = vpop.xlane.xlu0 %1162
        %v1164 = vsel %vm744, %v795, -inf
        %1165 = vmax.xlane.f32.xlu0 %v1164
        %v1166 = vpop.xlane.xlu0 %1165
        %v1167 = vsel %vm744, %v821, -inf
        %1168 = vmax.xlane.f32.xlu0 %v1167
        %v1169 = vpop.xlane.xlu0 %1168
        %v1170 = vsel %vm744, %v847, -inf
        %1171 = vmax.xlane.f32.xlu0 %v1170
        %v1172 = vpop.xlane.xlu0 %1171
        %v1173 = vsel %vm744, %v873, -inf
        %1174 = vmax.xlane.f32.xlu0 %v1173
        %v1175 = vpop.xlane.xlu0 %1174
        %v1176 = vsel %vm744, %v899, -inf
        %1177 = vmax.xlane.f32.xlu0 %v1176
        %v1178 = vpop.xlane.xlu0 %1177
        %v1179 = vsel %vm744, %v925, -inf
        %1180 = vmax.xlane.f32.xlu0 %v1179
        %v1181 = vpop.xlane.xlu0 %1180
        %v1182 = vsel %vm744, %v951, -inf
        %1183 = vmax.xlane.f32.xlu0 %v1182
        %v1184 = vpop.xlane.xlu0 %1183
        %v1185 = vsel %vm744, %v977, -inf
        %1186 = vmax.xlane.f32.xlu0 %v1185
        %v1187 = vpop.xlane.xlu0 %1186
        %v1188 = vsel %vm744, %v1003, -inf
        %1189 = vmax.xlane.f32.xlu0 %v1188
        %v1190 = vpop.xlane.xlu0 %1189
        %v1191 = vsel %vm744, %v1029, -inf
        %1192 = vmax.xlane.f32.xlu0 %v1191
        %v1193 = vpop.xlane.xlu0 %1192
        %v1194 = vsel %vm744, %v1055, -inf
        %1195 = vmax.xlane.f32.xlu0 %v1194
        %v1196 = vpop.xlane.xlu0 %1195
        %v1197 = vsel %vm744, %v1081, -inf
        %1198 = vmax.xlane.f32.xlu0 %v1197
        %v1199 = vpop.xlane.xlu0 %1198
        %v1200 = vsel %vm744, %v1107, -inf
        %1201 = vmax.xlane.f32.xlu0 %v1200
        %v1202 = vpop.xlane.xlu0 %1201
        %v1203 = vsel %vm744, %v1133, -inf
        %1204 = vmax.xlane.f32.xlu0 %v1203
        %v1205 = vpop.xlane.xlu0 %1204
        %v1206 = vsel %vm744, %v1159, -inf
        %1207 = vmax.xlane.f32.xlu0 %v1206
        %v1208 = vpop.xlane.xlu0 %1207
        %v1209 = vsub.f32 %v769, %v1163
        %v1210 = vsub.f32 %v795, %v1166
        %v1211 = vsub.f32 %v821, %v1169
        %v1212 = vsub.f32 %v847, %v1172
        %v1213 = vsub.f32 %v873, %v1175
        %v1214 = vsub.f32 %v899, %v1178
        %v1215 = vsub.f32 %v925, %v1181
        %v1216 = vsub.f32 %v951, %v1184
        %v1217 = vsub.f32 %v977, %v1187
        %v1218 = vsub.f32 %v1003, %v1190
        %v1219 = vsub.f32 %v1029, %v1193
        %v1220 = vsub.f32 %v1055, %v1196
        %v1221 = vsub.f32 %v1081, %v1199
        %v1222 = vsub.f32 %v1107, %v1202
        %v1223 = vsub.f32 %v1133, %v1205
        %v1224 = vsub.f32 %v1159, %v1208
        %v1225 = vmul.f32 %v1209, 1.442695
        %v1226 = vpow.pop %v1225
        %v1227 = vmul.f32 %v1210, 1.442695
        %v1228 = vpow.pop %v1227
        %v1229 = vmul.f32 %v1211, 1.442695
        %v1230 = vpow.pop %v1229
        %v1231 = vmul.f32 %v1212, 1.442695
        %v1232 = vpow.pop %v1231
        %v1233 = vmul.f32 %v1213, 1.442695
        %v1234 = vpow.pop %v1233
        %v1235 = vmul.f32 %v1214, 1.442695
        %v1236 = vpow.pop %v1235
        %v1237 = vmul.f32 %v1215, 1.442695
        %v1238 = vpow.pop %v1237
        %v1239 = vmul.f32 %v1216, 1.442695
        %v1240 = vpow.pop %v1239
        %v1241 = vmul.f32 %v1217, 1.442695
        %v1242 = vpow.pop %v1241
        %v1243 = vmul.f32 %v1218, 1.442695
        %v1244 = vpow.pop %v1243
        %v1245 = vmul.f32 %v1219, 1.442695
        %v1246 = vpow.pop %v1245
        %v1247 = vmul.f32 %v1220, 1.442695
        %v1248 = vpow.pop %v1247
        %v1249 = vmul.f32 %v1221, 1.442695
        %v1250 = vpow.pop %v1249
        %v1251 = vmul.f32 %v1222, 1.442695
        %v1252 = vpow.pop %v1251
        %v1253 = vmul.f32 %v1223, 1.442695
        %v1254 = vpow.pop %v1253
        %v1255 = vmul.f32 %v1224, 1.442695
        %v1256 = vpow.pop %v1255
        %v1257 = vsel %vm744, %v1226, 0.0
        %1258 = vadd.xlane.f32.xlu0 %v1257
        %v1259 = vpop.xlane.xlu0 %1258
        %v1260 = vsel %vm744, %v1228, 0.0
        %1261 = vadd.xlane.f32.xlu0 %v1260
        %v1262 = vpop.xlane.xlu0 %1261
        %v1263 = vsel %vm744, %v1230, 0.0
        %1264 = vadd.xlane.f32.xlu0 %v1263
        %v1265 = vpop.xlane.xlu0 %1264
        %v1266 = vsel %vm744, %v1232, 0.0
        %1267 = vadd.xlane.f32.xlu0 %v1266
        %v1268 = vpop.xlane.xlu0 %1267
        %v1269 = vsel %vm744, %v1234, 0.0
        %1270 = vadd.xlane.f32.xlu0 %v1269
        %v1271 = vpop.xlane.xlu0 %1270
        %v1272 = vsel %vm744, %v1236, 0.0
        %1273 = vadd.xlane.f32.xlu0 %v1272
        %v1274 = vpop.xlane.xlu0 %1273
        %v1275 = vsel %vm744, %v1238, 0.0
        %1276 = vadd.xlane.f32.xlu0 %v1275
        %v1277 = vpop.xlane.xlu0 %1276
        %v1278 = vsel %vm744, %v1240, 0.0
        %1279 = vadd.xlane.f32.xlu0 %v1278
        %v1280 = vpop.xlane.xlu0 %1279
        %v1281 = vsel %vm744, %v1242, 0.0
        %1282 = vadd.xlane.f32.xlu0 %v1281
        %v1283 = vpop.xlane.xlu0 %1282
        %v1284 = vsel %vm744, %v1244, 0.0
        %1285 = vadd.xlane.f32.xlu0 %v1284
        %v1286 = vpop.xlane.xlu0 %1285
        %v1287 = vsel %vm744, %v1246, 0.0
        %1288 = vadd.xlane.f32.xlu0 %v1287
        %v1289 = vpop.xlane.xlu0 %1288
        %v1290 = vsel %vm744, %v1248, 0.0
        %1291 = vadd.xlane.f32.xlu0 %v1290
        %v1292 = vpop.xlane.xlu0 %1291
        %v1293 = vsel %vm744, %v1250, 0.0
        %1294 = vadd.xlane.f32.xlu0 %v1293
        %v1295 = vpop.xlane.xlu0 %1294
        %v1296 = vsel %vm744, %v1252, 0.0
        %1297 = vadd.xlane.f32.xlu0 %v1296
        %v1298 = vpop.xlane.xlu0 %1297
        %v1299 = vsel %vm744, %v1254, 0.0
        %1300 = vadd.xlane.f32.xlu0 %v1299
        %v1301 = vpop.xlane.xlu0 %1300
        %v1302 = vsel %vm744, %v1256, 0.0
        %1303 = vadd.xlane.f32.xlu0 %v1302
        %v1304 = vpop.xlane.xlu0 %1303
        %v1305 = vrcp.pop %v1259
        %v1306 = vrcp.pop %v1262
        %v1307 = vrcp.pop %v1265
        %v1308 = vrcp.pop %v1268
        %v1309 = vrcp.pop %v1271
        %v1310 = vrcp.pop %v1274
        %v1311 = vrcp.pop %v1277
        %v1312 = vrcp.pop %v1280
        %v1313 = vrcp.pop %v1283
        %v1314 = vrcp.pop %v1286
        %v1315 = vrcp.pop %v1289
        %v1316 = vrcp.pop %v1292
        %v1317 = vrcp.pop %v1295
        %v1318 = vrcp.pop %v1298
        %v1319 = vrcp.pop %v1301
        %v1320 = vrcp.pop %v1304
        %v1321 = vmul.f32 %v1226, %v1305
        %v1322 = vmul.f32 %v1228, %v1306
        %v1323 = vmul.f32 %v1230, %v1307
        %v1324 = vmul.f32 %v1232, %v1308
        %v1325 = vmul.f32 %v1234, %v1309
        %v1326 = vmul.f32 %v1236, %v1310
        %v1327 = vmul.f32 %v1238, %v1311
        %v1328 = vmul.f32 %v1240, %v1312
        %v1329 = vmul.f32 %v1242, %v1313
        %v1330 = vmul.f32 %v1244, %v1314
        %v1331 = vmul.f32 %v1246, %v1315
        %v1332 = vmul.f32 %v1248, %v1316
        %v1333 = vmul.f32 %v1250, %v1317
        %v1334 = vmul.f32 %v1252, %v1318
        %v1335 = vmul.f32 %v1254, %v1319
        %v1336 = vmul.f32 %v1256, %v1320
        %v1337 = vrot.slane %v1323, 4
        %vm1338 = vcmask 1047556
        %v1339 = vsel %vm1338, %v1337, %v1321
        %v1340 = vrot.slane %v1321, 4
        %v1341 = vsel %vm1338, %v1323, %v1340
        %v1343 = vunpack.c.l.s4 1983009808
        %v1344 = vunpack.c.0.s8 %v1343
        %v1345 = vperm.slane %v1339, %v1344
        %v1347 = vunpack.c.l.s4 1983009808
        %v1348 = vunpack.c.0.s8 %v1347
        %v1349 = vperm.slane %v1341, %v1348
        %v1350 = vrot.slane %v1324, 4
        %v1351 = vsel %vm1338, %v1350, %v1322
        %v1352 = vrot.slane %v1322, 4
        %v1353 = vsel %vm1338, %v1324, %v1352
        %v1355 = vunpack.c.l.s4 1983009808
        %v1356 = vunpack.c.0.s8 %v1355
        %v1357 = vperm.slane %v1351, %v1356
        %v1359 = vunpack.c.l.s4 1983009808
        %v1360 = vunpack.c.0.s8 %v1359
        %v1361 = vperm.slane %v1353, %v1360
        %v1362 = vrot.slane %v1327, 4
        %v1363 = vsel %vm1338, %v1362, %v1325
        %v1364 = vrot.slane %v1325, 4
        %v1365 = vsel %vm1338, %v1327, %v1364
        %v1367 = vunpack.c.l.s4 1983009808
        %v1368 = vunpack.c.0.s8 %v1367
        %v1369 = vperm.slane %v1363, %v1368
        %v1371 = vunpack.c.l.s4 1983009808
        %v1372 = vunpack.c.0.s8 %v1371
        %v1373 = vperm.slane %v1365, %v1372
        %v1374 = vrot.slane %v1328, 4
        %v1375 = vsel %vm1338, %v1374, %v1326
        %v1376 = vrot.slane %v1326, 4
        %v1377 = vsel %vm1338, %v1328, %v1376
        %v1379 = vunpack.c.l.s4 1983009808
        %v1380 = vunpack.c.0.s8 %v1379
        %v1381 = vperm.slane %v1375, %v1380
        %v1383 = vunpack.c.l.s4 1983009808
        %v1384 = vunpack.c.0.s8 %v1383
        %v1385 = vperm.slane %v1377, %v1384
        %v1386 = vrot.slane %v1357, 4
        %v1387 = vsel %vm1338, %v1386, %v1345
        %v1388 = vrot.slane %v1345, 4
        %v1389 = vsel %vm1338, %v1357, %v1388
        %v1391 = vunpack.c.l.s4 1934713408
        %v1392 = vunpack.c.0.s8 %v1391
        %v1393 = vperm.slane %v1387, %v1392
        %v1395 = vunpack.c.l.s4 1934713408
        %v1396 = vunpack.c.0.s8 %v1395
        %v1397 = vperm.slane %v1389, %v1396
        %v1398 = vrot.slane %v1361, 4
        %v1399 = vsel %vm1338, %v1398, %v1349
        %v1400 = vrot.slane %v1349, 4
        %v1401 = vsel %vm1338, %v1361, %v1400
        %v1403 = vunpack.c.l.s4 1934713408
        %v1404 = vunpack.c.0.s8 %v1403
        %v1405 = vperm.slane %v1399, %v1404
        %v1407 = vunpack.c.l.s4 1934713408
        %v1408 = vunpack.c.0.s8 %v1407
        %v1409 = vperm.slane %v1401, %v1408
        %v1410 = vrot.slane %v1381, 4
        %v1411 = vsel %vm1338, %v1410, %v1369
        %v1412 = vrot.slane %v1369, 4
        %v1413 = vsel %vm1338, %v1381, %v1412
        %v1415 = vunpack.c.l.s4 1934713408
        %v1416 = vunpack.c.0.s8 %v1415
        %v1417 = vperm.slane %v1411, %v1416
        %v1419 = vunpack.c.l.s4 1934713408
        %v1420 = vunpack.c.0.s8 %v1419
        %v1421 = vperm.slane %v1413, %v1420
        %v1422 = vrot.slane %v1385, 4
        %v1423 = vsel %vm1338, %v1422, %v1373
        %v1424 = vrot.slane %v1373, 4
        %v1425 = vsel %vm1338, %v1385, %v1424
        %v1427 = vunpack.c.l.s4 1934713408
        %v1428 = vunpack.c.0.s8 %v1427
        %v1429 = vperm.slane %v1423, %v1428
        %v1431 = vunpack.c.l.s4 1934713408
        %v1432 = vunpack.c.0.s8 %v1431
        %v1433 = vperm.slane %v1425, %v1432
        %v1434 = vrot.slane %v1417, 4
        %v1435 = vsel %vm1338, %v1434, %v1393
        %v1436 = vrot.slane %v1393, 4
        %v1437 = vsel %vm1338, %v1417, %v1436
        %v1438 = vrot.slane %v1421, 4
        %v1439 = vsel %vm1338, %v1438, %v1397
        %v1440 = vrot.slane %v1397, 4
        %v1441 = vsel %vm1338, %v1421, %v1440
        %v1442 = vrot.slane %v1429, 4
        %v1443 = vsel %vm1338, %v1442, %v1405
        %v1444 = vrot.slane %v1405, 4
        %v1445 = vsel %vm1338, %v1429, %v1444
        %v1446 = vrot.slane %v1433, 4
        %v1447 = vsel %vm1338, %v1446, %v1409
        %v1448 = vrot.slane %v1409, 4
        %v1449 = vsel %vm1338, %v1433, %v1448
        %v1450 = vrot.slane %v1331, 4
        %v1451 = vsel %vm1338, %v1450, %v1329
        %v1452 = vrot.slane %v1329, 4
        %v1453 = vsel %vm1338, %v1331, %v1452
        %v1455 = vunpack.c.l.s4 1983009808
        %v1456 = vunpack.c.0.s8 %v1455
        %v1457 = vperm.slane %v1451, %v1456
        %v1459 = vunpack.c.l.s4 1983009808
        %v1460 = vunpack.c.0.s8 %v1459
        %v1461 = vperm.slane %v1453, %v1460
        %v1462 = vrot.slane %v1332, 4
        %v1463 = vsel %vm1338, %v1462, %v1330
        %v1464 = vrot.slane %v1330, 4
        %v1465 = vsel %vm1338, %v1332, %v1464
        %v1467 = vunpack.c.l.s4 1983009808
        %v1468 = vunpack.c.0.s8 %v1467
        %v1469 = vperm.slane %v1463, %v1468
        %v1471 = vunpack.c.l.s4 1983009808
        %v1472 = vunpack.c.0.s8 %v1471
        %v1473 = vperm.slane %v1465, %v1472
        %v1474 = vrot.slane %v1335, 4
        %v1475 = vsel %vm1338, %v1474, %v1333
        %v1476 = vrot.slane %v1333, 4
        %v1477 = vsel %vm1338, %v1335, %v1476
        %v1479 = vunpack.c.l.s4 1983009808
        %v1480 = vunpack.c.0.s8 %v1479
        %v1481 = vperm.slane %v1475, %v1480
        %v1483 = vunpack.c.l.s4 1983009808
        %v1484 = vunpack.c.0.s8 %v1483
        %v1485 = vperm.slane %v1477, %v1484
        %v1486 = vrot.slane %v1336, 4
        %v1487 = vsel %vm1338, %v1486, %v1334
        %v1488 = vrot.slane %v1334, 4
        %v1489 = vsel %vm1338, %v1336, %v1488
        %v1491 = vunpack.c.l.s4 1983009808
        %v1492 = vunpack.c.0.s8 %v1491
        %v1493 = vperm.slane %v1487, %v1492
        %v1495 = vunpack.c.l.s4 1983009808
        %v1496 = vunpack.c.0.s8 %v1495
        %v1497 = vperm.slane %v1489, %v1496
        %v1498 = vrot.slane %v1469, 4
        %v1499 = vsel %vm1338, %v1498, %v1457
        %v1500 = vrot.slane %v1457, 4
        %v1501 = vsel %vm1338, %v1469, %v1500
        %v1503 = vunpack.c.l.s4 1934713408
        %v1504 = vunpack.c.0.s8 %v1503
        %v1505 = vperm.slane %v1499, %v1504
        %v1507 = vunpack.c.l.s4 1934713408
        %v1508 = vunpack.c.0.s8 %v1507
        %v1509 = vperm.slane %v1501, %v1508
        %v1510 = vrot.slane %v1473, 4
        %v1511 = vsel %vm1338, %v1510, %v1461
        %v1512 = vrot.slane %v1461, 4
        %v1513 = vsel %vm1338, %v1473, %v1512
        %v1515 = vunpack.c.l.s4 1934713408
        %v1516 = vunpack.c.0.s8 %v1515
        %v1517 = vperm.slane %v1511, %v1516
        %v1519 = vunpack.c.l.s4 1934713408
        %v1520 = vunpack.c.0.s8 %v1519
        %v1521 = vperm.slane %v1513, %v1520
        %v1522 = vrot.slane %v1493, 4
        %v1523 = vsel %vm1338, %v1522, %v1481
        %v1524 = vrot.slane %v1481, 4
        %v1525 = vsel %vm1338, %v1493, %v1524
        %v1527 = vunpack.c.l.s4 1934713408
        %v1528 = vunpack.c.0.s8 %v1527
        %v1529 = vperm.slane %v1523, %v1528
        %v1531 = vunpack.c.l.s4 1934713408
        %v1532 = vunpack.c.0.s8 %v1531
        %v1533 = vperm.slane %v1525, %v1532
        %v1534 = vrot.slane %v1497, 4
        %v1535 = vsel %vm1338, %v1534, %v1485
        %v1536 = vrot.slane %v1485, 4
        %v1537 = vsel %vm1338, %v1497, %v1536
        %v1539 = vunpack.c.l.s4 1934713408
        %v1540 = vunpack.c.0.s8 %v1539
        %v1541 = vperm.slane %v1535, %v1540
        %v1543 = vunpack.c.l.s4 1934713408
        %v1544 = vunpack.c.0.s8 %v1543
        %v1545 = vperm.slane %v1537, %v1544
        %v1546 = vrot.slane %v1529, 4
        %v1547 = vsel %vm1338, %v1546, %v1505
        %v1548 = vrot.slane %v1505, 4
        %v1549 = vsel %vm1338, %v1529, %v1548
        %v1550 = vrot.slane %v1533, 4
        %v1551 = vsel %vm1338, %v1550, %v1509
        %v1552 = vrot.slane %v1509, 4
        %v1553 = vsel %vm1338, %v1533, %v1552
        %v1554 = vrot.slane %v1541, 4
        %v1555 = vsel %vm1338, %v1554, %v1517
        %v1556 = vrot.slane %v1517, 4
        %v1557 = vsel %vm1338, %v1541, %v1556
        %v1558 = vrot.slane %v1545, 4
        %v1559 = vsel %vm1338, %v1558, %v1521
        %v1560 = vrot.slane %v1521, 4
        %v1561 = vsel %vm1338, %v1545, %v1560
        %1564 = vrot.lane.b32.xlu0 %v1437, 8
        %v1565 = vpop.permute.xlu0 %1564
        %1566 = vrot.lane.b32.xlu0 %v1549, 8
        %v1567 = vpop.permute.xlu0 %1566
        %1572 = vrot.lane.b32.xlu0 %v1439, 16
        %v1573 = vpop.permute.xlu0 %1572
        %1574 = vrot.lane.b32.xlu0 %v1551, 16
        %v1575 = vpop.permute.xlu0 %1574
        %1580 = vrot.lane.b32.xlu0 %v1441, 24
        %v1581 = vpop.permute.xlu0 %1580
        %1582 = vrot.lane.b32.xlu0 %v1553, 24
        %v1583 = vpop.permute.xlu0 %1582
        %1588 = vrot.lane.b32.xlu0 %v1443, 32
        %v1589 = vpop.permute.xlu0 %1588
        %1590 = vrot.lane.b32.xlu0 %v1555, 32
        %v1591 = vpop.permute.xlu0 %1590
        %1596 = vrot.lane.b32.xlu0 %v1445, 40
        %v1597 = vpop.permute.xlu0 %1596
        %1598 = vrot.lane.b32.xlu0 %v1557, 40
        %v1599 = vpop.permute.xlu0 %1598
        %1604 = vrot.lane.b32.xlu0 %v1447, 48
        %v1605 = vpop.permute.xlu0 %1604
        %1606 = vrot.lane.b32.xlu0 %v1559, 48
        %v1607 = vpop.permute.xlu0 %1606
        %1612 = vrot.lane.b32.xlu0 %v1449, 56
        %v1613 = vpop.permute.xlu0 %1612
        %1614 = vrot.lane.b32.xlu0 %v1561, 56
        %v1615 = vpop.permute.xlu0 %1614
        %v1618 = vsel %vm744, %v1435, %v1565
        %v1619 = vsel %vm744, %v1547, %v1567
        %vm1620 = vcmask 130048
        %v1621 = vsel %vm1620, %v1618, %v1573
        %v1622 = vsel %vm1620, %v1619, %v1575
        %vm1623 = vcmask 195584
        %v1624 = vsel %vm1623, %v1621, %v1581
        %v1625 = vsel %vm1623, %v1622, %v1583
        %v1626 = vsel %vm484, %v1624, %v1589
        %v1627 = vsel %vm484, %v1625, %v1591
        %vm1628 = vcmask 326656
        %v1629 = vsel %vm1628, %v1626, %v1597
        %v1630 = vsel %vm1628, %v1627, %v1599
        %vm1631 = vcmask 392192
        %v1632 = vsel %vm1631, %v1629, %v1605
        %v1633 = vsel %vm1631, %v1630, %v1607
        %vm1634 = vcmask 457728
        %v1635 = vsel %vm1634, %v1632, %v1613
        %v1636 = vsel %vm1634, %v1633, %v1615
        %vm1637 = vcmask 523264
        %1638 = vst.msk [vmem:[%s456] sm:$0xff] %vm1637, %v1635
        %1639 = vst.msk [vmem:[%s456 + $0x8] sm:$0xff] %vm1637, %v1636
        %v1641 = vsel %vm744, %v1321, 0
        %1643 = vmatpush.msra.mxu0 0.0
        %1644 = vmatpush.msra.mxu0 0.0
        %1645 = vmatpush.msra.mxu0 0.0
        %1646 = vmatpush.msra.mxu0 0.0
        %1647 = vmatpush.msra.mxu0 0.0
        %1648 = vmatpush.msra.mxu0 0.0
        %1649 = vmatpush.msra.mxu0 0.0
        %1650 = vmatpush.msra.mxu0 0.0
        %1651 = vmatpush.msra.mxu0 0.0
        %1652 = vmatpush.msra.mxu0 0.0
        %1653 = vmatpush.msra.mxu0 0.0
        %1654 = vmatpush.msra.mxu0 0.0
        %1655 = vmatpush.msra.mxu0 0.0
        %1656 = vmatpush.msra.mxu0 0.0
        %1657 = vmatpush.msra.mxu0 0.0
        %1658 = vmatpush.msra.mxu0 %v697
        %1659 = vmatmul.f32.gmra.mxu0 %v1641
        %v1660 = vpop.f32.mrf.mxu0
        %v1661 = vadd.f32 0.0, %v1660
        %1662 = vdwg.mxu0
        %v1664 = vsel %vm744, %v1322, 0
        %1666 = vmatpush.msra.mxu0 0.0
        %1667 = vmatpush.msra.mxu0 0.0
        %1668 = vmatpush.msra.mxu0 0.0
        %1669 = vmatpush.msra.mxu0 0.0
        %1670 = vmatpush.msra.mxu0 0.0
        %1671 = vmatpush.msra.mxu0 0.0
        %1672 = vmatpush.msra.mxu0 0.0
        %1673 = vmatpush.msra.mxu0 0.0
        %1674 = vmatpush.msra.mxu0 0.0
        %1675 = vmatpush.msra.mxu0 0.0
        %1676 = vmatpush.msra.mxu0 0.0
        %1677 = vmatpush.msra.mxu0 0.0
        %1678 = vmatpush.msra.mxu0 0.0
        %1679 = vmatpush.msra.mxu0 0.0
        %1680 = vmatpush.msra.mxu0 0.0
        %1681 = vmatpush.msra.mxu0 %v700
        %1682 = vmatmul.f32.gmra.mxu0 %v1664
        %v1683 = vpop.f32.mrf.mxu0
        %v1684 = vadd.f32 0.0, %v1683
        %1685 = vdwg.mxu0
        %v1687 = vsel %vm744, %v1323, 0
        %1689 = vmatpush.msra.mxu0 0.0
        %1690 = vmatpush.msra.mxu0 0.0
        %1691 = vmatpush.msra.mxu0 0.0
        %1692 = vmatpush.msra.mxu0 0.0
        %1693 = vmatpush.msra.mxu0 0.0
        %1694 = vmatpush.msra.mxu0 0.0
        %1695 = vmatpush.msra.mxu0 0.0
        %1696 = vmatpush.msra.mxu0 0.0
        %1697 = vmatpush.msra.mxu0 0.0
        %1698 = vmatpush.msra.mxu0 0.0
        %1699 = vmatpush.msra.mxu0 0.0
        %1700 = vmatpush.msra.mxu0 0.0
        %1701 = vmatpush.msra.mxu0 0.0
        %1702 = vmatpush.msra.mxu0 0.0
        %1703 = vmatpush.msra.mxu0 0.0
        %1704 = vmatpush.msra.mxu0 %v703
        %1705 = vmatmul.f32.gmra.mxu0 %v1687
        %v1706 = vpop.f32.mrf.mxu0
        %v1707 = vadd.f32 0.0, %v1706
        %1708 = vdwg.mxu0
        %v1710 = vsel %vm744, %v1324, 0
        %1712 = vmatpush.msra.mxu0 0.0
        %1713 = vmatpush.msra.mxu0 0.0
        %1714 = vmatpush.msra.mxu0 0.0
        %1715 = vmatpush.msra.mxu0 0.0
        %1716 = vmatpush.msra.mxu0 0.0
        %1717 = vmatpush.msra.mxu0 0.0
        %1718 = vmatpush.msra.mxu0 0.0
        %1719 = vmatpush.msra.mxu0 0.0
        %1720 = vmatpush.msra.mxu0 0.0
        %1721 = vmatpush.msra.mxu0 0.0
        %1722 = vmatpush.msra.mxu0 0.0
        %1723 = vmatpush.msra.mxu0 0.0
        %1724 = vmatpush.msra.mxu0 0.0
        %1725 = vmatpush.msra.mxu0 0.0
        %1726 = vmatpush.msra.mxu0 0.0
        %1727 = vmatpush.msra.mxu0 %v706
        %1728 = vmatmul.f32.gmra.mxu0 %v1710
        %v1729 = vpop.f32.mrf.mxu0
        %v1730 = vadd.f32 0.0, %v1729
        %1731 = vdwg.mxu0
        %v1733 = vsel %vm744, %v1325, 0
        %1735 = vmatpush.msra.mxu0 0.0
        %1736 = vmatpush.msra.mxu0 0.0
        %1737 = vmatpush.msra.mxu0 0.0
        %1738 = vmatpush.msra.mxu0 0.0
        %1739 = vmatpush.msra.mxu0 0.0
        %1740 = vmatpush.msra.mxu0 0.0
        %1741 = vmatpush.msra.mxu0 0.0
        %1742 = vmatpush.msra.mxu0 0.0
        %1743 = vmatpush.msra.mxu0 0.0
        %1744 = vmatpush.msra.mxu0 0.0
        %1745 = vmatpush.msra.mxu0 0.0
        %1746 = vmatpush.msra.mxu0 0.0
        %1747 = vmatpush.msra.mxu0 0.0
        %1748 = vmatpush.msra.mxu0 0.0
        %1749 = vmatpush.msra.mxu0 0.0
        %1750 = vmatpush.msra.mxu0 %v709
        %1751 = vmatmul.f32.gmra.mxu0 %v1733
        %v1752 = vpop.f32.mrf.mxu0
        %v1753 = vadd.f32 0.0, %v1752
        %1754 = vdwg.mxu0
        %v1756 = vsel %vm744, %v1326, 0
        %1758 = vmatpush.msra.mxu0 0.0
        %1759 = vmatpush.msra.mxu0 0.0
        %1760 = vmatpush.msra.mxu0 0.0
        %1761 = vmatpush.msra.mxu0 0.0
        %1762 = vmatpush.msra.mxu0 0.0
        %1763 = vmatpush.msra.mxu0 0.0
        %1764 = vmatpush.msra.mxu0 0.0
        %1765 = vmatpush.msra.mxu0 0.0
        %1766 = vmatpush.msra.mxu0 0.0
        %1767 = vmatpush.msra.mxu0 0.0
        %1768 = vmatpush.msra.mxu0 0.0
        %1769 = vmatpush.msra.mxu0 0.0
        %1770 = vmatpush.msra.mxu0 0.0
        %1771 = vmatpush.msra.mxu0 0.0
        %1772 = vmatpush.msra.mxu0 0.0
        %1773 = vmatpush.msra.mxu0 %v712
        %1774 = vmatmul.f32.gmra.mxu0 %v1756
        %v1775 = vpop.f32.mrf.mxu0
        %v1776 = vadd.f32 0.0, %v1775
        %1777 = vdwg.mxu0
        %v1779 = vsel %vm744, %v1327, 0
        %1781 = vmatpush.msra.mxu0 0.0
        %1782 = vmatpush.msra.mxu0 0.0
        %1783 = vmatpush.msra.mxu0 0.0
        %1784 = vmatpush.msra.mxu0 0.0
        %1785 = vmatpush.msra.mxu0 0.0
        %1786 = vmatpush.msra.mxu0 0.0
        %1787 = vmatpush.msra.mxu0 0.0
        %1788 = vmatpush.msra.mxu0 0.0
        %1789 = vmatpush.msra.mxu0 0.0
        %1790 = vmatpush.msra.mxu0 0.0
        %1791 = vmatpush.msra.mxu0 0.0
        %1792 = vmatpush.msra.mxu0 0.0
        %1793 = vmatpush.msra.mxu0 0.0
        %1794 = vmatpush.msra.mxu0 0.0
        %1795 = vmatpush.msra.mxu0 0.0
        %1796 = vmatpush.msra.mxu0 %v715
        %1797 = vmatmul.f32.gmra.mxu0 %v1779
        %v1798 = vpop.f32.mrf.mxu0
        %v1799 = vadd.f32 0.0, %v1798
        %1800 = vdwg.mxu0
        %v1802 = vsel %vm744, %v1328, 0
        %1804 = vmatpush.msra.mxu0 0.0
        %1805 = vmatpush.msra.mxu0 0.0
        %1806 = vmatpush.msra.mxu0 0.0
        %1807 = vmatpush.msra.mxu0 0.0
        %1808 = vmatpush.msra.mxu0 0.0
        %1809 = vmatpush.msra.mxu0 0.0
        %1810 = vmatpush.msra.mxu0 0.0
        %1811 = vmatpush.msra.mxu0 0.0
        %1812 = vmatpush.msra.mxu0 0.0
        %1813 = vmatpush.msra.mxu0 0.0
        %1814 = vmatpush.msra.mxu0 0.0
        %1815 = vmatpush.msra.mxu0 0.0
        %1816 = vmatpush.msra.mxu0 0.0
        %1817 = vmatpush.msra.mxu0 0.0
        %1818 = vmatpush.msra.mxu0 0.0
        %1819 = vmatpush.msra.mxu0 %v718
        %1820 = vmatmul.f32.gmra.mxu0 %v1802
        %v1821 = vpop.f32.mrf.mxu0
        %v1822 = vadd.f32 0.0, %v1821
        %1823 = vdwg.mxu0
        %v1825 = vsel %vm744, %v1329, 0
        %1827 = vmatpush.msra.mxu0 0.0
        %1828 = vmatpush.msra.mxu0 0.0
        %1829 = vmatpush.msra.mxu0 0.0
        %1830 = vmatpush.msra.mxu0 0.0
        %1831 = vmatpush.msra.mxu0 0.0
        %1832 = vmatpush.msra.mxu0 0.0
        %1833 = vmatpush.msra.mxu0 0.0
        %1834 = vmatpush.msra.mxu0 0.0
        %1835 = vmatpush.msra.mxu0 0.0
        %1836 = vmatpush.msra.mxu0 0.0
        %1837 = vmatpush.msra.mxu0 0.0
        %1838 = vmatpush.msra.mxu0 0.0
        %1839 = vmatpush.msra.mxu0 0.0
        %1840 = vmatpush.msra.mxu0 0.0
        %1841 = vmatpush.msra.mxu0 0.0
        %1842 = vmatpush.msra.mxu0 %v721
        %1843 = vmatmul.f32.gmra.mxu0 %v1825
        %v1844 = vpop.f32.mrf.mxu0
        %v1845 = vadd.f32 0.0, %v1844
        %1846 = vdwg.mxu0
        %v1848 = vsel %vm744, %v1330, 0
        %1850 = vmatpush.msra.mxu0 0.0
        %1851 = vmatpush.msra.mxu0 0.0
        %1852 = vmatpush.msra.mxu0 0.0
        %1853 = vmatpush.msra.mxu0 0.0
        %1854 = vmatpush.msra.mxu0 0.0
        %1855 = vmatpush.msra.mxu0 0.0
        %1856 = vmatpush.msra.mxu0 0.0
        %1857 = vmatpush.msra.mxu0 0.0
        %1858 = vmatpush.msra.mxu0 0.0
        %1859 = vmatpush.msra.mxu0 0.0
        %1860 = vmatpush.msra.mxu0 0.0
        %1861 = vmatpush.msra.mxu0 0.0
        %1862 = vmatpush.msra.mxu0 0.0
        %1863 = vmatpush.msra.mxu0 0.0
        %1864 = vmatpush.msra.mxu0 0.0
        %1865 = vmatpush.msra.mxu0 %v724
        %1866 = vmatmul.f32.gmra.mxu0 %v1848
        %v1867 = vpop.f32.mrf.mxu0
        %v1868 = vadd.f32 0.0, %v1867
        %1869 = vdwg.mxu0
        %v1871 = vsel %vm744, %v1331, 0
        %1873 = vmatpush.msra.mxu0 0.0
        %1874 = vmatpush.msra.mxu0 0.0
        %1875 = vmatpush.msra.mxu0 0.0
        %1876 = vmatpush.msra.mxu0 0.0
        %1877 = vmatpush.msra.mxu0 0.0
        %1878 = vmatpush.msra.mxu0 0.0
        %1879 = vmatpush.msra.mxu0 0.0
        %1880 = vmatpush.msra.mxu0 0.0
        %1881 = vmatpush.msra.mxu0 0.0
        %1882 = vmatpush.msra.mxu0 0.0
        %1883 = vmatpush.msra.mxu0 0.0
        %1884 = vmatpush.msra.mxu0 0.0
        %1885 = vmatpush.msra.mxu0 0.0
        %1886 = vmatpush.msra.mxu0 0.0
        %1887 = vmatpush.msra.mxu0 0.0
        %1888 = vmatpush.msra.mxu0 %v727
        %1889 = vmatmul.f32.gmra.mxu0 %v1871
        %v1890 = vpop.f32.mrf.mxu0
        %v1891 = vadd.f32 0.0, %v1890
        %1892 = vdwg.mxu0
        %v1894 = vsel %vm744, %v1332, 0
        %1896 = vmatpush.msra.mxu0 0.0
        %1897 = vmatpush.msra.mxu0 0.0
        %1898 = vmatpush.msra.mxu0 0.0
        %1899 = vmatpush.msra.mxu0 0.0
        %1900 = vmatpush.msra.mxu0 0.0
        %1901 = vmatpush.msra.mxu0 0.0
        %1902 = vmatpush.msra.mxu0 0.0
        %1903 = vmatpush.msra.mxu0 0.0
        %1904 = vmatpush.msra.mxu0 0.0
        %1905 = vmatpush.msra.mxu0 0.0
        %1906 = vmatpush.msra.mxu0 0.0
        %1907 = vmatpush.msra.mxu0 0.0
        %1908 = vmatpush.msra.mxu0 0.0
        %1909 = vmatpush.msra.mxu0 0.0
        %1910 = vmatpush.msra.mxu0 0.0
        %1911 = vmatpush.msra.mxu0 %v730
        %1912 = vmatmul.f32.gmra.mxu0 %v1894
        %v1913 = vpop.f32.mrf.mxu0
        %v1914 = vadd.f32 0.0, %v1913
        %1915 = vdwg.mxu0
        %v1917 = vsel %vm744, %v1333, 0
        %1919 = vmatpush.msra.mxu0 0.0
        %1920 = vmatpush.msra.mxu0 0.0
        %1921 = vmatpush.msra.mxu0 0.0
        %1922 = vmatpush.msra.mxu0 0.0
        %1923 = vmatpush.msra.mxu0 0.0
        %1924 = vmatpush.msra.mxu0 0.0
        %1925 = vmatpush.msra.mxu0 0.0
        %1926 = vmatpush.msra.mxu0 0.0
        %1927 = vmatpush.msra.mxu0 0.0
        %1928 = vmatpush.msra.mxu0 0.0
        %1929 = vmatpush.msra.mxu0 0.0
        %1930 = vmatpush.msra.mxu0 0.0
        %1931 = vmatpush.msra.mxu0 0.0
        %1932 = vmatpush.msra.mxu0 0.0
        %1933 = vmatpush.msra.mxu0 0.0
        %1934 = vmatpush.msra.mxu0 %v733
        %1935 = vmatmul.f32.gmra.mxu0 %v1917
        %v1936 = vpop.f32.mrf.mxu0
        %v1937 = vadd.f32 0.0, %v1936
        %1938 = vdwg.mxu0
        %v1940 = vsel %vm744, %v1334, 0
        %1942 = vmatpush.msra.mxu0 0.0
        %1943 = vmatpush.msra.mxu0 0.0
        %1944 = vmatpush.msra.mxu0 0.0
        %1945 = vmatpush.msra.mxu0 0.0
        %1946 = vmatpush.msra.mxu0 0.0
        %1947 = vmatpush.msra.mxu0 0.0
        %1948 = vmatpush.msra.mxu0 0.0
        %1949 = vmatpush.msra.mxu0 0.0
        %1950 = vmatpush.msra.mxu0 0.0
        %1951 = vmatpush.msra.mxu0 0.0
        %1952 = vmatpush.msra.mxu0 0.0
        %1953 = vmatpush.msra.mxu0 0.0
        %1954 = vmatpush.msra.mxu0 0.0
        %1955 = vmatpush.msra.mxu0 0.0
        %1956 = vmatpush.msra.mxu0 0.0
        %1957 = vmatpush.msra.mxu0 %v736
        %1958 = vmatmul.f32.gmra.mxu0 %v1940
        %v1959 = vpop.f32.mrf.mxu0
        %v1960 = vadd.f32 0.0, %v1959
        %1961 = vdwg.mxu0
        %v1963 = vsel %vm744, %v1335, 0
        %1965 = vmatpush.msra.mxu0 0.0
        %1966 = vmatpush.msra.mxu0 0.0
        %1967 = vmatpush.msra.mxu0 0.0
        %1968 = vmatpush.msra.mxu0 0.0
        %1969 = vmatpush.msra.mxu0 0.0
        %1970 = vmatpush.msra.mxu0 0.0
        %1971 = vmatpush.msra.mxu0 0.0
        %1972 = vmatpush.msra.mxu0 0.0
        %1973 = vmatpush.msra.mxu0 0.0
        %1974 = vmatpush.msra.mxu0 0.0
        %1975 = vmatpush.msra.mxu0 0.0
        %1976 = vmatpush.msra.mxu0 0.0
        %1977 = vmatpush.msra.mxu0 0.0
        %1978 = vmatpush.msra.mxu0 0.0
        %1979 = vmatpush.msra.mxu0 0.0
        %1980 = vmatpush.msra.mxu0 %v739
        %1981 = vmatmul.f32.gmra.mxu0 %v1963
        %v1982 = vpop.f32.mrf.mxu0
        %v1983 = vadd.f32 0.0, %v1982
        %1984 = vdwg.mxu0
        %v1986 = vsel %vm744, %v1336, 0
        %1988 = vmatpush.msra.mxu0 0.0
        %1989 = vmatpush.msra.mxu0 0.0
        %1990 = vmatpush.msra.mxu0 0.0
        %1991 = vmatpush.msra.mxu0 0.0
        %1992 = vmatpush.msra.mxu0 0.0
        %1993 = vmatpush.msra.mxu0 0.0
        %1994 = vmatpush.msra.mxu0 0.0
        %1995 = vmatpush.msra.mxu0 0.0
        %1996 = vmatpush.msra.mxu0 0.0
        %1997 = vmatpush.msra.mxu0 0.0
        %1998 = vmatpush.msra.mxu0 0.0
        %1999 = vmatpush.msra.mxu0 0.0
        %2000 = vmatpush.msra.mxu0 0.0
        %2001 = vmatpush.msra.mxu0 0.0
        %2002 = vmatpush.msra.mxu0 0.0
        %2003 = vmatpush.msra.mxu0 %v742
        %2004 = vmatmul.f32.gmra.mxu0 %v1986
        %v2005 = vpop.f32.mrf.mxu0
        %v2006 = vadd.f32 0.0, %v2005
        %2007 = vdwg.mxu0
        %2008 = vst.msk [vmem:[#allocation2] sm:$0xff] %vm744, %v1661
        %2009 = vst.msk [vmem:[#allocation2 + $0x8] sm:$0xff] %vm744, %v1684
        %2010 = vst.msk [vmem:[#allocation2 + $0x10] sm:$0xff] %vm744, %v1707
        %2011 = vst.msk [vmem:[#allocation2 + $0x18] sm:$0xff] %vm744, %v1730
        %2012 = vst.msk [vmem:[#allocation2 + $0x20] sm:$0xff] %vm744, %v1753
        %2013 = vst.msk [vmem:[#allocation2 + $0x28] sm:$0xff] %vm744, %v1776
        %2014 = vst.msk [vmem:[#allocation2 + $0x30] sm:$0xff] %vm744, %v1799
        %2015 = vst.msk [vmem:[#allocation2 + $0x38] sm:$0xff] %vm744, %v1822
        %2016 = vst.msk [vmem:[#allocation2 + $0x40] sm:$0xff] %vm744, %v1845
        %2017 = vst.msk [vmem:[#allocation2 + $0x48] sm:$0xff] %vm744, %v1868
        %2018 = vst.msk [vmem:[#allocation2 + $0x50] sm:$0xff] %vm744, %v1891
        %2019 = vst.msk [vmem:[#allocation2 + $0x58] sm:$0xff] %vm744, %v1914
        %2020 = vst.msk [vmem:[#allocation2 + $0x60] sm:$0xff] %vm744, %v1937
        %2021 = vst.msk [vmem:[#allocation2 + $0x68] sm:$0xff] %vm744, %v1960
        %2022 = vst.msk [vmem:[#allocation2 + $0x70] sm:$0xff] %vm744, %v1983
        %2023 = vst.msk [vmem:[#allocation2 + $0x78] sm:$0xff] %vm744, %v2006
        %2024 = vrot.lane.b32.xlu0 %v551, 120
        %v2025 = vpop.permute.xlu0 %2024
        %2026 = vrot.lane.b32.xlu0 %v624, 120
        %v2027 = vpop.permute.xlu0 %2026
        %v2028 = vsel %vm744, %v2025, 0
        %v2030 = vsel %vm744, %v2027, 0
        %2032 = vmatpush.xpose.msra.mxu0 0.0
        %2033 = vmatpush.xpose.msra.mxu0 0.0
        %2034 = vmatpush.xpose.msra.mxu0 0.0
        %2035 = vmatpush.xpose.msra.mxu0 0.0
        %2036 = vmatpush.xpose.msra.mxu0 0.0
        %2037 = vmatpush.xpose.msra.mxu0 0.0
        %2038 = vmatpush.xpose.msra.mxu0 0.0
        %2039 = vmatpush.xpose.msra.mxu0 0.0
        %2040 = vmatpush.xpose.msra.mxu0 0.0
        %2041 = vmatpush.xpose.msra.mxu0 0.0
        %2042 = vmatpush.xpose.msra.mxu0 0.0
        %2043 = vmatpush.xpose.msra.mxu0 0.0
        %2044 = vmatpush.xpose.msra.mxu0 0.0
        %2045 = vmatpush.xpose.msra.mxu0 0.0
        %2046 = vmatpush.xpose.msra.mxu0 0.0
        %2047 = vmatpush.xpose.msra.mxu0 %v2030
        %2048 = vmatmul.f32.gmra.mxu0 %v2028
        %v2049 = vpop.f32.mrf.mxu0
        %v2050 = vadd.f32 0.0, %v2049
        %2051 = vdwg.mxu0
        %2052 = vrot.lane.b32.xlu0 %v554, 120
        %v2053 = vpop.permute.xlu0 %2052
        %2054 = vrot.lane.b32.xlu0 %v627, 120
        %v2055 = vpop.permute.xlu0 %2054
        %v2056 = vsel %vm744, %v2053, 0
        %v2058 = vsel %vm744, %v2055, 0
        %2060 = vmatpush.xpose.msra.mxu0 0.0
        %2061 = vmatpush.xpose.msra.mxu0 0.0
        %2062 = vmatpush.xpose.msra.mxu0 0.0
        %2063 = vmatpush.xpose.msra.mxu0 0.0
        %2064 = vmatpush.xpose.msra.mxu0 0.0
        %2065 = vmatpush.xpose.msra.mxu0 0.0
        %2066 = vmatpush.xpose.msra.mxu0 0.0
        %2067 = vmatpush.xpose.msra.mxu0 0.0
        %2068 = vmatpush.xpose.msra.mxu0 0.0
        %2069 = vmatpush.xpose.msra.mxu0 0.0
        %2070 = vmatpush.xpose.msra.mxu0 0.0
        %2071 = vmatpush.xpose.msra.mxu0 0.0
        %2072 = vmatpush.xpose.msra.mxu0 0.0
        %2073 = vmatpush.xpose.msra.mxu0 0.0
        %2074 = vmatpush.xpose.msra.mxu0 0.0
        %2075 = vmatpush.xpose.msra.mxu0 %v2058
        %2076 = vmatmul.f32.gmra.mxu0 %v2056
        %v2077 = vpop.f32.mrf.mxu0
        %v2078 = vadd.f32 0.0, %v2077
        %2079 = vdwg.mxu0
        %2080 = vrot.lane.b32.xlu0 %v557, 120
        %v2081 = vpop.permute.xlu0 %2080
        %2082 = vrot.lane.b32.xlu0 %v630, 120
        %v2083 = vpop.permute.xlu0 %2082
        %v2084 = vsel %vm744, %v2081, 0
        %v2086 = vsel %vm744, %v2083, 0
        %2088 = vmatpush.xpose.msra.mxu0 0.0
        %2089 = vmatpush.xpose.msra.mxu0 0.0
        %2090 = vmatpush.xpose.msra.mxu0 0.0
        %2091 = vmatpush.xpose.msra.mxu0 0.0
        %2092 = vmatpush.xpose.msra.mxu0 0.0
        %2093 = vmatpush.xpose.msra.mxu0 0.0
        %2094 = vmatpush.xpose.msra.mxu0 0.0
        %2095 = vmatpush.xpose.msra.mxu0 0.0
        %2096 = vmatpush.xpose.msra.mxu0 0.0
        %2097 = vmatpush.xpose.msra.mxu0 0.0
        %2098 = vmatpush.xpose.msra.mxu0 0.0
        %2099 = vmatpush.xpose.msra.mxu0 0.0
        %2100 = vmatpush.xpose.msra.mxu0 0.0
        %2101 = vmatpush.xpose.msra.mxu0 0.0
        %2102 = vmatpush.xpose.msra.mxu0 0.0
        %2103 = vmatpush.xpose.msra.mxu0 %v2086
        %2104 = vmatmul.f32.gmra.mxu0 %v2084
        %v2105 = vpop.f32.mrf.mxu0
        %v2106 = vadd.f32 0.0, %v2105
        %2107 = vdwg.mxu0
        %2108 = vrot.lane.b32.xlu0 %v560, 120
        %v2109 = vpop.permute.xlu0 %2108
        %2110 = vrot.lane.b32.xlu0 %v633, 120
        %v2111 = vpop.permute.xlu0 %2110
        %v2112 = vsel %vm744, %v2109, 0
        %v2114 = vsel %vm744, %v2111, 0
        %2116 = vmatpush.xpose.msra.mxu0 0.0
        %2117 = vmatpush.xpose.msra.mxu0 0.0
        %2118 = vmatpush.xpose.msra.mxu0 0.0
        %2119 = vmatpush.xpose.msra.mxu0 0.0
        %2120 = vmatpush.xpose.msra.mxu0 0.0
        %2121 = vmatpush.xpose.msra.mxu0 0.0
        %2122 = vmatpush.xpose.msra.mxu0 0.0
        %2123 = vmatpush.xpose.msra.mxu0 0.0
        %2124 = vmatpush.xpose.msra.mxu0 0.0
        %2125 = vmatpush.xpose.msra.mxu0 0.0
        %2126 = vmatpush.xpose.msra.mxu0 0.0
        %2127 = vmatpush.xpose.msra.mxu0 0.0
        %2128 = vmatpush.xpose.msra.mxu0 0.0
        %2129 = vmatpush.xpose.msra.mxu0 0.0
        %2130 = vmatpush.xpose.msra.mxu0 0.0
        %2131 = vmatpush.xpose.msra.mxu0 %v2114
        %2132 = vmatmul.f32.gmra.mxu0 %v2112
        %v2133 = vpop.f32.mrf.mxu0
        %v2134 = vadd.f32 0.0, %v2133
        %2135 = vdwg.mxu0
        %2136 = vrot.lane.b32.xlu0 %v563, 120
        %v2137 = vpop.permute.xlu0 %2136
        %2138 = vrot.lane.b32.xlu0 %v636, 120
        %v2139 = vpop.permute.xlu0 %2138
        %v2140 = vsel %vm744, %v2137, 0
        %v2142 = vsel %vm744, %v2139, 0
        %2144 = vmatpush.xpose.msra.mxu0 0.0
        %2145 = vmatpush.xpose.msra.mxu0 0.0
        %2146 = vmatpush.xpose.msra.mxu0 0.0
        %2147 = vmatpush.xpose.msra.mxu0 0.0
        %2148 = vmatpush.xpose.msra.mxu0 0.0
        %2149 = vmatpush.xpose.msra.mxu0 0.0
        %2150 = vmatpush.xpose.msra.mxu0 0.0
        %2151 = vmatpush.xpose.msra.mxu0 0.0
        %2152 = vmatpush.xpose.msra.mxu0 0.0
        %2153 = vmatpush.xpose.msra.mxu0 0.0
        %2154 = vmatpush.xpose.msra.mxu0 0.0
        %2155 = vmatpush.xpose.msra.mxu0 0.0
        %2156 = vmatpush.xpose.msra.mxu0 0.0
        %2157 = vmatpush.xpose.msra.mxu0 0.0
        %2158 = vmatpush.xpose.msra.mxu0 0.0
        %2159 = vmatpush.xpose.msra.mxu0 %v2142
        %2160 = vmatmul.f32.gmra.mxu0 %v2140
        %v2161 = vpop.f32.mrf.mxu0
        %v2162 = vadd.f32 0.0, %v2161
        %2163 = vdwg.mxu0
        %2164 = vrot.lane.b32.xlu0 %v566, 120
        %v2165 = vpop.permute.xlu0 %2164
        %2166 = vrot.lane.b32.xlu0 %v639, 120
        %v2167 = vpop.permute.xlu0 %2166
        %v2168 = vsel %vm744, %v2165, 0
        %v2170 = vsel %vm744, %v2167, 0
        %2172 = vmatpush.xpose.msra.mxu0 0.0
        %2173 = vmatpush.xpose.msra.mxu0 0.0
        %2174 = vmatpush.xpose.msra.mxu0 0.0
        %2175 = vmatpush.xpose.msra.mxu0 0.0
        %2176 = vmatpush.xpose.msra.mxu0 0.0
        %2177 = vmatpush.xpose.msra.mxu0 0.0
        %2178 = vmatpush.xpose.msra.mxu0 0.0
        %2179 = vmatpush.xpose.msra.mxu0 0.0
        %2180 = vmatpush.xpose.msra.mxu0 0.0
        %2181 = vmatpush.xpose.msra.mxu0 0.0
        %2182 = vmatpush.xpose.msra.mxu0 0.0
        %2183 = vmatpush.xpose.msra.mxu0 0.0
        %2184 = vmatpush.xpose.msra.mxu0 0.0
        %2185 = vmatpush.xpose.msra.mxu0 0.0
        %2186 = vmatpush.xpose.msra.mxu0 0.0
        %2187 = vmatpush.xpose.msra.mxu0 %v2170
        %2188 = vmatmul.f32.gmra.mxu0 %v2168
        %v2189 = vpop.f32.mrf.mxu0
        %v2190 = vadd.f32 0.0, %v2189
        %2191 = vdwg.mxu0
        %2192 = vrot.lane.b32.xlu0 %v569, 120
        %v2193 = vpop.permute.xlu0 %2192
        %2194 = vrot.lane.b32.xlu0 %v642, 120
        %v2195 = vpop.permute.xlu0 %2194
        %v2196 = vsel %vm744, %v2193, 0
        %v2198 = vsel %vm744, %v2195, 0
        %2200 = vmatpush.xpose.msra.mxu0 0.0
        %2201 = vmatpush.xpose.msra.mxu0 0.0
        %2202 = vmatpush.xpose.msra.mxu0 0.0
        %2203 = vmatpush.xpose.msra.mxu0 0.0
        %2204 = vmatpush.xpose.msra.mxu0 0.0
        %2205 = vmatpush.xpose.msra.mxu0 0.0
        %2206 = vmatpush.xpose.msra.mxu0 0.0
        %2207 = vmatpush.xpose.msra.mxu0 0.0
        %2208 = vmatpush.xpose.msra.mxu0 0.0
        %2209 = vmatpush.xpose.msra.mxu0 0.0
        %2210 = vmatpush.xpose.msra.mxu0 0.0
        %2211 = vmatpush.xpose.msra.mxu0 0.0
        %2212 = vmatpush.xpose.msra.mxu0 0.0
        %2213 = vmatpush.xpose.msra.mxu0 0.0
        %2214 = vmatpush.xpose.msra.mxu0 0.0
        %2215 = vmatpush.xpose.msra.mxu0 %v2198
        %2216 = vmatmul.f32.gmra.mxu0 %v2196
        %v2217 = vpop.f32.mrf.mxu0
        %v2218 = vadd.f32 0.0, %v2217
        %2219 = vdwg.mxu0
        %2220 = vrot.lane.b32.xlu0 %v572, 120
        %v2221 = vpop.permute.xlu0 %2220
        %2222 = vrot.lane.b32.xlu0 %v645, 120
        %v2223 = vpop.permute.xlu0 %2222
        %v2224 = vsel %vm744, %v2221, 0
        %v2226 = vsel %vm744, %v2223, 0
        %2228 = vmatpush.xpose.msra.mxu0 0.0
        %2229 = vmatpush.xpose.msra.mxu0 0.0
        %2230 = vmatpush.xpose.msra.mxu0 0.0
        %2231 = vmatpush.xpose.msra.mxu0 0.0
        %2232 = vmatpush.xpose.msra.mxu0 0.0
        %2233 = vmatpush.xpose.msra.mxu0 0.0
        %2234 = vmatpush.xpose.msra.mxu0 0.0
        %2235 = vmatpush.xpose.msra.mxu0 0.0
        %2236 = vmatpush.xpose.msra.mxu0 0.0
        %2237 = vmatpush.xpose.msra.mxu0 0.0
        %2238 = vmatpush.xpose.msra.mxu0 0.0
        %2239 = vmatpush.xpose.msra.mxu0 0.0
        %2240 = vmatpush.xpose.msra.mxu0 0.0
        %2241 = vmatpush.xpose.msra.mxu0 0.0
        %2242 = vmatpush.xpose.msra.mxu0 0.0
        %2243 = vmatpush.xpose.msra.mxu0 %v2226
        %2244 = vmatmul.f32.gmra.mxu0 %v2224
        %v2245 = vpop.f32.mrf.mxu0
        %v2246 = vadd.f32 0.0, %v2245
        %2247 = vdwg.mxu0
        %2248 = vrot.lane.b32.xlu0 %v575, 120
        %v2249 = vpop.permute.xlu0 %2248
        %2250 = vrot.lane.b32.xlu0 %v648, 120
        %v2251 = vpop.permute.xlu0 %2250
        %v2252 = vsel %vm744, %v2249, 0
        %v2254 = vsel %vm744, %v2251, 0
        %2256 = vmatpush.xpose.msra.mxu0 0.0
        %2257 = vmatpush.xpose.msra.mxu0 0.0
        %2258 = vmatpush.xpose.msra.mxu0 0.0
        %2259 = vmatpush.xpose.msra.mxu0 0.0
        %2260 = vmatpush.xpose.msra.mxu0 0.0
        %2261 = vmatpush.xpose.msra.mxu0 0.0
        %2262 = vmatpush.xpose.msra.mxu0 0.0
        %2263 = vmatpush.xpose.msra.mxu0 0.0
        %2264 = vmatpush.xpose.msra.mxu0 0.0
        %2265 = vmatpush.xpose.msra.mxu0 0.0
        %2266 = vmatpush.xpose.msra.mxu0 0.0
        %2267 = vmatpush.xpose.msra.mxu0 0.0
        %2268 = vmatpush.xpose.msra.mxu0 0.0
        %2269 = vmatpush.xpose.msra.mxu0 0.0
        %2270 = vmatpush.xpose.msra.mxu0 0.0
        %2271 = vmatpush.xpose.msra.mxu0 %v2254
        %2272 = vmatmul.f32.gmra.mxu0 %v2252
        %v2273 = vpop.f32.mrf.mxu0
        %v2274 = vadd.f32 0.0, %v2273
        %2275 = vdwg.mxu0
        %2276 = vrot.lane.b32.xlu0 %v578, 120
        %v2277 = vpop.permute.xlu0 %2276
        %2278 = vrot.lane.b32.xlu0 %v651, 120
        %v2279 = vpop.permute.xlu0 %2278
        %v2280 = vsel %vm744, %v2277, 0
        %v2282 = vsel %vm744, %v2279, 0
        %2284 = vmatpush.xpose.msra.mxu0 0.0
        %2285 = vmatpush.xpose.msra.mxu0 0.0
        %2286 = vmatpush.xpose.msra.mxu0 0.0
        %2287 = vmatpush.xpose.msra.mxu0 0.0
        %2288 = vmatpush.xpose.msra.mxu0 0.0
        %2289 = vmatpush.xpose.msra.mxu0 0.0
        %2290 = vmatpush.xpose.msra.mxu0 0.0
        %2291 = vmatpush.xpose.msra.mxu0 0.0
        %2292 = vmatpush.xpose.msra.mxu0 0.0
        %2293 = vmatpush.xpose.msra.mxu0 0.0
        %2294 = vmatpush.xpose.msra.mxu0 0.0
        %2295 = vmatpush.xpose.msra.mxu0 0.0
        %2296 = vmatpush.xpose.msra.mxu0 0.0
        %2297 = vmatpush.xpose.msra.mxu0 0.0
        %2298 = vmatpush.xpose.msra.mxu0 0.0
        %2299 = vmatpush.xpose.msra.mxu0 %v2282
        %2300 = vmatmul.f32.gmra.mxu0 %v2280
        %v2301 = vpop.f32.mrf.mxu0
        %v2302 = vadd.f32 0.0, %v2301
        %2303 = vdwg.mxu0
        %2304 = vrot.lane.b32.xlu0 %v581, 120
        %v2305 = vpop.permute.xlu0 %2304
        %2306 = vrot.lane.b32.xlu0 %v654, 120
        %v2307 = vpop.permute.xlu0 %2306
        %v2308 = vsel %vm744, %v2305, 0
        %v2310 = vsel %vm744, %v2307, 0
        %2312 = vmatpush.xpose.msra.mxu0 0.0
        %2313 = vmatpush.xpose.msra.mxu0 0.0
        %2314 = vmatpush.xpose.msra.mxu0 0.0
        %2315 = vmatpush.xpose.msra.mxu0 0.0
        %2316 = vmatpush.xpose.msra.mxu0 0.0
        %2317 = vmatpush.xpose.msra.mxu0 0.0
        %2318 = vmatpush.xpose.msra.mxu0 0.0
        %2319 = vmatpush.xpose.msra.mxu0 0.0
        %2320 = vmatpush.xpose.msra.mxu0 0.0
        %2321 = vmatpush.xpose.msra.mxu0 0.0
        %2322 = vmatpush.xpose.msra.mxu0 0.0
        %2323 = vmatpush.xpose.msra.mxu0 0.0
        %2324 = vmatpush.xpose.msra.mxu0 0.0
        %2325 = vmatpush.xpose.msra.mxu0 0.0
        %2326 = vmatpush.xpose.msra.mxu0 0.0
        %2327 = vmatpush.xpose.msra.mxu0 %v2310
        %2328 = vmatmul.f32.gmra.mxu0 %v2308
        %v2329 = vpop.f32.mrf.mxu0
        %v2330 = vadd.f32 0.0, %v2329
        %2331 = vdwg.mxu0
        %2332 = vrot.lane.b32.xlu0 %v584, 120
        %v2333 = vpop.permute.xlu0 %2332
        %2334 = vrot.lane.b32.xlu0 %v657, 120
        %v2335 = vpop.permute.xlu0 %2334
        %v2336 = vsel %vm744, %v2333, 0
        %v2338 = vsel %vm744, %v2335, 0
        %2340 = vmatpush.xpose.msra.mxu0 0.0
        %2341 = vmatpush.xpose.msra.mxu0 0.0
        %2342 = vmatpush.xpose.msra.mxu0 0.0
        %2343 = vmatpush.xpose.msra.mxu0 0.0
        %2344 = vmatpush.xpose.msra.mxu0 0.0
        %2345 = vmatpush.xpose.msra.mxu0 0.0
        %2346 = vmatpush.xpose.msra.mxu0 0.0
        %2347 = vmatpush.xpose.msra.mxu0 0.0
        %2348 = vmatpush.xpose.msra.mxu0 0.0
        %2349 = vmatpush.xpose.msra.mxu0 0.0
        %2350 = vmatpush.xpose.msra.mxu0 0.0
        %2351 = vmatpush.xpose.msra.mxu0 0.0
        %2352 = vmatpush.xpose.msra.mxu0 0.0
        %2353 = vmatpush.xpose.msra.mxu0 0.0
        %2354 = vmatpush.xpose.msra.mxu0 0.0
        %2355 = vmatpush.xpose.msra.mxu0 %v2338
        %2356 = vmatmul.f32.gmra.mxu0 %v2336
        %v2357 = vpop.f32.mrf.mxu0
        %v2358 = vadd.f32 0.0, %v2357
        %2359 = vdwg.mxu0
        %2360 = vrot.lane.b32.xlu0 %v587, 120
        %v2361 = vpop.permute.xlu0 %2360
        %2362 = vrot.lane.b32.xlu0 %v660, 120
        %v2363 = vpop.permute.xlu0 %2362
        %v2364 = vsel %vm744, %v2361, 0
        %v2366 = vsel %vm744, %v2363, 0
        %2368 = vmatpush.xpose.msra.mxu0 0.0
        %2369 = vmatpush.xpose.msra.mxu0 0.0
        %2370 = vmatpush.xpose.msra.mxu0 0.0
        %2371 = vmatpush.xpose.msra.mxu0 0.0
        %2372 = vmatpush.xpose.msra.mxu0 0.0
        %2373 = vmatpush.xpose.msra.mxu0 0.0
        %2374 = vmatpush.xpose.msra.mxu0 0.0
        %2375 = vmatpush.xpose.msra.mxu0 0.0
        %2376 = vmatpush.xpose.msra.mxu0 0.0
        %2377 = vmatpush.xpose.msra.mxu0 0.0
        %2378 = vmatpush.xpose.msra.mxu0 0.0
        %2379 = vmatpush.xpose.msra.mxu0 0.0
        %2380 = vmatpush.xpose.msra.mxu0 0.0
        %2381 = vmatpush.xpose.msra.mxu0 0.0
        %2382 = vmatpush.xpose.msra.mxu0 0.0
        %2383 = vmatpush.xpose.msra.mxu0 %v2366
        %2384 = vmatmul.f32.gmra.mxu0 %v2364
        %v2385 = vpop.f32.mrf.mxu0
        %v2386 = vadd.f32 0.0, %v2385
        %2387 = vdwg.mxu0
        %2388 = vrot.lane.b32.xlu0 %v590, 120
        %v2389 = vpop.permute.xlu0 %2388
        %2390 = vrot.lane.b32.xlu0 %v663, 120
        %v2391 = vpop.permute.xlu0 %2390
        %v2392 = vsel %vm744, %v2389, 0
        %v2394 = vsel %vm744, %v2391, 0
        %2396 = vmatpush.xpose.msra.mxu0 0.0
        %2397 = vmatpush.xpose.msra.mxu0 0.0
        %2398 = vmatpush.xpose.msra.mxu0 0.0
        %2399 = vmatpush.xpose.msra.mxu0 0.0
        %2400 = vmatpush.xpose.msra.mxu0 0.0
        %2401 = vmatpush.xpose.msra.mxu0 0.0
        %2402 = vmatpush.xpose.msra.mxu0 0.0
        %2403 = vmatpush.xpose.msra.mxu0 0.0
        %2404 = vmatpush.xpose.msra.mxu0 0.0
        %2405 = vmatpush.xpose.msra.mxu0 0.0
        %2406 = vmatpush.xpose.msra.mxu0 0.0
        %2407 = vmatpush.xpose.msra.mxu0 0.0
        %2408 = vmatpush.xpose.msra.mxu0 0.0
        %2409 = vmatpush.xpose.msra.mxu0 0.0
        %2410 = vmatpush.xpose.msra.mxu0 0.0
        %2411 = vmatpush.xpose.msra.mxu0 %v2394
        %2412 = vmatmul.f32.gmra.mxu0 %v2392
        %v2413 = vpop.f32.mrf.mxu0
        %v2414 = vadd.f32 0.0, %v2413
        %2415 = vdwg.mxu0
        %2416 = vrot.lane.b32.xlu0 %v593, 120
        %v2417 = vpop.permute.xlu0 %2416
        %2418 = vrot.lane.b32.xlu0 %v666, 120
        %v2419 = vpop.permute.xlu0 %2418
        %v2420 = vsel %vm744, %v2417, 0
        %v2422 = vsel %vm744, %v2419, 0
        %2424 = vmatpush.xpose.msra.mxu0 0.0
        %2425 = vmatpush.xpose.msra.mxu0 0.0
        %2426 = vmatpush.xpose.msra.mxu0 0.0
        %2427 = vmatpush.xpose.msra.mxu0 0.0
        %2428 = vmatpush.xpose.msra.mxu0 0.0
        %2429 = vmatpush.xpose.msra.mxu0 0.0
        %2430 = vmatpush.xpose.msra.mxu0 0.0
        %2431 = vmatpush.xpose.msra.mxu0 0.0
        %2432 = vmatpush.xpose.msra.mxu0 0.0
        %2433 = vmatpush.xpose.msra.mxu0 0.0
        %2434 = vmatpush.xpose.msra.mxu0 0.0
        %2435 = vmatpush.xpose.msra.mxu0 0.0
        %2436 = vmatpush.xpose.msra.mxu0 0.0
        %2437 = vmatpush.xpose.msra.mxu0 0.0
        %2438 = vmatpush.xpose.msra.mxu0 0.0
        %2439 = vmatpush.xpose.msra.mxu0 %v2422
        %2440 = vmatmul.f32.gmra.mxu0 %v2420
        %v2441 = vpop.f32.mrf.mxu0
        %v2442 = vadd.f32 0.0, %v2441
        %2443 = vdwg.mxu0
        %2444 = vrot.lane.b32.xlu0 %v596, 120
        %v2445 = vpop.permute.xlu0 %2444
        %2446 = vrot.lane.b32.xlu0 %v669, 120
        %v2447 = vpop.permute.xlu0 %2446
        %v2448 = vsel %vm744, %v2445, 0
        %v2450 = vsel %vm744, %v2447, 0
        %2452 = vmatpush.xpose.msra.mxu0 0.0
        %2453 = vmatpush.xpose.msra.mxu0 0.0
        %2454 = vmatpush.xpose.msra.mxu0 0.0
        %2455 = vmatpush.xpose.msra.mxu0 0.0
        %2456 = vmatpush.xpose.msra.mxu0 0.0
        %2457 = vmatpush.xpose.msra.mxu0 0.0
        %2458 = vmatpush.xpose.msra.mxu0 0.0
        %2459 = vmatpush.xpose.msra.mxu0 0.0
        %2460 = vmatpush.xpose.msra.mxu0 0.0
        %2461 = vmatpush.xpose.msra.mxu0 0.0
        %2462 = vmatpush.xpose.msra.mxu0 0.0
        %2463 = vmatpush.xpose.msra.mxu0 0.0
        %2464 = vmatpush.xpose.msra.mxu0 0.0
        %2465 = vmatpush.xpose.msra.mxu0 0.0
        %2466 = vmatpush.xpose.msra.mxu0 0.0
        %2467 = vmatpush.xpose.msra.mxu0 %v2450
        %2468 = vmatmul.f32.gmra.mxu0 %v2448
        %v2469 = vpop.f32.mrf.mxu0
        %v2470 = vadd.f32 0.0, %v2469
        %2471 = vdwg.mxu0
        %v2472 = vsel %vm744, %v2050, -inf
        %2473 = vmax.xlane.f32.xlu0 %v2472
        %v2474 = vpop.xlane.xlu0 %2473
        %v2475 = vsel %vm744, %v2078, -inf
        %2476 = vmax.xlane.f32.xlu0 %v2475
        %v2477 = vpop.xlane.xlu0 %2476
        %v2478 = vsel %vm744, %v2106, -inf
        %2479 = vmax.xlane.f32.xlu0 %v2478
        %v2480 = vpop.xlane.xlu0 %2479
        %v2481 = vsel %vm744, %v2134, -inf
        %2482 = vmax.xlane.f32.xlu0 %v2481
        %v2483 = vpop.xlane.xlu0 %2482
        %v2484 = vsel %vm744, %v2162, -inf
        %2485 = vmax.xlane.f32.xlu0 %v2484
        %v2486 = vpop.xlane.xlu0 %2485
        %v2487 = vsel %vm744, %v2190, -inf
        %2488 = vmax.xlane.f32.xlu0 %v2487
        %v2489 = vpop.xlane.xlu0 %2488
        %v2490 = vsel %vm744, %v2218, -inf
        %2491 = vmax.xlane.f32.xlu0 %v2490
        %v2492 = vpop.xlane.xlu0 %2491
        %v2493 = vsel %vm744, %v2246, -inf
        %2494 = vmax.xlane.f32.xlu0 %v2493
        %v2495 = vpop.xlane.xlu0 %2494
        %v2496 = vsel %vm744, %v2274, -inf
        %2497 = vmax.xlane.f32.xlu0 %v2496
        %v2498 = vpop.xlane.xlu0 %2497
        %v2499 = vsel %vm744, %v2302, -inf
        %2500 = vmax.xlane.f32.xlu0 %v2499
        %v2501 = vpop.xlane.xlu0 %2500
        %v2502 = vsel %vm744, %v2330, -inf
        %2503 = vmax.xlane.f32.xlu0 %v2502
        %v2504 = vpop.xlane.xlu0 %2503
        %v2505 = vsel %vm744, %v2358, -inf
        %2506 = vmax.xlane.f32.xlu0 %v2505
        %v2507 = vpop.xlane.xlu0 %2506
        %v2508 = vsel %vm744, %v2386, -inf
        %2509 = vmax.xlane.f32.xlu0 %v2508
        %v2510 = vpop.xlane.xlu0 %2509
        %v2511 = vsel %vm744, %v2414, -inf
        %2512 = vmax.xlane.f32.xlu0 %v2511
        %v2513 = vpop.xlane.xlu0 %2512
        %v2514 = vsel %vm744, %v2442, -inf
        %2515 = vmax.xlane.f32.xlu0 %v2514
        %v2516 = vpop.xlane.xlu0 %2515
        %v2517 = vsel %vm744, %v2470, -inf
        %2518 = vmax.xlane.f32.xlu0 %v2517
        %v2519 = vpop.xlane.xlu0 %2518
        %v2520 = vsub.f32 %v2050, %v2474
        %v2521 = vsub.f32 %v2078, %v2477
        %v2522 = vsub.f32 %v2106, %v2480
        %v2523 = vsub.f32 %v2134, %v2483
        %v2524 = vsub.f32 %v2162, %v2486
        %v2525 = vsub.f32 %v2190, %v2489
        %v2526 = vsub.f32 %v2218, %v2492
        %v2527 = vsub.f32 %v2246, %v2495
        %v2528 = vsub.f32 %v2274, %v2498
        %v2529 = vsub.f32 %v2302, %v2501
        %v2530 = vsub.f32 %v2330, %v2504
        %v2531 = vsub.f32 %v2358, %v2507
        %v2532 = vsub.f32 %v2386, %v2510
        %v2533 = vsub.f32 %v2414, %v2513
        %v2534 = vsub.f32 %v2442, %v2516
        %v2535 = vsub.f32 %v2470, %v2519
        %v2536 = vmul.f32 %v2520, 1.442695
        %v2537 = vpow.pop %v2536
        %v2538 = vmul.f32 %v2521, 1.442695
        %v2539 = vpow.pop %v2538
        %v2540 = vmul.f32 %v2522, 1.442695
        %v2541 = vpow.pop %v2540
        %v2542 = vmul.f32 %v2523, 1.442695
        %v2543 = vpow.pop %v2542
        %v2544 = vmul.f32 %v2524, 1.442695
        %v2545 = vpow.pop %v2544
        %v2546 = vmul.f32 %v2525, 1.442695
        %v2547 = vpow.pop %v2546
        %v2548 = vmul.f32 %v2526, 1.442695
        %v2549 = vpow.pop %v2548
        %v2550 = vmul.f32 %v2527, 1.442695
        %v2551 = vpow.pop %v2550
        %v2552 = vmul.f32 %v2528, 1.442695
        %v2553 = vpow.pop %v2552
        %v2554 = vmul.f32 %v2529, 1.442695
        %v2555 = vpow.pop %v2554
        %v2556 = vmul.f32 %v2530, 1.442695
        %v2557 = vpow.pop %v2556
        %v2558 = vmul.f32 %v2531, 1.442695
        %v2559 = vpow.pop %v2558
        %v2560 = vmul.f32 %v2532, 1.442695
        %v2561 = vpow.pop %v2560
        %v2562 = vmul.f32 %v2533, 1.442695
        %v2563 = vpow.pop %v2562
        %v2564 = vmul.f32 %v2534, 1.442695
        %v2565 = vpow.pop %v2564
        %v2566 = vmul.f32 %v2535, 1.442695
        %v2567 = vpow.pop %v2566
        %v2568 = vsel %vm744, %v2537, 0.0
        %2569 = vadd.xlane.f32.xlu0 %v2568
        %v2570 = vpop.xlane.xlu0 %2569
        %v2571 = vsel %vm744, %v2539, 0.0
        %2572 = vadd.xlane.f32.xlu0 %v2571
        %v2573 = vpop.xlane.xlu0 %2572
        %v2574 = vsel %vm744, %v2541, 0.0
        %2575 = vadd.xlane.f32.xlu0 %v2574
        %v2576 = vpop.xlane.xlu0 %2575
        %v2577 = vsel %vm744, %v2543, 0.0
        %2578 = vadd.xlane.f32.xlu0 %v2577
        %v2579 = vpop.xlane.xlu0 %2578
        %v2580 = vsel %vm744, %v2545, 0.0
        %2581 = vadd.xlane.f32.xlu0 %v2580
        %v2582 = vpop.xlane.xlu0 %2581
        %v2583 = vsel %vm744, %v2547, 0.0
        %2584 = vadd.xlane.f32.xlu0 %v2583
        %v2585 = vpop.xlane.xlu0 %2584
        %v2586 = vsel %vm744, %v2549, 0.0
        %2587 = vadd.xlane.f32.xlu0 %v2586
        %v2588 = vpop.xlane.xlu0 %2587
        %v2589 = vsel %vm744, %v2551, 0.0
        %2590 = vadd.xlane.f32.xlu0 %v2589
        %v2591 = vpop.xlane.xlu0 %2590
        %v2592 = vsel %vm744, %v2553, 0.0
        %2593 = vadd.xlane.f32.xlu0 %v2592
        %v2594 = vpop.xlane.xlu0 %2593
        %v2595 = vsel %vm744, %v2555, 0.0
        %2596 = vadd.xlane.f32.xlu0 %v2595
        %v2597 = vpop.xlane.xlu0 %2596
        %v2598 = vsel %vm744, %v2557, 0.0
        %2599 = vadd.xlane.f32.xlu0 %v2598
        %v2600 = vpop.xlane.xlu0 %2599
        %v2601 = vsel %vm744, %v2559, 0.0
        %2602 = vadd.xlane.f32.xlu0 %v2601
        %v2603 = vpop.xlane.xlu0 %2602
        %v2604 = vsel %vm744, %v2561, 0.0
        %2605 = vadd.xlane.f32.xlu0 %v2604
        %v2606 = vpop.xlane.xlu0 %2605
        %v2607 = vsel %vm744, %v2563, 0.0
        %2608 = vadd.xlane.f32.xlu0 %v2607
        %v2609 = vpop.xlane.xlu0 %2608
        %v2610 = vsel %vm744, %v2565, 0.0
        %2611 = vadd.xlane.f32.xlu0 %v2610
        %v2612 = vpop.xlane.xlu0 %2611
        %v2613 = vsel %vm744, %v2567, 0.0
        %2614 = vadd.xlane.f32.xlu0 %v2613
        %v2615 = vpop.xlane.xlu0 %2614
        %v2616 = vrcp.pop %v2570
        %v2617 = vrcp.pop %v2573
        %v2618 = vrcp.pop %v2576
        %v2619 = vrcp.pop %v2579
        %v2620 = vrcp.pop %v2582
        %v2621 = vrcp.pop %v2585
        %v2622 = vrcp.pop %v2588
        %v2623 = vrcp.pop %v2591
        %v2624 = vrcp.pop %v2594
        %v2625 = vrcp.pop %v2597
        %v2626 = vrcp.pop %v2600
        %v2627 = vrcp.pop %v2603
        %v2628 = vrcp.pop %v2606
        %v2629 = vrcp.pop %v2609
        %v2630 = vrcp.pop %v2612
        %v2631 = vrcp.pop %v2615
        %v2632 = vmul.f32 %v2537, %v2616
        %v2633 = vmul.f32 %v2539, %v2617
        %v2634 = vmul.f32 %v2541, %v2618
        %v2635 = vmul.f32 %v2543, %v2619
        %v2636 = vmul.f32 %v2545, %v2620
        %v2637 = vmul.f32 %v2547, %v2621
        %v2638 = vmul.f32 %v2549, %v2622
        %v2639 = vmul.f32 %v2551, %v2623
        %v2640 = vmul.f32 %v2553, %v2624
        %v2641 = vmul.f32 %v2555, %v2625
        %v2642 = vmul.f32 %v2557, %v2626
        %v2643 = vmul.f32 %v2559, %v2627
        %v2644 = vmul.f32 %v2561, %v2628
        %v2645 = vmul.f32 %v2563, %v2629
        %v2646 = vmul.f32 %v2565, %v2630
        %v2647 = vmul.f32 %v2567, %v2631
        %v2648 = vrot.slane %v2634, 4
        %v2649 = vsel %vm1338, %v2648, %v2632
        %v2650 = vrot.slane %v2632, 4
        %v2651 = vsel %vm1338, %v2634, %v2650
        %v2653 = vunpack.c.l.s4 1983009808
        %v2654 = vunpack.c.0.s8 %v2653
        %v2655 = vperm.slane %v2649, %v2654
        %v2657 = vunpack.c.l.s4 1983009808
        %v2658 = vunpack.c.0.s8 %v2657
        %v2659 = vperm.slane %v2651, %v2658
        %v2660 = vrot.slane %v2635, 4
        %v2661 = vsel %vm1338, %v2660, %v2633
        %v2662 = vrot.slane %v2633, 4
        %v2663 = vsel %vm1338, %v2635, %v2662
        %v2665 = vunpack.c.l.s4 1983009808
        %v2666 = vunpack.c.0.s8 %v2665
        %v2667 = vperm.slane %v2661, %v2666
        %v2669 = vunpack.c.l.s4 1983009808
        %v2670 = vunpack.c.0.s8 %v2669
        %v2671 = vperm.slane %v2663, %v2670
        %v2672 = vrot.slane %v2638, 4
        %v2673 = vsel %vm1338, %v2672, %v2636
        %v2674 = vrot.slane %v2636, 4
        %v2675 = vsel %vm1338, %v2638, %v2674
        %v2677 = vunpack.c.l.s4 1983009808
        %v2678 = vunpack.c.0.s8 %v2677
        %v2679 = vperm.slane %v2673, %v2678
        %v2681 = vunpack.c.l.s4 1983009808
        %v2682 = vunpack.c.0.s8 %v2681
        %v2683 = vperm.slane %v2675, %v2682
        %v2684 = vrot.slane %v2639, 4
        %v2685 = vsel %vm1338, %v2684, %v2637
        %v2686 = vrot.slane %v2637, 4
        %v2687 = vsel %vm1338, %v2639, %v2686
        %v2689 = vunpack.c.l.s4 1983009808
        %v2690 = vunpack.c.0.s8 %v2689
        %v2691 = vperm.slane %v2685, %v2690
        %v2693 = vunpack.c.l.s4 1983009808
        %v2694 = vunpack.c.0.s8 %v2693
        %v2695 = vperm.slane %v2687, %v2694
        %v2696 = vrot.slane %v2667, 4
        %v2697 = vsel %vm1338, %v2696, %v2655
        %v2698 = vrot.slane %v2655, 4
        %v2699 = vsel %vm1338, %v2667, %v2698
        %v2701 = vunpack.c.l.s4 1934713408
        %v2702 = vunpack.c.0.s8 %v2701
        %v2703 = vperm.slane %v2697, %v2702
        %v2705 = vunpack.c.l.s4 1934713408
        %v2706 = vunpack.c.0.s8 %v2705
        %v2707 = vperm.slane %v2699, %v2706
        %v2708 = vrot.slane %v2671, 4
        %v2709 = vsel %vm1338, %v2708, %v2659
        %v2710 = vrot.slane %v2659, 4
        %v2711 = vsel %vm1338, %v2671, %v2710
        %v2713 = vunpack.c.l.s4 1934713408
        %v2714 = vunpack.c.0.s8 %v2713
        %v2715 = vperm.slane %v2709, %v2714
        %v2717 = vunpack.c.l.s4 1934713408
        %v2718 = vunpack.c.0.s8 %v2717
        %v2719 = vperm.slane %v2711, %v2718
        %v2720 = vrot.slane %v2691, 4
        %v2721 = vsel %vm1338, %v2720, %v2679
        %v2722 = vrot.slane %v2679, 4
        %v2723 = vsel %vm1338, %v2691, %v2722
        %v2725 = vunpack.c.l.s4 1934713408
        %v2726 = vunpack.c.0.s8 %v2725
        %v2727 = vperm.slane %v2721, %v2726
        %v2729 = vunpack.c.l.s4 1934713408
        %v2730 = vunpack.c.0.s8 %v2729
        %v2731 = vperm.slane %v2723, %v2730
        %v2732 = vrot.slane %v2695, 4
        %v2733 = vsel %vm1338, %v2732, %v2683
        %v2734 = vrot.slane %v2683, 4
        %v2735 = vsel %vm1338, %v2695, %v2734
        %v2737 = vunpack.c.l.s4 1934713408
        %v2738 = vunpack.c.0.s8 %v2737
        %v2739 = vperm.slane %v2733, %v2738
        %v2741 = vunpack.c.l.s4 1934713408
        %v2742 = vunpack.c.0.s8 %v2741
        %v2743 = vperm.slane %v2735, %v2742
        %v2744 = vrot.slane %v2727, 4
        %v2745 = vsel %vm1338, %v2744, %v2703
        %v2746 = vrot.slane %v2703, 4
        %v2747 = vsel %vm1338, %v2727, %v2746
        %v2748 = vrot.slane %v2731, 4
        %v2749 = vsel %vm1338, %v2748, %v2707
        %v2750 = vrot.slane %v2707, 4
        %v2751 = vsel %vm1338, %v2731, %v2750
        %v2752 = vrot.slane %v2739, 4
        %v2753 = vsel %vm1338, %v2752, %v2715
        %v2754 = vrot.slane %v2715, 4
        %v2755 = vsel %vm1338, %v2739, %v2754
        %v2756 = vrot.slane %v2743, 4
        %v2757 = vsel %vm1338, %v2756, %v2719
        %v2758 = vrot.slane %v2719, 4
        %v2759 = vsel %vm1338, %v2743, %v2758
        %v2760 = vrot.slane %v2642, 4
        %v2761 = vsel %vm1338, %v2760, %v2640
        %v2762 = vrot.slane %v2640, 4
        %v2763 = vsel %vm1338, %v2642, %v2762
        %v2765 = vunpack.c.l.s4 1983009808
        %v2766 = vunpack.c.0.s8 %v2765
        %v2767 = vperm.slane %v2761, %v2766
        %v2769 = vunpack.c.l.s4 1983009808
        %v2770 = vunpack.c.0.s8 %v2769
        %v2771 = vperm.slane %v2763, %v2770
        %v2772 = vrot.slane %v2643, 4
        %v2773 = vsel %vm1338, %v2772, %v2641
        %v2774 = vrot.slane %v2641, 4
        %v2775 = vsel %vm1338, %v2643, %v2774
        %v2777 = vunpack.c.l.s4 1983009808
        %v2778 = vunpack.c.0.s8 %v2777
        %v2779 = vperm.slane %v2773, %v2778
        %v2781 = vunpack.c.l.s4 1983009808
        %v2782 = vunpack.c.0.s8 %v2781
        %v2783 = vperm.slane %v2775, %v2782
        %v2784 = vrot.slane %v2646, 4
        %v2785 = vsel %vm1338, %v2784, %v2644
        %v2786 = vrot.slane %v2644, 4
        %v2787 = vsel %vm1338, %v2646, %v2786
        %v2789 = vunpack.c.l.s4 1983009808
        %v2790 = vunpack.c.0.s8 %v2789
        %v2791 = vperm.slane %v2785, %v2790
        %v2793 = vunpack.c.l.s4 1983009808
        %v2794 = vunpack.c.0.s8 %v2793
        %v2795 = vperm.slane %v2787, %v2794
        %v2796 = vrot.slane %v2647, 4
        %v2797 = vsel %vm1338, %v2796, %v2645
        %v2798 = vrot.slane %v2645, 4
        %v2799 = vsel %vm1338, %v2647, %v2798
        %v2801 = vunpack.c.l.s4 1983009808
        %v2802 = vunpack.c.0.s8 %v2801
        %v2803 = vperm.slane %v2797, %v2802
        %v2805 = vunpack.c.l.s4 1983009808
        %v2806 = vunpack.c.0.s8 %v2805
        %v2807 = vperm.slane %v2799, %v2806
        %v2808 = vrot.slane %v2779, 4
        %v2809 = vsel %vm1338, %v2808, %v2767
        %v2810 = vrot.slane %v2767, 4
        %v2811 = vsel %vm1338, %v2779, %v2810
        %v2813 = vunpack.c.l.s4 1934713408
        %v2814 = vunpack.c.0.s8 %v2813
        %v2815 = vperm.slane %v2809, %v2814
        %v2817 = vunpack.c.l.s4 1934713408
        %v2818 = vunpack.c.0.s8 %v2817
        %v2819 = vperm.slane %v2811, %v2818
        %v2820 = vrot.slane %v2783, 4
        %v2821 = vsel %vm1338, %v2820, %v2771
        %v2822 = vrot.slane %v2771, 4
        %v2823 = vsel %vm1338, %v2783, %v2822
        %v2825 = vunpack.c.l.s4 1934713408
        %v2826 = vunpack.c.0.s8 %v2825
        %v2827 = vperm.slane %v2821, %v2826
        %v2829 = vunpack.c.l.s4 1934713408
        %v2830 = vunpack.c.0.s8 %v2829
        %v2831 = vperm.slane %v2823, %v2830
        %v2832 = vrot.slane %v2803, 4
        %v2833 = vsel %vm1338, %v2832, %v2791
        %v2834 = vrot.slane %v2791, 4
        %v2835 = vsel %vm1338, %v2803, %v2834
        %v2837 = vunpack.c.l.s4 1934713408
        %v2838 = vunpack.c.0.s8 %v2837
        %v2839 = vperm.slane %v2833, %v2838
        %v2841 = vunpack.c.l.s4 1934713408
        %v2842 = vunpack.c.0.s8 %v2841
        %v2843 = vperm.slane %v2835, %v2842
        %v2844 = vrot.slane %v2807, 4
        %v2845 = vsel %vm1338, %v2844, %v2795
        %v2846 = vrot.slane %v2795, 4
        %v2847 = vsel %vm1338, %v2807, %v2846
        %v2849 = vunpack.c.l.s4 1934713408
        %v2850 = vunpack.c.0.s8 %v2849
        %v2851 = vperm.slane %v2845, %v2850
        %v2853 = vunpack.c.l.s4 1934713408
        %v2854 = vunpack.c.0.s8 %v2853
        %v2855 = vperm.slane %v2847, %v2854
        %v2856 = vrot.slane %v2839, 4
        %v2857 = vsel %vm1338, %v2856, %v2815
        %v2858 = vrot.slane %v2815, 4
        %v2859 = vsel %vm1338, %v2839, %v2858
        %v2860 = vrot.slane %v2843, 4
        %v2861 = vsel %vm1338, %v2860, %v2819
        %v2862 = vrot.slane %v2819, 4
        %v2863 = vsel %vm1338, %v2843, %v2862
        %v2864 = vrot.slane %v2851, 4
        %v2865 = vsel %vm1338, %v2864, %v2827
        %v2866 = vrot.slane %v2827, 4
        %v2867 = vsel %vm1338, %v2851, %v2866
        %v2868 = vrot.slane %v2855, 4
        %v2869 = vsel %vm1338, %v2868, %v2831
        %v2870 = vrot.slane %v2831, 4
        %v2871 = vsel %vm1338, %v2855, %v2870
        %2874 = vrot.lane.b32.xlu0 %v2747, 8
        %v2875 = vpop.permute.xlu0 %2874
        %2876 = vrot.lane.b32.xlu0 %v2859, 8
        %v2877 = vpop.permute.xlu0 %2876
        %2882 = vrot.lane.b32.xlu0 %v2749, 16
        %v2883 = vpop.permute.xlu0 %2882
        %2884 = vrot.lane.b32.xlu0 %v2861, 16
        %v2885 = vpop.permute.xlu0 %2884
        %2890 = vrot.lane.b32.xlu0 %v2751, 24
        %v2891 = vpop.permute.xlu0 %2890
        %2892 = vrot.lane.b32.xlu0 %v2863, 24
        %v2893 = vpop.permute.xlu0 %2892
        %2898 = vrot.lane.b32.xlu0 %v2753, 32
        %v2899 = vpop.permute.xlu0 %2898
        %2900 = vrot.lane.b32.xlu0 %v2865, 32
        %v2901 = vpop.permute.xlu0 %2900
        %2906 = vrot.lane.b32.xlu0 %v2755, 40
        %v2907 = vpop.permute.xlu0 %2906
        %2908 = vrot.lane.b32.xlu0 %v2867, 40
        %v2909 = vpop.permute.xlu0 %2908
        %2914 = vrot.lane.b32.xlu0 %v2757, 48
        %v2915 = vpop.permute.xlu0 %2914
        %2916 = vrot.lane.b32.xlu0 %v2869, 48
        %v2917 = vpop.permute.xlu0 %2916
        %2922 = vrot.lane.b32.xlu0 %v2759, 56
        %v2923 = vpop.permute.xlu0 %2922
        %2924 = vrot.lane.b32.xlu0 %v2871, 56
        %v2925 = vpop.permute.xlu0 %2924
        %v2928 = vsel %vm744, %v2745, %v2875
        %v2929 = vsel %vm744, %v2857, %v2877
        %v2930 = vsel %vm1620, %v2928, %v2883
        %v2931 = vsel %vm1620, %v2929, %v2885
        %v2932 = vsel %vm1623, %v2930, %v2891
        %v2933 = vsel %vm1623, %v2931, %v2893
        %v2934 = vsel %vm484, %v2932, %v2899
        %v2935 = vsel %vm484, %v2933, %v2901
        %v2936 = vsel %vm1628, %v2934, %v2907
        %v2937 = vsel %vm1628, %v2935, %v2909
        %v2938 = vsel %vm1631, %v2936, %v2915
        %v2939 = vsel %vm1631, %v2937, %v2917
        %v2940 = vsel %vm1634, %v2938, %v2923
        %v2941 = vsel %vm1634, %v2939, %v2925
        %s2942 = scalar_lea.vmem %s456, 16 [#allocation13]
        %2943 = vst.msk [vmem:[%s2942] sm:$0xff] %vm1637, %v2940
        %2944 = vst.msk [vmem:[%s2942 + $0x8] sm:$0xff] %vm1637, %v2941
        %2946 = vrot.lane.b32.xlu0 %v697, 120
        %v2947 = vpop.permute.xlu0 %2946
        %v2950 = vsel %vm744, %v2632, 0
        %2952 = vmatpush.msra.mxu0 0.0
        %2953 = vmatpush.msra.mxu0 0.0
        %2954 = vmatpush.msra.mxu0 0.0
        %2955 = vmatpush.msra.mxu0 0.0
        %2956 = vmatpush.msra.mxu0 0.0
        %2957 = vmatpush.msra.mxu0 0.0
        %2958 = vmatpush.msra.mxu0 0.0
        %2959 = vmatpush.msra.mxu0 0.0
        %2960 = vmatpush.msra.mxu0 0.0
        %2961 = vmatpush.msra.mxu0 0.0
        %2962 = vmatpush.msra.mxu0 0.0
        %2963 = vmatpush.msra.mxu0 0.0
        %2964 = vmatpush.msra.mxu0 0.0
        %2965 = vmatpush.msra.mxu0 0.0
        %2966 = vmatpush.msra.mxu0 0.0
        %2967 = vmatpush.msra.mxu0 %v2947
        %2968 = vmatmul.f32.gmra.mxu0 %v2950
        %v2969 = vpop.f32.mrf.mxu0
        %v2970 = vadd.f32 0.0, %v2969
        %2971 = vdwg.mxu0
        %2973 = vrot.lane.b32.xlu0 %v700, 120
        %v2974 = vpop.permute.xlu0 %2973
        %v2977 = vsel %vm744, %v2633, 0
        %2979 = vmatpush.msra.mxu0 0.0
        %2980 = vmatpush.msra.mxu0 0.0
        %2981 = vmatpush.msra.mxu0 0.0
        %2982 = vmatpush.msra.mxu0 0.0
        %2983 = vmatpush.msra.mxu0 0.0
        %2984 = vmatpush.msra.mxu0 0.0
        %2985 = vmatpush.msra.mxu0 0.0
        %2986 = vmatpush.msra.mxu0 0.0
        %2987 = vmatpush.msra.mxu0 0.0
        %2988 = vmatpush.msra.mxu0 0.0
        %2989 = vmatpush.msra.mxu0 0.0
        %2990 = vmatpush.msra.mxu0 0.0
        %2991 = vmatpush.msra.mxu0 0.0
        %2992 = vmatpush.msra.mxu0 0.0
        %2993 = vmatpush.msra.mxu0 0.0
        %2994 = vmatpush.msra.mxu0 %v2974
        %2995 = vmatmul.f32.gmra.mxu0 %v2977
        %v2996 = vpop.f32.mrf.mxu0
        %v2997 = vadd.f32 0.0, %v2996
        %2998 = vdwg.mxu0
        %3000 = vrot.lane.b32.xlu0 %v703, 120
        %v3001 = vpop.permute.xlu0 %3000
        %v3004 = vsel %vm744, %v2634, 0
        %3006 = vmatpush.msra.mxu0 0.0
        %3007 = vmatpush.msra.mxu0 0.0
        %3008 = vmatpush.msra.mxu0 0.0
        %3009 = vmatpush.msra.mxu0 0.0
        %3010 = vmatpush.msra.mxu0 0.0
        %3011 = vmatpush.msra.mxu0 0.0
        %3012 = vmatpush.msra.mxu0 0.0
        %3013 = vmatpush.msra.mxu0 0.0
        %3014 = vmatpush.msra.mxu0 0.0
        %3015 = vmatpush.msra.mxu0 0.0
        %3016 = vmatpush.msra.mxu0 0.0
        %3017 = vmatpush.msra.mxu0 0.0
        %3018 = vmatpush.msra.mxu0 0.0
        %3019 = vmatpush.msra.mxu0 0.0
        %3020 = vmatpush.msra.mxu0 0.0
        %3021 = vmatpush.msra.mxu0 %v3001
        %3022 = vmatmul.f32.gmra.mxu0 %v3004
        %v3023 = vpop.f32.mrf.mxu0
        %v3024 = vadd.f32 0.0, %v3023
        %3025 = vdwg.mxu0
        %3027 = vrot.lane.b32.xlu0 %v706, 120
        %v3028 = vpop.permute.xlu0 %3027
        %v3031 = vsel %vm744, %v2635, 0
        %3033 = vmatpush.msra.mxu0 0.0
        %3034 = vmatpush.msra.mxu0 0.0
        %3035 = vmatpush.msra.mxu0 0.0
        %3036 = vmatpush.msra.mxu0 0.0
        %3037 = vmatpush.msra.mxu0 0.0
        %3038 = vmatpush.msra.mxu0 0.0
        %3039 = vmatpush.msra.mxu0 0.0
        %3040 = vmatpush.msra.mxu0 0.0
        %3041 = vmatpush.msra.mxu0 0.0
        %3042 = vmatpush.msra.mxu0 0.0
        %3043 = vmatpush.msra.mxu0 0.0
        %3044 = vmatpush.msra.mxu0 0.0
        %3045 = vmatpush.msra.mxu0 0.0
        %3046 = vmatpush.msra.mxu0 0.0
        %3047 = vmatpush.msra.mxu0 0.0
        %3048 = vmatpush.msra.mxu0 %v3028
        %3049 = vmatmul.f32.gmra.mxu0 %v3031
        %v3050 = vpop.f32.mrf.mxu0
        %v3051 = vadd.f32 0.0, %v3050
        %3052 = vdwg.mxu0
        %3054 = vrot.lane.b32.xlu0 %v709, 120
        %v3055 = vpop.permute.xlu0 %3054
        %v3058 = vsel %vm744, %v2636, 0
        %3060 = vmatpush.msra.mxu0 0.0
        %3061 = vmatpush.msra.mxu0 0.0
        %3062 = vmatpush.msra.mxu0 0.0
        %3063 = vmatpush.msra.mxu0 0.0
        %3064 = vmatpush.msra.mxu0 0.0
        %3065 = vmatpush.msra.mxu0 0.0
        %3066 = vmatpush.msra.mxu0 0.0
        %3067 = vmatpush.msra.mxu0 0.0
        %3068 = vmatpush.msra.mxu0 0.0
        %3069 = vmatpush.msra.mxu0 0.0
        %3070 = vmatpush.msra.mxu0 0.0
        %3071 = vmatpush.msra.mxu0 0.0
        %3072 = vmatpush.msra.mxu0 0.0
        %3073 = vmatpush.msra.mxu0 0.0
        %3074 = vmatpush.msra.mxu0 0.0
        %3075 = vmatpush.msra.mxu0 %v3055
        %3076 = vmatmul.f32.gmra.mxu0 %v3058
        %v3077 = vpop.f32.mrf.mxu0
        %v3078 = vadd.f32 0.0, %v3077
        %3079 = vdwg.mxu0
        %3081 = vrot.lane.b32.xlu0 %v712, 120
        %v3082 = vpop.permute.xlu0 %3081
        %v3085 = vsel %vm744, %v2637, 0
        %3087 = vmatpush.msra.mxu0 0.0
        %3088 = vmatpush.msra.mxu0 0.0
        %3089 = vmatpush.msra.mxu0 0.0
        %3090 = vmatpush.msra.mxu0 0.0
        %3091 = vmatpush.msra.mxu0 0.0
        %3092 = vmatpush.msra.mxu0 0.0
        %3093 = vmatpush.msra.mxu0 0.0
        %3094 = vmatpush.msra.mxu0 0.0
        %3095 = vmatpush.msra.mxu0 0.0
        %3096 = vmatpush.msra.mxu0 0.0
        %3097 = vmatpush.msra.mxu0 0.0
        %3098 = vmatpush.msra.mxu0 0.0
        %3099 = vmatpush.msra.mxu0 0.0
        %3100 = vmatpush.msra.mxu0 0.0
        %3101 = vmatpush.msra.mxu0 0.0
        %3102 = vmatpush.msra.mxu0 %v3082
        %3103 = vmatmul.f32.gmra.mxu0 %v3085
        %v3104 = vpop.f32.mrf.mxu0
        %v3105 = vadd.f32 0.0, %v3104
        %3106 = vdwg.mxu0
        %3108 = vrot.lane.b32.xlu0 %v715, 120
        %v3109 = vpop.permute.xlu0 %3108
        %v3112 = vsel %vm744, %v2638, 0
        %3114 = vmatpush.msra.mxu0 0.0
        %3115 = vmatpush.msra.mxu0 0.0
        %3116 = vmatpush.msra.mxu0 0.0
        %3117 = vmatpush.msra.mxu0 0.0
        %3118 = vmatpush.msra.mxu0 0.0
        %3119 = vmatpush.msra.mxu0 0.0
        %3120 = vmatpush.msra.mxu0 0.0
        %3121 = vmatpush.msra.mxu0 0.0
        %3122 = vmatpush.msra.mxu0 0.0
        %3123 = vmatpush.msra.mxu0 0.0
        %3124 = vmatpush.msra.mxu0 0.0
        %3125 = vmatpush.msra.mxu0 0.0
        %3126 = vmatpush.msra.mxu0 0.0
        %3127 = vmatpush.msra.mxu0 0.0
        %3128 = vmatpush.msra.mxu0 0.0
        %3129 = vmatpush.msra.mxu0 %v3109
        %3130 = vmatmul.f32.gmra.mxu0 %v3112
        %v3131 = vpop.f32.mrf.mxu0
        %v3132 = vadd.f32 0.0, %v3131
        %3133 = vdwg.mxu0
        %3135 = vrot.lane.b32.xlu0 %v718, 120
        %v3136 = vpop.permute.xlu0 %3135
        %v3139 = vsel %vm744, %v2639, 0
        %3141 = vmatpush.msra.mxu0 0.0
        %3142 = vmatpush.msra.mxu0 0.0
        %3143 = vmatpush.msra.mxu0 0.0
        %3144 = vmatpush.msra.mxu0 0.0
        %3145 = vmatpush.msra.mxu0 0.0
        %3146 = vmatpush.msra.mxu0 0.0
        %3147 = vmatpush.msra.mxu0 0.0
        %3148 = vmatpush.msra.mxu0 0.0
        %3149 = vmatpush.msra.mxu0 0.0
        %3150 = vmatpush.msra.mxu0 0.0
        %3151 = vmatpush.msra.mxu0 0.0
        %3152 = vmatpush.msra.mxu0 0.0
        %3153 = vmatpush.msra.mxu0 0.0
        %3154 = vmatpush.msra.mxu0 0.0
        %3155 = vmatpush.msra.mxu0 0.0
        %3156 = vmatpush.msra.mxu0 %v3136
        %3157 = vmatmul.f32.gmra.mxu0 %v3139
        %v3158 = vpop.f32.mrf.mxu0
        %v3159 = vadd.f32 0.0, %v3158
        %3160 = vdwg.mxu0
        %3162 = vrot.lane.b32.xlu0 %v721, 120
        %v3163 = vpop.permute.xlu0 %3162
        %v3166 = vsel %vm744, %v2640, 0
        %3168 = vmatpush.msra.mxu0 0.0
        %3169 = vmatpush.msra.mxu0 0.0
        %3170 = vmatpush.msra.mxu0 0.0
        %3171 = vmatpush.msra.mxu0 0.0
        %3172 = vmatpush.msra.mxu0 0.0
        %3173 = vmatpush.msra.mxu0 0.0
        %3174 = vmatpush.msra.mxu0 0.0
        %3175 = vmatpush.msra.mxu0 0.0
        %3176 = vmatpush.msra.mxu0 0.0
        %3177 = vmatpush.msra.mxu0 0.0
        %3178 = vmatpush.msra.mxu0 0.0
        %3179 = vmatpush.msra.mxu0 0.0
        %3180 = vmatpush.msra.mxu0 0.0
        %3181 = vmatpush.msra.mxu0 0.0
        %3182 = vmatpush.msra.mxu0 0.0
        %3183 = vmatpush.msra.mxu0 %v3163
        %3184 = vmatmul.f32.gmra.mxu0 %v3166
        %v3185 = vpop.f32.mrf.mxu0
        %v3186 = vadd.f32 0.0, %v3185
        %3187 = vdwg.mxu0
        %3189 = vrot.lane.b32.xlu0 %v724, 120
        %v3190 = vpop.permute.xlu0 %3189
        %v3193 = vsel %vm744, %v2641, 0
        %3195 = vmatpush.msra.mxu0 0.0
        %3196 = vmatpush.msra.mxu0 0.0
        %3197 = vmatpush.msra.mxu0 0.0
        %3198 = vmatpush.msra.mxu0 0.0
        %3199 = vmatpush.msra.mxu0 0.0
        %3200 = vmatpush.msra.mxu0 0.0
        %3201 = vmatpush.msra.mxu0 0.0
        %3202 = vmatpush.msra.mxu0 0.0
        %3203 = vmatpush.msra.mxu0 0.0
        %3204 = vmatpush.msra.mxu0 0.0
        %3205 = vmatpush.msra.mxu0 0.0
        %3206 = vmatpush.msra.mxu0 0.0
        %3207 = vmatpush.msra.mxu0 0.0
        %3208 = vmatpush.msra.mxu0 0.0
        %3209 = vmatpush.msra.mxu0 0.0
        %3210 = vmatpush.msra.mxu0 %v3190
        %3211 = vmatmul.f32.gmra.mxu0 %v3193
        %v3212 = vpop.f32.mrf.mxu0
        %v3213 = vadd.f32 0.0, %v3212
        %3214 = vdwg.mxu0
        %3216 = vrot.lane.b32.xlu0 %v727, 120
        %v3217 = vpop.permute.xlu0 %3216
        %v3220 = vsel %vm744, %v2642, 0
        %3222 = vmatpush.msra.mxu0 0.0
        %3223 = vmatpush.msra.mxu0 0.0
        %3224 = vmatpush.msra.mxu0 0.0
        %3225 = vmatpush.msra.mxu0 0.0
        %3226 = vmatpush.msra.mxu0 0.0
        %3227 = vmatpush.msra.mxu0 0.0
        %3228 = vmatpush.msra.mxu0 0.0
        %3229 = vmatpush.msra.mxu0 0.0
        %3230 = vmatpush.msra.mxu0 0.0
        %3231 = vmatpush.msra.mxu0 0.0
        %3232 = vmatpush.msra.mxu0 0.0
        %3233 = vmatpush.msra.mxu0 0.0
        %3234 = vmatpush.msra.mxu0 0.0
        %3235 = vmatpush.msra.mxu0 0.0
        %3236 = vmatpush.msra.mxu0 0.0
        %3237 = vmatpush.msra.mxu0 %v3217
        %3238 = vmatmul.f32.gmra.mxu0 %v3220
        %v3239 = vpop.f32.mrf.mxu0
        %v3240 = vadd.f32 0.0, %v3239
        %3241 = vdwg.mxu0
        %3243 = vrot.lane.b32.xlu0 %v730, 120
        %v3244 = vpop.permute.xlu0 %3243
        %v3247 = vsel %vm744, %v2643, 0
        %3249 = vmatpush.msra.mxu0 0.0
        %3250 = vmatpush.msra.mxu0 0.0
        %3251 = vmatpush.msra.mxu0 0.0
        %3252 = vmatpush.msra.mxu0 0.0
        %3253 = vmatpush.msra.mxu0 0.0
        %3254 = vmatpush.msra.mxu0 0.0
        %3255 = vmatpush.msra.mxu0 0.0
        %3256 = vmatpush.msra.mxu0 0.0
        %3257 = vmatpush.msra.mxu0 0.0
        %3258 = vmatpush.msra.mxu0 0.0
        %3259 = vmatpush.msra.mxu0 0.0
        %3260 = vmatpush.msra.mxu0 0.0
        %3261 = vmatpush.msra.mxu0 0.0
        %3262 = vmatpush.msra.mxu0 0.0
        %3263 = vmatpush.msra.mxu0 0.0
        %3264 = vmatpush.msra.mxu0 %v3244
        %3265 = vmatmul.f32.gmra.mxu0 %v3247
        %v3266 = vpop.f32.mrf.mxu0
        %v3267 = vadd.f32 0.0, %v3266
        %3268 = vdwg.mxu0
        %3270 = vrot.lane.b32.xlu0 %v733, 120
        %v3271 = vpop.permute.xlu0 %3270
        %v3274 = vsel %vm744, %v2644, 0
        %3276 = vmatpush.msra.mxu0 0.0
        %3277 = vmatpush.msra.mxu0 0.0
        %3278 = vmatpush.msra.mxu0 0.0
        %3279 = vmatpush.msra.mxu0 0.0
        %3280 = vmatpush.msra.mxu0 0.0
        %3281 = vmatpush.msra.mxu0 0.0
        %3282 = vmatpush.msra.mxu0 0.0
        %3283 = vmatpush.msra.mxu0 0.0
        %3284 = vmatpush.msra.mxu0 0.0
        %3285 = vmatpush.msra.mxu0 0.0
        %3286 = vmatpush.msra.mxu0 0.0
        %3287 = vmatpush.msra.mxu0 0.0
        %3288 = vmatpush.msra.mxu0 0.0
        %3289 = vmatpush.msra.mxu0 0.0
        %3290 = vmatpush.msra.mxu0 0.0
        %3291 = vmatpush.msra.mxu0 %v3271
        %3292 = vmatmul.f32.gmra.mxu0 %v3274
        %v3293 = vpop.f32.mrf.mxu0
        %v3294 = vadd.f32 0.0, %v3293
        %3295 = vdwg.mxu0
        %3297 = vrot.lane.b32.xlu0 %v736, 120
        %v3298 = vpop.permute.xlu0 %3297
        %v3301 = vsel %vm744, %v2645, 0
        %3303 = vmatpush.msra.mxu0 0.0
        %3304 = vmatpush.msra.mxu0 0.0
        %3305 = vmatpush.msra.mxu0 0.0
        %3306 = vmatpush.msra.mxu0 0.0
        %3307 = vmatpush.msra.mxu0 0.0
        %3308 = vmatpush.msra.mxu0 0.0
        %3309 = vmatpush.msra.mxu0 0.0
        %3310 = vmatpush.msra.mxu0 0.0
        %3311 = vmatpush.msra.mxu0 0.0
        %3312 = vmatpush.msra.mxu0 0.0
        %3313 = vmatpush.msra.mxu0 0.0
        %3314 = vmatpush.msra.mxu0 0.0
        %3315 = vmatpush.msra.mxu0 0.0
        %3316 = vmatpush.msra.mxu0 0.0
        %3317 = vmatpush.msra.mxu0 0.0
        %3318 = vmatpush.msra.mxu0 %v3298
        %3319 = vmatmul.f32.gmra.mxu0 %v3301
        %v3320 = vpop.f32.mrf.mxu0
        %v3321 = vadd.f32 0.0, %v3320
        %3322 = vdwg.mxu0
        %3324 = vrot.lane.b32.xlu0 %v739, 120
        %v3325 = vpop.permute.xlu0 %3324
        %v3328 = vsel %vm744, %v2646, 0
        %3330 = vmatpush.msra.mxu0 0.0
        %3331 = vmatpush.msra.mxu0 0.0
        %3332 = vmatpush.msra.mxu0 0.0
        %3333 = vmatpush.msra.mxu0 0.0
        %3334 = vmatpush.msra.mxu0 0.0
        %3335 = vmatpush.msra.mxu0 0.0
        %3336 = vmatpush.msra.mxu0 0.0
        %3337 = vmatpush.msra.mxu0 0.0
        %3338 = vmatpush.msra.mxu0 0.0
        %3339 = vmatpush.msra.mxu0 0.0
        %3340 = vmatpush.msra.mxu0 0.0
        %3341 = vmatpush.msra.mxu0 0.0
        %3342 = vmatpush.msra.mxu0 0.0
        %3343 = vmatpush.msra.mxu0 0.0
        %3344 = vmatpush.msra.mxu0 0.0
        %3345 = vmatpush.msra.mxu0 %v3325
        %3346 = vmatmul.f32.gmra.mxu0 %v3328
        %v3347 = vpop.f32.mrf.mxu0
        %v3348 = vadd.f32 0.0, %v3347
        %3349 = vdwg.mxu0
        %3351 = vrot.lane.b32.xlu0 %v742, 120
        %v3352 = vpop.permute.xlu0 %3351
        %v3355 = vsel %vm744, %v2647, 0
        %3357 = vmatpush.msra.mxu0 0.0
        %3358 = vmatpush.msra.mxu0 0.0
        %3359 = vmatpush.msra.mxu0 0.0
        %3360 = vmatpush.msra.mxu0 0.0
        %3361 = vmatpush.msra.mxu0 0.0
        %3362 = vmatpush.msra.mxu0 0.0
        %3363 = vmatpush.msra.mxu0 0.0
        %3364 = vmatpush.msra.mxu0 0.0
        %3365 = vmatpush.msra.mxu0 0.0
        %3366 = vmatpush.msra.mxu0 0.0
        %3367 = vmatpush.msra.mxu0 0.0
        %3368 = vmatpush.msra.mxu0 0.0
        %3369 = vmatpush.msra.mxu0 0.0
        %3370 = vmatpush.msra.mxu0 0.0
        %3371 = vmatpush.msra.mxu0 0.0
        %3372 = vmatpush.msra.mxu0 %v3352
        %3373 = vmatmul.f32.gmra.mxu0 %v3355
        %v3374 = vpop.f32.mrf.mxu0
        %v3375 = vadd.f32 0.0, %v3374
        %3376 = vdwg.mxu0
        %3393 = vrot.lane.b32.xlu0 %v2970, 8
        %v3394 = vpop.permute.xlu0 %3393
        %3395 = vrot.lane.b32.xlu0 %v2997, 8
        %v3396 = vpop.permute.xlu0 %3395
        %3397 = vrot.lane.b32.xlu0 %v3024, 8
        %v3398 = vpop.permute.xlu0 %3397
        %3399 = vrot.lane.b32.xlu0 %v3051, 8
        %v3400 = vpop.permute.xlu0 %3399
        %3401 = vrot.lane.b32.xlu0 %v3078, 8
        %v3402 = vpop.permute.xlu0 %3401
        %3403 = vrot.lane.b32.xlu0 %v3105, 8
        %v3404 = vpop.permute.xlu0 %3403
        %3405 = vrot.lane.b32.xlu0 %v3132, 8
        %v3406 = vpop.permute.xlu0 %3405
        %3407 = vrot.lane.b32.xlu0 %v3159, 8
        %v3408 = vpop.permute.xlu0 %3407
        %3409 = vrot.lane.b32.xlu0 %v3186, 8
        %v3410 = vpop.permute.xlu0 %3409
        %3411 = vrot.lane.b32.xlu0 %v3213, 8
        %v3412 = vpop.permute.xlu0 %3411
        %3413 = vrot.lane.b32.xlu0 %v3240, 8
        %v3414 = vpop.permute.xlu0 %3413
        %3415 = vrot.lane.b32.xlu0 %v3267, 8
        %v3416 = vpop.permute.xlu0 %3415
        %3417 = vrot.lane.b32.xlu0 %v3294, 8
        %v3418 = vpop.permute.xlu0 %3417
        %3419 = vrot.lane.b32.xlu0 %v3321, 8
        %v3420 = vpop.permute.xlu0 %3419
        %3421 = vrot.lane.b32.xlu0 %v3348, 8
        %v3422 = vpop.permute.xlu0 %3421
        %3423 = vrot.lane.b32.xlu0 %v3375, 8
        %v3424 = vpop.permute.xlu0 %3423
        %vm3441 = vcmask 130112
        %3442 = vst.msk [vmem:[#allocation2] sm:$0xff] %vm3441, %v3394
        %3443 = vst.msk [vmem:[#allocation2 + $0x8] sm:$0xff] %vm3441, %v3396
        %3444 = vst.msk [vmem:[#allocation2 + $0x10] sm:$0xff] %vm3441, %v3398
        %3445 = vst.msk [vmem:[#allocation2 + $0x18] sm:$0xff] %vm3441, %v3400
        %3446 = vst.msk [vmem:[#allocation2 + $0x20] sm:$0xff] %vm3441, %v3402
        %3447 = vst.msk [vmem:[#allocation2 + $0x28] sm:$0xff] %vm3441, %v3404
        %3448 = vst.msk [vmem:[#allocation2 + $0x30] sm:$0xff] %vm3441, %v3406
        %3449 = vst.msk [vmem:[#allocation2 + $0x38] sm:$0xff] %vm3441, %v3408
        %3450 = vst.msk [vmem:[#allocation2 + $0x40] sm:$0xff] %vm3441, %v3410
        %3451 = vst.msk [vmem:[#allocation2 + $0x48] sm:$0xff] %vm3441, %v3412
        %3452 = vst.msk [vmem:[#allocation2 + $0x50] sm:$0xff] %vm3441, %v3414
        %3453 = vst.msk [vmem:[#allocation2 + $0x58] sm:$0xff] %vm3441, %v3416
        %3454 = vst.msk [vmem:[#allocation2 + $0x60] sm:$0xff] %vm3441, %v3418
        %3455 = vst.msk [vmem:[#allocation2 + $0x68] sm:$0xff] %vm3441, %v3420
        %3456 = vst.msk [vmem:[#allocation2 + $0x70] sm:$0xff] %vm3441, %v3422
        %3457 = vst.msk [vmem:[#allocation2 + $0x78] sm:$0xff] %vm3441, %v3424
        %3458 = vrot.lane.b32.xlu0 %v551, 112
        %v3459 = vpop.permute.xlu0 %3458
        %3460 = vrot.lane.b32.xlu0 %v624, 112
        %v3461 = vpop.permute.xlu0 %3460
        %v3462 = vsel %vm744, %v3459, 0
        %v3464 = vsel %vm744, %v3461, 0
        %3466 = vmatpush.xpose.msra.mxu0 0.0
        %3467 = vmatpush.xpose.msra.mxu0 0.0
        %3468 = vmatpush.xpose.msra.mxu0 0.0
        %3469 = vmatpush.xpose.msra.mxu0 0.0
        %3470 = vmatpush.xpose.msra.mxu0 0.0
        %3471 = vmatpush.xpose.msra.mxu0 0.0
        %3472 = vmatpush.xpose.msra.mxu0 0.0
        %3473 = vmatpush.xpose.msra.mxu0 0.0
        %3474 = vmatpush.xpose.msra.mxu0 0.0
        %3475 = vmatpush.xpose.msra.mxu0 0.0
        %3476 = vmatpush.xpose.msra.mxu0 0.0
        %3477 = vmatpush.xpose.msra.mxu0 0.0
        %3478 = vmatpush.xpose.msra.mxu0 0.0
        %3479 = vmatpush.xpose.msra.mxu0 0.0
        %3480 = vmatpush.xpose.msra.mxu0 0.0
        %3481 = vmatpush.xpose.msra.mxu0 %v3464
        %3482 = vmatmul.f32.gmra.mxu0 %v3462
        %v3483 = vpop.f32.mrf.mxu0
        %v3484 = vadd.f32 0.0, %v3483
        %3485 = vdwg.mxu0
        %3486 = vrot.lane.b32.xlu0 %v554, 112
        %v3487 = vpop.permute.xlu0 %3486
        %3488 = vrot.lane.b32.xlu0 %v627, 112
        %v3489 = vpop.permute.xlu0 %3488
        %v3490 = vsel %vm744, %v3487, 0
        %v3492 = vsel %vm744, %v3489, 0
        %3494 = vmatpush.xpose.msra.mxu0 0.0
        %3495 = vmatpush.xpose.msra.mxu0 0.0
        %3496 = vmatpush.xpose.msra.mxu0 0.0
        %3497 = vmatpush.xpose.msra.mxu0 0.0
        %3498 = vmatpush.xpose.msra.mxu0 0.0
        %3499 = vmatpush.xpose.msra.mxu0 0.0
        %3500 = vmatpush.xpose.msra.mxu0 0.0
        %3501 = vmatpush.xpose.msra.mxu0 0.0
        %3502 = vmatpush.xpose.msra.mxu0 0.0
        %3503 = vmatpush.xpose.msra.mxu0 0.0
        %3504 = vmatpush.xpose.msra.mxu0 0.0
        %3505 = vmatpush.xpose.msra.mxu0 0.0
        %3506 = vmatpush.xpose.msra.mxu0 0.0
        %3507 = vmatpush.xpose.msra.mxu0 0.0
        %3508 = vmatpush.xpose.msra.mxu0 0.0
        %3509 = vmatpush.xpose.msra.mxu0 %v3492
        %3510 = vmatmul.f32.gmra.mxu0 %v3490
        %v3511 = vpop.f32.mrf.mxu0
        %v3512 = vadd.f32 0.0, %v3511
        %3513 = vdwg.mxu0
        %3514 = vrot.lane.b32.xlu0 %v557, 112
        %v3515 = vpop.permute.xlu0 %3514
        %3516 = vrot.lane.b32.xlu0 %v630, 112
        %v3517 = vpop.permute.xlu0 %3516
        %v3518 = vsel %vm744, %v3515, 0
        %v3520 = vsel %vm744, %v3517, 0
        %3522 = vmatpush.xpose.msra.mxu0 0.0
        %3523 = vmatpush.xpose.msra.mxu0 0.0
        %3524 = vmatpush.xpose.msra.mxu0 0.0
        %3525 = vmatpush.xpose.msra.mxu0 0.0
        %3526 = vmatpush.xpose.msra.mxu0 0.0
        %3527 = vmatpush.xpose.msra.mxu0 0.0
        %3528 = vmatpush.xpose.msra.mxu0 0.0
        %3529 = vmatpush.xpose.msra.mxu0 0.0
        %3530 = vmatpush.xpose.msra.mxu0 0.0
        %3531 = vmatpush.xpose.msra.mxu0 0.0
        %3532 = vmatpush.xpose.msra.mxu0 0.0
        %3533 = vmatpush.xpose.msra.mxu0 0.0
        %3534 = vmatpush.xpose.msra.mxu0 0.0
        %3535 = vmatpush.xpose.msra.mxu0 0.0
        %3536 = vmatpush.xpose.msra.mxu0 0.0
        %3537 = vmatpush.xpose.msra.mxu0 %v3520
        %3538 = vmatmul.f32.gmra.mxu0 %v3518
        %v3539 = vpop.f32.mrf.mxu0
        %v3540 = vadd.f32 0.0, %v3539
        %3541 = vdwg.mxu0
        %3542 = vrot.lane.b32.xlu0 %v560, 112
        %v3543 = vpop.permute.xlu0 %3542
        %3544 = vrot.lane.b32.xlu0 %v633, 112
        %v3545 = vpop.permute.xlu0 %3544
        %v3546 = vsel %vm744, %v3543, 0
        %v3548 = vsel %vm744, %v3545, 0
        %3550 = vmatpush.xpose.msra.mxu0 0.0
        %3551 = vmatpush.xpose.msra.mxu0 0.0
        %3552 = vmatpush.xpose.msra.mxu0 0.0
        %3553 = vmatpush.xpose.msra.mxu0 0.0
        %3554 = vmatpush.xpose.msra.mxu0 0.0
        %3555 = vmatpush.xpose.msra.mxu0 0.0
        %3556 = vmatpush.xpose.msra.mxu0 0.0
        %3557 = vmatpush.xpose.msra.mxu0 0.0
        %3558 = vmatpush.xpose.msra.mxu0 0.0
        %3559 = vmatpush.xpose.msra.mxu0 0.0
        %3560 = vmatpush.xpose.msra.mxu0 0.0
        %3561 = vmatpush.xpose.msra.mxu0 0.0
        %3562 = vmatpush.xpose.msra.mxu0 0.0
        %3563 = vmatpush.xpose.msra.mxu0 0.0
        %3564 = vmatpush.xpose.msra.mxu0 0.0
        %3565 = vmatpush.xpose.msra.mxu0 %v3548
        %3566 = vmatmul.f32.gmra.mxu0 %v3546
        %v3567 = vpop.f32.mrf.mxu0
        %v3568 = vadd.f32 0.0, %v3567
        %3569 = vdwg.mxu0
        %3570 = vrot.lane.b32.xlu0 %v563, 112
        %v3571 = vpop.permute.xlu0 %3570
        %3572 = vrot.lane.b32.xlu0 %v636, 112
        %v3573 = vpop.permute.xlu0 %3572
        %v3574 = vsel %vm744, %v3571, 0
        %v3576 = vsel %vm744, %v3573, 0
        %3578 = vmatpush.xpose.msra.mxu0 0.0
        %3579 = vmatpush.xpose.msra.mxu0 0.0
        %3580 = vmatpush.xpose.msra.mxu0 0.0
        %3581 = vmatpush.xpose.msra.mxu0 0.0
        %3582 = vmatpush.xpose.msra.mxu0 0.0
        %3583 = vmatpush.xpose.msra.mxu0 0.0
        %3584 = vmatpush.xpose.msra.mxu0 0.0
        %3585 = vmatpush.xpose.msra.mxu0 0.0
        %3586 = vmatpush.xpose.msra.mxu0 0.0
        %3587 = vmatpush.xpose.msra.mxu0 0.0
        %3588 = vmatpush.xpose.msra.mxu0 0.0
        %3589 = vmatpush.xpose.msra.mxu0 0.0
        %3590 = vmatpush.xpose.msra.mxu0 0.0
        %3591 = vmatpush.xpose.msra.mxu0 0.0
        %3592 = vmatpush.xpose.msra.mxu0 0.0
        %3593 = vmatpush.xpose.msra.mxu0 %v3576
        %3594 = vmatmul.f32.gmra.mxu0 %v3574
        %v3595 = vpop.f32.mrf.mxu0
        %v3596 = vadd.f32 0.0, %v3595
        %3597 = vdwg.mxu0
        %3598 = vrot.lane.b32.xlu0 %v566, 112
        %v3599 = vpop.permute.xlu0 %3598
        %3600 = vrot.lane.b32.xlu0 %v639, 112
        %v3601 = vpop.permute.xlu0 %3600
        %v3602 = vsel %vm744, %v3599, 0
        %v3604 = vsel %vm744, %v3601, 0
        %3606 = vmatpush.xpose.msra.mxu0 0.0
        %3607 = vmatpush.xpose.msra.mxu0 0.0
        %3608 = vmatpush.xpose.msra.mxu0 0.0
        %3609 = vmatpush.xpose.msra.mxu0 0.0
        %3610 = vmatpush.xpose.msra.mxu0 0.0
        %3611 = vmatpush.xpose.msra.mxu0 0.0
        %3612 = vmatpush.xpose.msra.mxu0 0.0
        %3613 = vmatpush.xpose.msra.mxu0 0.0
        %3614 = vmatpush.xpose.msra.mxu0 0.0
        %3615 = vmatpush.xpose.msra.mxu0 0.0
        %3616 = vmatpush.xpose.msra.mxu0 0.0
        %3617 = vmatpush.xpose.msra.mxu0 0.0
        %3618 = vmatpush.xpose.msra.mxu0 0.0
        %3619 = vmatpush.xpose.msra.mxu0 0.0
        %3620 = vmatpush.xpose.msra.mxu0 0.0
        %3621 = vmatpush.xpose.msra.mxu0 %v3604
        %3622 = vmatmul.f32.gmra.mxu0 %v3602
        %v3623 = vpop.f32.mrf.mxu0
        %v3624 = vadd.f32 0.0, %v3623
        %3625 = vdwg.mxu0
        %3626 = vrot.lane.b32.xlu0 %v569, 112
        %v3627 = vpop.permute.xlu0 %3626
        %3628 = vrot.lane.b32.xlu0 %v642, 112
        %v3629 = vpop.permute.xlu0 %3628
        %v3630 = vsel %vm744, %v3627, 0
        %v3632 = vsel %vm744, %v3629, 0
        %3634 = vmatpush.xpose.msra.mxu0 0.0
        %3635 = vmatpush.xpose.msra.mxu0 0.0
        %3636 = vmatpush.xpose.msra.mxu0 0.0
        %3637 = vmatpush.xpose.msra.mxu0 0.0
        %3638 = vmatpush.xpose.msra.mxu0 0.0
        %3639 = vmatpush.xpose.msra.mxu0 0.0
        %3640 = vmatpush.xpose.msra.mxu0 0.0
        %3641 = vmatpush.xpose.msra.mxu0 0.0
        %3642 = vmatpush.xpose.msra.mxu0 0.0
        %3643 = vmatpush.xpose.msra.mxu0 0.0
        %3644 = vmatpush.xpose.msra.mxu0 0.0
        %3645 = vmatpush.xpose.msra.mxu0 0.0
        %3646 = vmatpush.xpose.msra.mxu0 0.0
        %3647 = vmatpush.xpose.msra.mxu0 0.0
        %3648 = vmatpush.xpose.msra.mxu0 0.0
        %3649 = vmatpush.xpose.msra.mxu0 %v3632
        %3650 = vmatmul.f32.gmra.mxu0 %v3630
        %v3651 = vpop.f32.mrf.mxu0
        %v3652 = vadd.f32 0.0, %v3651
        %3653 = vdwg.mxu0
        %3654 = vrot.lane.b32.xlu0 %v572, 112
        %v3655 = vpop.permute.xlu0 %3654
        %3656 = vrot.lane.b32.xlu0 %v645, 112
        %v3657 = vpop.permute.xlu0 %3656
        %v3658 = vsel %vm744, %v3655, 0
        %v3660 = vsel %vm744, %v3657, 0
        %3662 = vmatpush.xpose.msra.mxu0 0.0
        %3663 = vmatpush.xpose.msra.mxu0 0.0
        %3664 = vmatpush.xpose.msra.mxu0 0.0
        %3665 = vmatpush.xpose.msra.mxu0 0.0
        %3666 = vmatpush.xpose.msra.mxu0 0.0
        %3667 = vmatpush.xpose.msra.mxu0 0.0
        %3668 = vmatpush.xpose.msra.mxu0 0.0
        %3669 = vmatpush.xpose.msra.mxu0 0.0
        %3670 = vmatpush.xpose.msra.mxu0 0.0
        %3671 = vmatpush.xpose.msra.mxu0 0.0
        %3672 = vmatpush.xpose.msra.mxu0 0.0
        %3673 = vmatpush.xpose.msra.mxu0 0.0
        %3674 = vmatpush.xpose.msra.mxu0 0.0
        %3675 = vmatpush.xpose.msra.mxu0 0.0
        %3676 = vmatpush.xpose.msra.mxu0 0.0
        %3677 = vmatpush.xpose.msra.mxu0 %v3660
        %3678 = vmatmul.f32.gmra.mxu0 %v3658
        %v3679 = vpop.f32.mrf.mxu0
        %v3680 = vadd.f32 0.0, %v3679
        %3681 = vdwg.mxu0
        %3682 = vrot.lane.b32.xlu0 %v575, 112
        %v3683 = vpop.permute.xlu0 %3682
        %3684 = vrot.lane.b32.xlu0 %v648, 112
        %v3685 = vpop.permute.xlu0 %3684
        %v3686 = vsel %vm744, %v3683, 0
        %v3688 = vsel %vm744, %v3685, 0
        %3690 = vmatpush.xpose.msra.mxu0 0.0
        %3691 = vmatpush.xpose.msra.mxu0 0.0
        %3692 = vmatpush.xpose.msra.mxu0 0.0
        %3693 = vmatpush.xpose.msra.mxu0 0.0
        %3694 = vmatpush.xpose.msra.mxu0 0.0
        %3695 = vmatpush.xpose.msra.mxu0 0.0
        %3696 = vmatpush.xpose.msra.mxu0 0.0
        %3697 = vmatpush.xpose.msra.mxu0 0.0
        %3698 = vmatpush.xpose.msra.mxu0 0.0
        %3699 = vmatpush.xpose.msra.mxu0 0.0
        %3700 = vmatpush.xpose.msra.mxu0 0.0
        %3701 = vmatpush.xpose.msra.mxu0 0.0
        %3702 = vmatpush.xpose.msra.mxu0 0.0
        %3703 = vmatpush.xpose.msra.mxu0 0.0
        %3704 = vmatpush.xpose.msra.mxu0 0.0
        %3705 = vmatpush.xpose.msra.mxu0 %v3688
        %3706 = vmatmul.f32.gmra.mxu0 %v3686
        %v3707 = vpop.f32.mrf.mxu0
        %v3708 = vadd.f32 0.0, %v3707
        %3709 = vdwg.mxu0
        %3710 = vrot.lane.b32.xlu0 %v578, 112
        %v3711 = vpop.permute.xlu0 %3710
        %3712 = vrot.lane.b32.xlu0 %v651, 112
        %v3713 = vpop.permute.xlu0 %3712
        %v3714 = vsel %vm744, %v3711, 0
        %v3716 = vsel %vm744, %v3713, 0
        %3718 = vmatpush.xpose.msra.mxu0 0.0
        %3719 = vmatpush.xpose.msra.mxu0 0.0
        %3720 = vmatpush.xpose.msra.mxu0 0.0
        %3721 = vmatpush.xpose.msra.mxu0 0.0
        %3722 = vmatpush.xpose.msra.mxu0 0.0
        %3723 = vmatpush.xpose.msra.mxu0 0.0
        %3724 = vmatpush.xpose.msra.mxu0 0.0
        %3725 = vmatpush.xpose.msra.mxu0 0.0
        %3726 = vmatpush.xpose.msra.mxu0 0.0
        %3727 = vmatpush.xpose.msra.mxu0 0.0
        %3728 = vmatpush.xpose.msra.mxu0 0.0
        %3729 = vmatpush.xpose.msra.mxu0 0.0
        %3730 = vmatpush.xpose.msra.mxu0 0.0
        %3731 = vmatpush.xpose.msra.mxu0 0.0
        %3732 = vmatpush.xpose.msra.mxu0 0.0
        %3733 = vmatpush.xpose.msra.mxu0 %v3716
        %3734 = vmatmul.f32.gmra.mxu0 %v3714
        %v3735 = vpop.f32.mrf.mxu0
        %v3736 = vadd.f32 0.0, %v3735
        %3737 = vdwg.mxu0
        %3738 = vrot.lane.b32.xlu0 %v581, 112
        %v3739 = vpop.permute.xlu0 %3738
        %3740 = vrot.lane.b32.xlu0 %v654, 112
        %v3741 = vpop.permute.xlu0 %3740
        %v3742 = vsel %vm744, %v3739, 0
        %v3744 = vsel %vm744, %v3741, 0
        %3746 = vmatpush.xpose.msra.mxu0 0.0
        %3747 = vmatpush.xpose.msra.mxu0 0.0
        %3748 = vmatpush.xpose.msra.mxu0 0.0
        %3749 = vmatpush.xpose.msra.mxu0 0.0
        %3750 = vmatpush.xpose.msra.mxu0 0.0
        %3751 = vmatpush.xpose.msra.mxu0 0.0
        %3752 = vmatpush.xpose.msra.mxu0 0.0
        %3753 = vmatpush.xpose.msra.mxu0 0.0
        %3754 = vmatpush.xpose.msra.mxu0 0.0
        %3755 = vmatpush.xpose.msra.mxu0 0.0
        %3756 = vmatpush.xpose.msra.mxu0 0.0
        %3757 = vmatpush.xpose.msra.mxu0 0.0
        %3758 = vmatpush.xpose.msra.mxu0 0.0
        %3759 = vmatpush.xpose.msra.mxu0 0.0
        %3760 = vmatpush.xpose.msra.mxu0 0.0
        %3761 = vmatpush.xpose.msra.mxu0 %v3744
        %3762 = vmatmul.f32.gmra.mxu0 %v3742
        %v3763 = vpop.f32.mrf.mxu0
        %v3764 = vadd.f32 0.0, %v3763
        %3765 = vdwg.mxu0
        %3766 = vrot.lane.b32.xlu0 %v584, 112
        %v3767 = vpop.permute.xlu0 %3766
        %3768 = vrot.lane.b32.xlu0 %v657, 112
        %v3769 = vpop.permute.xlu0 %3768
        %v3770 = vsel %vm744, %v3767, 0
        %v3772 = vsel %vm744, %v3769, 0
        %3774 = vmatpush.xpose.msra.mxu0 0.0
        %3775 = vmatpush.xpose.msra.mxu0 0.0
        %3776 = vmatpush.xpose.msra.mxu0 0.0
        %3777 = vmatpush.xpose.msra.mxu0 0.0
        %3778 = vmatpush.xpose.msra.mxu0 0.0
        %3779 = vmatpush.xpose.msra.mxu0 0.0
        %3780 = vmatpush.xpose.msra.mxu0 0.0
        %3781 = vmatpush.xpose.msra.mxu0 0.0
        %3782 = vmatpush.xpose.msra.mxu0 0.0
        %3783 = vmatpush.xpose.msra.mxu0 0.0
        %3784 = vmatpush.xpose.msra.mxu0 0.0
        %3785 = vmatpush.xpose.msra.mxu0 0.0
        %3786 = vmatpush.xpose.msra.mxu0 0.0
        %3787 = vmatpush.xpose.msra.mxu0 0.0
        %3788 = vmatpush.xpose.msra.mxu0 0.0
        %3789 = vmatpush.xpose.msra.mxu0 %v3772
        %3790 = vmatmul.f32.gmra.mxu0 %v3770
        %v3791 = vpop.f32.mrf.mxu0
        %v3792 = vadd.f32 0.0, %v3791
        %3793 = vdwg.mxu0
        %3794 = vrot.lane.b32.xlu0 %v587, 112
        %v3795 = vpop.permute.xlu0 %3794
        %3796 = vrot.lane.b32.xlu0 %v660, 112
        %v3797 = vpop.permute.xlu0 %3796
        %v3798 = vsel %vm744, %v3795, 0
        %v3800 = vsel %vm744, %v3797, 0
        %3802 = vmatpush.xpose.msra.mxu0 0.0
        %3803 = vmatpush.xpose.msra.mxu0 0.0
        %3804 = vmatpush.xpose.msra.mxu0 0.0
        %3805 = vmatpush.xpose.msra.mxu0 0.0
        %3806 = vmatpush.xpose.msra.mxu0 0.0
        %3807 = vmatpush.xpose.msra.mxu0 0.0
        %3808 = vmatpush.xpose.msra.mxu0 0.0
        %3809 = vmatpush.xpose.msra.mxu0 0.0
        %3810 = vmatpush.xpose.msra.mxu0 0.0
        %3811 = vmatpush.xpose.msra.mxu0 0.0
        %3812 = vmatpush.xpose.msra.mxu0 0.0
        %3813 = vmatpush.xpose.msra.mxu0 0.0
        %3814 = vmatpush.xpose.msra.mxu0 0.0
        %3815 = vmatpush.xpose.msra.mxu0 0.0
        %3816 = vmatpush.xpose.msra.mxu0 0.0
        %3817 = vmatpush.xpose.msra.mxu0 %v3800
        %3818 = vmatmul.f32.gmra.mxu0 %v3798
        %v3819 = vpop.f32.mrf.mxu0
        %v3820 = vadd.f32 0.0, %v3819
        %3821 = vdwg.mxu0
        %3822 = vrot.lane.b32.xlu0 %v590, 112
        %v3823 = vpop.permute.xlu0 %3822
        %3824 = vrot.lane.b32.xlu0 %v663, 112
        %v3825 = vpop.permute.xlu0 %3824
        %v3826 = vsel %vm744, %v3823, 0
        %v3828 = vsel %vm744, %v3825, 0
        %3830 = vmatpush.xpose.msra.mxu0 0.0
        %3831 = vmatpush.xpose.msra.mxu0 0.0
        %3832 = vmatpush.xpose.msra.mxu0 0.0
        %3833 = vmatpush.xpose.msra.mxu0 0.0
        %3834 = vmatpush.xpose.msra.mxu0 0.0
        %3835 = vmatpush.xpose.msra.mxu0 0.0
        %3836 = vmatpush.xpose.msra.mxu0 0.0
        %3837 = vmatpush.xpose.msra.mxu0 0.0
        %3838 = vmatpush.xpose.msra.mxu0 0.0
        %3839 = vmatpush.xpose.msra.mxu0 0.0
        %3840 = vmatpush.xpose.msra.mxu0 0.0
        %3841 = vmatpush.xpose.msra.mxu0 0.0
        %3842 = vmatpush.xpose.msra.mxu0 0.0
        %3843 = vmatpush.xpose.msra.mxu0 0.0
        %3844 = vmatpush.xpose.msra.mxu0 0.0
        %3845 = vmatpush.xpose.msra.mxu0 %v3828
        %3846 = vmatmul.f32.gmra.mxu0 %v3826
        %v3847 = vpop.f32.mrf.mxu0
        %v3848 = vadd.f32 0.0, %v3847
        %3849 = vdwg.mxu0
        %3850 = vrot.lane.b32.xlu0 %v593, 112
        %v3851 = vpop.permute.xlu0 %3850
        %3852 = vrot.lane.b32.xlu0 %v666, 112
        %v3853 = vpop.permute.xlu0 %3852
        %v3854 = vsel %vm744, %v3851, 0
        %v3856 = vsel %vm744, %v3853, 0
        %3858 = vmatpush.xpose.msra.mxu0 0.0
        %3859 = vmatpush.xpose.msra.mxu0 0.0
        %3860 = vmatpush.xpose.msra.mxu0 0.0
        %3861 = vmatpush.xpose.msra.mxu0 0.0
        %3862 = vmatpush.xpose.msra.mxu0 0.0
        %3863 = vmatpush.xpose.msra.mxu0 0.0
        %3864 = vmatpush.xpose.msra.mxu0 0.0
        %3865 = vmatpush.xpose.msra.mxu0 0.0
        %3866 = vmatpush.xpose.msra.mxu0 0.0
        %3867 = vmatpush.xpose.msra.mxu0 0.0
        %3868 = vmatpush.xpose.msra.mxu0 0.0
        %3869 = vmatpush.xpose.msra.mxu0 0.0
        %3870 = vmatpush.xpose.msra.mxu0 0.0
        %3871 = vmatpush.xpose.msra.mxu0 0.0
        %3872 = vmatpush.xpose.msra.mxu0 0.0
        %3873 = vmatpush.xpose.msra.mxu0 %v3856
        %3874 = vmatmul.f32.gmra.mxu0 %v3854
        %v3875 = vpop.f32.mrf.mxu0
        %v3876 = vadd.f32 0.0, %v3875
        %3877 = vdwg.mxu0
        %3878 = vrot.lane.b32.xlu0 %v596, 112
        %v3879 = vpop.permute.xlu0 %3878
        %3880 = vrot.lane.b32.xlu0 %v669, 112
        %v3881 = vpop.permute.xlu0 %3880
        %v3882 = vsel %vm744, %v3879, 0
        %v3884 = vsel %vm744, %v3881, 0
        %3886 = vmatpush.xpose.msra.mxu0 0.0
        %3887 = vmatpush.xpose.msra.mxu0 0.0
        %3888 = vmatpush.xpose.msra.mxu0 0.0
        %3889 = vmatpush.xpose.msra.mxu0 0.0
        %3890 = vmatpush.xpose.msra.mxu0 0.0
        %3891 = vmatpush.xpose.msra.mxu0 0.0
        %3892 = vmatpush.xpose.msra.mxu0 0.0
        %3893 = vmatpush.xpose.msra.mxu0 0.0
        %3894 = vmatpush.xpose.msra.mxu0 0.0
        %3895 = vmatpush.xpose.msra.mxu0 0.0
        %3896 = vmatpush.xpose.msra.mxu0 0.0
        %3897 = vmatpush.xpose.msra.mxu0 0.0
        %3898 = vmatpush.xpose.msra.mxu0 0.0
        %3899 = vmatpush.xpose.msra.mxu0 0.0
        %3900 = vmatpush.xpose.msra.mxu0 0.0
        %3901 = vmatpush.xpose.msra.mxu0 %v3884
        %3902 = vmatmul.f32.gmra.mxu0 %v3882
        %v3903 = vpop.f32.mrf.mxu0
        %v3904 = vadd.f32 0.0, %v3903
        %3905 = vdwg.mxu0
        %v3906 = vsel %vm744, %v3484, -inf
        %3907 = vmax.xlane.f32.xlu0 %v3906
        %v3908 = vpop.xlane.xlu0 %3907
        %v3909 = vsel %vm744, %v3512, -inf
        %3910 = vmax.xlane.f32.xlu0 %v3909
        %v3911 = vpop.xlane.xlu0 %3910
        %v3912 = vsel %vm744, %v3540, -inf
        %3913 = vmax.xlane.f32.xlu0 %v3912
        %v3914 = vpop.xlane.xlu0 %3913
        %v3915 = vsel %vm744, %v3568, -inf
        %3916 = vmax.xlane.f32.xlu0 %v3915
        %v3917 = vpop.xlane.xlu0 %3916
        %v3918 = vsel %vm744, %v3596, -inf
        %3919 = vmax.xlane.f32.xlu0 %v3918
        %v3920 = vpop.xlane.xlu0 %3919
        %v3921 = vsel %vm744, %v3624, -inf
        %3922 = vmax.xlane.f32.xlu0 %v3921
        %v3923 = vpop.xlane.xlu0 %3922
        %v3924 = vsel %vm744, %v3652, -inf
        %3925 = vmax.xlane.f32.xlu0 %v3924
        %v3926 = vpop.xlane.xlu0 %3925
        %v3927 = vsel %vm744, %v3680, -inf
        %3928 = vmax.xlane.f32.xlu0 %v3927
        %v3929 = vpop.xlane.xlu0 %3928
        %v3930 = vsel %vm744, %v3708, -inf
        %3931 = vmax.xlane.f32.xlu0 %v3930
        %v3932 = vpop.xlane.xlu0 %3931
        %v3933 = vsel %vm744, %v3736, -inf
        %3934 = vmax.xlane.f32.xlu0 %v3933
        %v3935 = vpop.xlane.xlu0 %3934
        %v3936 = vsel %vm744, %v3764, -inf
        %3937 = vmax.xlane.f32.xlu0 %v3936
        %v3938 = vpop.xlane.xlu0 %3937
        %v3939 = vsel %vm744, %v3792, -inf
        %3940 = vmax.xlane.f32.xlu0 %v3939
        %v3941 = vpop.xlane.xlu0 %3940
        %v3942 = vsel %vm744, %v3820, -inf
        %3943 = vmax.xlane.f32.xlu0 %v3942
        %v3944 = vpop.xlane.xlu0 %3943
        %v3945 = vsel %vm744, %v3848, -inf
        %3946 = vmax.xlane.f32.xlu0 %v3945
        %v3947 = vpop.xlane.xlu0 %3946
        %v3948 = vsel %vm744, %v3876, -inf
        %3949 = vmax.xlane.f32.xlu0 %v3948
        %v3950 = vpop.xlane.xlu0 %3949
        %v3951 = vsel %vm744, %v3904, -inf
        %3952 = vmax.xlane.f32.xlu0 %v3951
        %v3953 = vpop.xlane.xlu0 %3952
        %v3954 = vsub.f32 %v3484, %v3908
        %v3955 = vsub.f32 %v3512, %v3911
        %v3956 = vsub.f32 %v3540, %v3914
        %v3957 = vsub.f32 %v3568, %v3917
        %v3958 = vsub.f32 %v3596, %v3920
        %v3959 = vsub.f32 %v3624, %v3923
        %v3960 = vsub.f32 %v3652, %v3926
        %v3961 = vsub.f32 %v3680, %v3929
        %v3962 = vsub.f32 %v3708, %v3932
        %v3963 = vsub.f32 %v3736, %v3935
        %v3964 = vsub.f32 %v3764, %v3938
        %v3965 = vsub.f32 %v3792, %v3941
        %v3966 = vsub.f32 %v3820, %v3944
        %v3967 = vsub.f32 %v3848, %v3947
        %v3968 = vsub.f32 %v3876, %v3950
        %v3969 = vsub.f32 %v3904, %v3953
        %v3970 = vmul.f32 %v3954, 1.442695
        %v3971 = vpow.pop %v3970
        %v3972 = vmul.f32 %v3955, 1.442695
        %v3973 = vpow.pop %v3972
        %v3974 = vmul.f32 %v3956, 1.442695
        %v3975 = vpow.pop %v3974
        %v3976 = vmul.f32 %v3957, 1.442695
        %v3977 = vpow.pop %v3976
        %v3978 = vmul.f32 %v3958, 1.442695
        %v3979 = vpow.pop %v3978
        %v3980 = vmul.f32 %v3959, 1.442695
        %v3981 = vpow.pop %v3980
        %v3982 = vmul.f32 %v3960, 1.442695
        %v3983 = vpow.pop %v3982
        %v3984 = vmul.f32 %v3961, 1.442695
        %v3985 = vpow.pop %v3984
        %v3986 = vmul.f32 %v3962, 1.442695
        %v3987 = vpow.pop %v3986
        %v3988 = vmul.f32 %v3963, 1.442695
        %v3989 = vpow.pop %v3988
        %v3990 = vmul.f32 %v3964, 1.442695
        %v3991 = vpow.pop %v3990
        %v3992 = vmul.f32 %v3965, 1.442695
        %v3993 = vpow.pop %v3992
        %v3994 = vmul.f32 %v3966, 1.442695
        %v3995 = vpow.pop %v3994
        %v3996 = vmul.f32 %v3967, 1.442695
        %v3997 = vpow.pop %v3996
        %v3998 = vmul.f32 %v3968, 1.442695
        %v3999 = vpow.pop %v3998
        %v4000 = vmul.f32 %v3969, 1.442695
        %v4001 = vpow.pop %v4000
        %v4002 = vsel %vm744, %v3971, 0.0
        %4003 = vadd.xlane.f32.xlu0 %v4002
        %v4004 = vpop.xlane.xlu0 %4003
        %v4005 = vsel %vm744, %v3973, 0.0
        %4006 = vadd.xlane.f32.xlu0 %v4005
        %v4007 = vpop.xlane.xlu0 %4006
        %v4008 = vsel %vm744, %v3975, 0.0
        %4009 = vadd.xlane.f32.xlu0 %v4008
        %v4010 = vpop.xlane.xlu0 %4009
        %v4011 = vsel %vm744, %v3977, 0.0
        %4012 = vadd.xlane.f32.xlu0 %v4011
        %v4013 = vpop.xlane.xlu0 %4012
        %v4014 = vsel %vm744, %v3979, 0.0
        %4015 = vadd.xlane.f32.xlu0 %v4014
        %v4016 = vpop.xlane.xlu0 %4015
        %v4017 = vsel %vm744, %v3981, 0.0
        %4018 = vadd.xlane.f32.xlu0 %v4017
        %v4019 = vpop.xlane.xlu0 %4018
        %v4020 = vsel %vm744, %v3983, 0.0
        %4021 = vadd.xlane.f32.xlu0 %v4020
        %v4022 = vpop.xlane.xlu0 %4021
        %v4023 = vsel %vm744, %v3985, 0.0
        %4024 = vadd.xlane.f32.xlu0 %v4023
        %v4025 = vpop.xlane.xlu0 %4024
        %v4026 = vsel %vm744, %v3987, 0.0
        %4027 = vadd.xlane.f32.xlu0 %v4026
        %v4028 = vpop.xlane.xlu0 %4027
        %v4029 = vsel %vm744, %v3989, 0.0
        %4030 = vadd.xlane.f32.xlu0 %v4029
        %v4031 = vpop.xlane.xlu0 %4030
        %v4032 = vsel %vm744, %v3991, 0.0
        %4033 = vadd.xlane.f32.xlu0 %v4032
        %v4034 = vpop.xlane.xlu0 %4033
        %v4035 = vsel %vm744, %v3993, 0.0
        %4036 = vadd.xlane.f32.xlu0 %v4035
        %v4037 = vpop.xlane.xlu0 %4036
        %v4038 = vsel %vm744, %v3995, 0.0
        %4039 = vadd.xlane.f32.xlu0 %v4038
        %v4040 = vpop.xlane.xlu0 %4039
        %v4041 = vsel %vm744, %v3997, 0.0
        %4042 = vadd.xlane.f32.xlu0 %v4041
        %v4043 = vpop.xlane.xlu0 %4042
        %v4044 = vsel %vm744, %v3999, 0.0
        %4045 = vadd.xlane.f32.xlu0 %v4044
        %v4046 = vpop.xlane.xlu0 %4045
        %v4047 = vsel %vm744, %v4001, 0.0
        %4048 = vadd.xlane.f32.xlu0 %v4047
        %v4049 = vpop.xlane.xlu0 %4048
        %v4050 = vrcp.pop %v4004
        %v4051 = vrcp.pop %v4007
        %v4052 = vrcp.pop %v4010
        %v4053 = vrcp.pop %v4013
        %v4054 = vrcp.pop %v4016
        %v4055 = vrcp.pop %v4019
        %v4056 = vrcp.pop %v4022
        %v4057 = vrcp.pop %v4025
        %v4058 = vrcp.pop %v4028
        %v4059 = vrcp.pop %v4031
        %v4060 = vrcp.pop %v4034
        %v4061 = vrcp.pop %v4037
        %v4062 = vrcp.pop %v4040
        %v4063 = vrcp.pop %v4043
        %v4064 = vrcp.pop %v4046
        %v4065 = vrcp.pop %v4049
        %v4066 = vmul.f32 %v3971, %v4050
        %v4067 = vmul.f32 %v3973, %v4051
        %v4068 = vmul.f32 %v3975, %v4052
        %v4069 = vmul.f32 %v3977, %v4053
        %v4070 = vmul.f32 %v3979, %v4054
        %v4071 = vmul.f32 %v3981, %v4055
        %v4072 = vmul.f32 %v3983, %v4056
        %v4073 = vmul.f32 %v3985, %v4057
        %v4074 = vmul.f32 %v3987, %v4058
        %v4075 = vmul.f32 %v3989, %v4059
        %v4076 = vmul.f32 %v3991, %v4060
        %v4077 = vmul.f32 %v3993, %v4061
        %v4078 = vmul.f32 %v3995, %v4062
        %v4079 = vmul.f32 %v3997, %v4063
        %v4080 = vmul.f32 %v3999, %v4064
        %v4081 = vmul.f32 %v4001, %v4065
        %v4082 = vrot.slane %v4068, 4
        %v4083 = vsel %vm1338, %v4082, %v4066
        %v4084 = vrot.slane %v4066, 4
        %v4085 = vsel %vm1338, %v4068, %v4084
        %v4087 = vunpack.c.l.s4 1983009808
        %v4088 = vunpack.c.0.s8 %v4087
        %v4089 = vperm.slane %v4083, %v4088
        %v4091 = vunpack.c.l.s4 1983009808
        %v4092 = vunpack.c.0.s8 %v4091
        %v4093 = vperm.slane %v4085, %v4092
        %v4094 = vrot.slane %v4069, 4
        %v4095 = vsel %vm1338, %v4094, %v4067
        %v4096 = vrot.slane %v4067, 4
        %v4097 = vsel %vm1338, %v4069, %v4096
        %v4099 = vunpack.c.l.s4 1983009808
        %v4100 = vunpack.c.0.s8 %v4099
        %v4101 = vperm.slane %v4095, %v4100
        %v4103 = vunpack.c.l.s4 1983009808
        %v4104 = vunpack.c.0.s8 %v4103
        %v4105 = vperm.slane %v4097, %v4104
        %v4106 = vrot.slane %v4072, 4
        %v4107 = vsel %vm1338, %v4106, %v4070
        %v4108 = vrot.slane %v4070, 4
        %v4109 = vsel %vm1338, %v4072, %v4108
        %v4111 = vunpack.c.l.s4 1983009808
        %v4112 = vunpack.c.0.s8 %v4111
        %v4113 = vperm.slane %v4107, %v4112
        %v4115 = vunpack.c.l.s4 1983009808
        %v4116 = vunpack.c.0.s8 %v4115
        %v4117 = vperm.slane %v4109, %v4116
        %v4118 = vrot.slane %v4073, 4
        %v4119 = vsel %vm1338, %v4118, %v4071
        %v4120 = vrot.slane %v4071, 4
        %v4121 = vsel %vm1338, %v4073, %v4120
        %v4123 = vunpack.c.l.s4 1983009808
        %v4124 = vunpack.c.0.s8 %v4123
        %v4125 = vperm.slane %v4119, %v4124
        %v4127 = vunpack.c.l.s4 1983009808
        %v4128 = vunpack.c.0.s8 %v4127
        %v4129 = vperm.slane %v4121, %v4128
        %v4130 = vrot.slane %v4101, 4
        %v4131 = vsel %vm1338, %v4130, %v4089
        %v4132 = vrot.slane %v4089, 4
        %v4133 = vsel %vm1338, %v4101, %v4132
        %v4135 = vunpack.c.l.s4 1934713408
        %v4136 = vunpack.c.0.s8 %v4135
        %v4137 = vperm.slane %v4131, %v4136
        %v4139 = vunpack.c.l.s4 1934713408
        %v4140 = vunpack.c.0.s8 %v4139
        %v4141 = vperm.slane %v4133, %v4140
        %v4142 = vrot.slane %v4105, 4
        %v4143 = vsel %vm1338, %v4142, %v4093
        %v4144 = vrot.slane %v4093, 4
        %v4145 = vsel %vm1338, %v4105, %v4144
        %v4147 = vunpack.c.l.s4 1934713408
        %v4148 = vunpack.c.0.s8 %v4147
        %v4149 = vperm.slane %v4143, %v4148
        %v4151 = vunpack.c.l.s4 1934713408
        %v4152 = vunpack.c.0.s8 %v4151
        %v4153 = vperm.slane %v4145, %v4152
        %v4154 = vrot.slane %v4125, 4
        %v4155 = vsel %vm1338, %v4154, %v4113
        %v4156 = vrot.slane %v4113, 4
        %v4157 = vsel %vm1338, %v4125, %v4156
        %v4159 = vunpack.c.l.s4 1934713408
        %v4160 = vunpack.c.0.s8 %v4159
        %v4161 = vperm.slane %v4155, %v4160
        %v4163 = vunpack.c.l.s4 1934713408
        %v4164 = vunpack.c.0.s8 %v4163
        %v4165 = vperm.slane %v4157, %v4164
        %v4166 = vrot.slane %v4129, 4
        %v4167 = vsel %vm1338, %v4166, %v4117
        %v4168 = vrot.slane %v4117, 4
        %v4169 = vsel %vm1338, %v4129, %v4168
        %v4171 = vunpack.c.l.s4 1934713408
        %v4172 = vunpack.c.0.s8 %v4171
        %v4173 = vperm.slane %v4167, %v4172
        %v4175 = vunpack.c.l.s4 1934713408
        %v4176 = vunpack.c.0.s8 %v4175
        %v4177 = vperm.slane %v4169, %v4176
        %v4178 = vrot.slane %v4161, 4
        %v4179 = vsel %vm1338, %v4178, %v4137
        %v4180 = vrot.slane %v4137, 4
        %v4181 = vsel %vm1338, %v4161, %v4180
        %v4182 = vrot.slane %v4165, 4
        %v4183 = vsel %vm1338, %v4182, %v4141
        %v4184 = vrot.slane %v4141, 4
        %v4185 = vsel %vm1338, %v4165, %v4184
        %v4186 = vrot.slane %v4173, 4
        %v4187 = vsel %vm1338, %v4186, %v4149
        %v4188 = vrot.slane %v4149, 4
        %v4189 = vsel %vm1338, %v4173, %v4188
        %v4190 = vrot.slane %v4177, 4
        %v4191 = vsel %vm1338, %v4190, %v4153
        %v4192 = vrot.slane %v4153, 4
        %v4193 = vsel %vm1338, %v4177, %v4192
        %v4194 = vrot.slane %v4076, 4
        %v4195 = vsel %vm1338, %v4194, %v4074
        %v4196 = vrot.slane %v4074, 4
        %v4197 = vsel %vm1338, %v4076, %v4196
        %v4199 = vunpack.c.l.s4 1983009808
        %v4200 = vunpack.c.0.s8 %v4199
        %v4201 = vperm.slane %v4195, %v4200
        %v4203 = vunpack.c.l.s4 1983009808
        %v4204 = vunpack.c.0.s8 %v4203
        %v4205 = vperm.slane %v4197, %v4204
        %v4206 = vrot.slane %v4077, 4
        %v4207 = vsel %vm1338, %v4206, %v4075
        %v4208 = vrot.slane %v4075, 4
        %v4209 = vsel %vm1338, %v4077, %v4208
        %v4211 = vunpack.c.l.s4 1983009808
        %v4212 = vunpack.c.0.s8 %v4211
        %v4213 = vperm.slane %v4207, %v4212
        %v4215 = vunpack.c.l.s4 1983009808
        %v4216 = vunpack.c.0.s8 %v4215
        %v4217 = vperm.slane %v4209, %v4216
        %v4218 = vrot.slane %v4080, 4
        %v4219 = vsel %vm1338, %v4218, %v4078
        %v4220 = vrot.slane %v4078, 4
        %v4221 = vsel %vm1338, %v4080, %v4220
        %v4223 = vunpack.c.l.s4 1983009808
        %v4224 = vunpack.c.0.s8 %v4223
        %v4225 = vperm.slane %v4219, %v4224
        %v4227 = vunpack.c.l.s4 1983009808
        %v4228 = vunpack.c.0.s8 %v4227
        %v4229 = vperm.slane %v4221, %v4228
        %v4230 = vrot.slane %v4081, 4
        %v4231 = vsel %vm1338, %v4230, %v4079
        %v4232 = vrot.slane %v4079, 4
        %v4233 = vsel %vm1338, %v4081, %v4232
        %v4235 = vunpack.c.l.s4 1983009808
        %v4236 = vunpack.c.0.s8 %v4235
        %v4237 = vperm.slane %v4231, %v4236
        %v4239 = vunpack.c.l.s4 1983009808
        %v4240 = vunpack.c.0.s8 %v4239
        %v4241 = vperm.slane %v4233, %v4240
        %v4242 = vrot.slane %v4213, 4
        %v4243 = vsel %vm1338, %v4242, %v4201
        %v4244 = vrot.slane %v4201, 4
        %v4245 = vsel %vm1338, %v4213, %v4244
        %v4247 = vunpack.c.l.s4 1934713408
        %v4248 = vunpack.c.0.s8 %v4247
        %v4249 = vperm.slane %v4243, %v4248
        %v4251 = vunpack.c.l.s4 1934713408
        %v4252 = vunpack.c.0.s8 %v4251
        %v4253 = vperm.slane %v4245, %v4252
        %v4254 = vrot.slane %v4217, 4
        %v4255 = vsel %vm1338, %v4254, %v4205
        %v4256 = vrot.slane %v4205, 4
        %v4257 = vsel %vm1338, %v4217, %v4256
        %v4259 = vunpack.c.l.s4 1934713408
        %v4260 = vunpack.c.0.s8 %v4259
        %v4261 = vperm.slane %v4255, %v4260
        %v4263 = vunpack.c.l.s4 1934713408
        %v4264 = vunpack.c.0.s8 %v4263
        %v4265 = vperm.slane %v4257, %v4264
        %v4266 = vrot.slane %v4237, 4
        %v4267 = vsel %vm1338, %v4266, %v4225
        %v4268 = vrot.slane %v4225, 4
        %v4269 = vsel %vm1338, %v4237, %v4268
        %v4271 = vunpack.c.l.s4 1934713408
        %v4272 = vunpack.c.0.s8 %v4271
        %v4273 = vperm.slane %v4267, %v4272
        %v4275 = vunpack.c.l.s4 1934713408
        %v4276 = vunpack.c.0.s8 %v4275
        %v4277 = vperm.slane %v4269, %v4276
        %v4278 = vrot.slane %v4241, 4
        %v4279 = vsel %vm1338, %v4278, %v4229
        %v4280 = vrot.slane %v4229, 4
        %v4281 = vsel %vm1338, %v4241, %v4280
        %v4283 = vunpack.c.l.s4 1934713408
        %v4284 = vunpack.c.0.s8 %v4283
        %v4285 = vperm.slane %v4279, %v4284
        %v4287 = vunpack.c.l.s4 1934713408
        %v4288 = vunpack.c.0.s8 %v4287
        %v4289 = vperm.slane %v4281, %v4288
        %v4290 = vrot.slane %v4273, 4
        %v4291 = vsel %vm1338, %v4290, %v4249
        %v4292 = vrot.slane %v4249, 4
        %v4293 = vsel %vm1338, %v4273, %v4292
        %v4294 = vrot.slane %v4277, 4
        %v4295 = vsel %vm1338, %v4294, %v4253
        %v4296 = vrot.slane %v4253, 4
        %v4297 = vsel %vm1338, %v4277, %v4296
        %v4298 = vrot.slane %v4285, 4
        %v4299 = vsel %vm1338, %v4298, %v4261
        %v4300 = vrot.slane %v4261, 4
        %v4301 = vsel %vm1338, %v4285, %v4300
        %v4302 = vrot.slane %v4289, 4
        %v4303 = vsel %vm1338, %v4302, %v4265
        %v4304 = vrot.slane %v4265, 4
        %v4305 = vsel %vm1338, %v4289, %v4304
        %4308 = vrot.lane.b32.xlu0 %v4181, 8
        %v4309 = vpop.permute.xlu0 %4308
        %4310 = vrot.lane.b32.xlu0 %v4293, 8
        %v4311 = vpop.permute.xlu0 %4310
        %4316 = vrot.lane.b32.xlu0 %v4183, 16
        %v4317 = vpop.permute.xlu0 %4316
        %4318 = vrot.lane.b32.xlu0 %v4295, 16
        %v4319 = vpop.permute.xlu0 %4318
        %4324 = vrot.lane.b32.xlu0 %v4185, 24
        %v4325 = vpop.permute.xlu0 %4324
        %4326 = vrot.lane.b32.xlu0 %v4297, 24
        %v4327 = vpop.permute.xlu0 %4326
        %4332 = vrot.lane.b32.xlu0 %v4187, 32
        %v4333 = vpop.permute.xlu0 %4332
        %4334 = vrot.lane.b32.xlu0 %v4299, 32
        %v4335 = vpop.permute.xlu0 %4334
        %4340 = vrot.lane.b32.xlu0 %v4189, 40
        %v4341 = vpop.permute.xlu0 %4340
        %4342 = vrot.lane.b32.xlu0 %v4301, 40
        %v4343 = vpop.permute.xlu0 %4342
        %4348 = vrot.lane.b32.xlu0 %v4191, 48
        %v4349 = vpop.permute.xlu0 %4348
        %4350 = vrot.lane.b32.xlu0 %v4303, 48
        %v4351 = vpop.permute.xlu0 %4350
        %4356 = vrot.lane.b32.xlu0 %v4193, 56
        %v4357 = vpop.permute.xlu0 %4356
        %4358 = vrot.lane.b32.xlu0 %v4305, 56
        %v4359 = vpop.permute.xlu0 %4358
        %v4362 = vsel %vm744, %v4179, %v4309
        %v4363 = vsel %vm744, %v4291, %v4311
        %v4364 = vsel %vm1620, %v4362, %v4317
        %v4365 = vsel %vm1620, %v4363, %v4319
        %v4366 = vsel %vm1623, %v4364, %v4325
        %v4367 = vsel %vm1623, %v4365, %v4327
        %v4368 = vsel %vm484, %v4366, %v4333
        %v4369 = vsel %vm484, %v4367, %v4335
        %v4370 = vsel %vm1628, %v4368, %v4341
        %v4371 = vsel %vm1628, %v4369, %v4343
        %v4372 = vsel %vm1631, %v4370, %v4349
        %v4373 = vsel %vm1631, %v4371, %v4351
        %v4374 = vsel %vm1634, %v4372, %v4357
        %v4375 = vsel %vm1634, %v4373, %v4359
        %s4376 = scalar_lea.vmem %s456, 32 [#allocation13]
        %4377 = vst.msk [vmem:[%s4376] sm:$0xff] %vm1637, %v4374
        %4378 = vst.msk [vmem:[%s4376 + $0x8] sm:$0xff] %vm1637, %v4375
        %4379 = vrot.lane.b32.xlu0 %v697, 112
        %v4380 = vpop.permute.xlu0 %4379
        %v4383 = vsel %vm744, %v4066, 0
        %4385 = vmatpush.msra.mxu0 0.0
        %4386 = vmatpush.msra.mxu0 0.0
        %4387 = vmatpush.msra.mxu0 0.0
        %4388 = vmatpush.msra.mxu0 0.0
        %4389 = vmatpush.msra.mxu0 0.0
        %4390 = vmatpush.msra.mxu0 0.0
        %4391 = vmatpush.msra.mxu0 0.0
        %4392 = vmatpush.msra.mxu0 0.0
        %4393 = vmatpush.msra.mxu0 0.0
        %4394 = vmatpush.msra.mxu0 0.0
        %4395 = vmatpush.msra.mxu0 0.0
        %4396 = vmatpush.msra.mxu0 0.0
        %4397 = vmatpush.msra.mxu0 0.0
        %4398 = vmatpush.msra.mxu0 0.0
        %4399 = vmatpush.msra.mxu0 0.0
        %4400 = vmatpush.msra.mxu0 %v4380
        %4401 = vmatmul.f32.gmra.mxu0 %v4383
        %v4402 = vpop.f32.mrf.mxu0
        %v4403 = vadd.f32 0.0, %v4402
        %4404 = vdwg.mxu0
        %4405 = vrot.lane.b32.xlu0 %v700, 112
        %v4406 = vpop.permute.xlu0 %4405
        %v4409 = vsel %vm744, %v4067, 0
        %4411 = vmatpush.msra.mxu0 0.0
        %4412 = vmatpush.msra.mxu0 0.0
        %4413 = vmatpush.msra.mxu0 0.0
        %4414 = vmatpush.msra.mxu0 0.0
        %4415 = vmatpush.msra.mxu0 0.0
        %4416 = vmatpush.msra.mxu0 0.0
        %4417 = vmatpush.msra.mxu0 0.0
        %4418 = vmatpush.msra.mxu0 0.0
        %4419 = vmatpush.msra.mxu0 0.0
        %4420 = vmatpush.msra.mxu0 0.0
        %4421 = vmatpush.msra.mxu0 0.0
        %4422 = vmatpush.msra.mxu0 0.0
        %4423 = vmatpush.msra.mxu0 0.0
        %4424 = vmatpush.msra.mxu0 0.0
        %4425 = vmatpush.msra.mxu0 0.0
        %4426 = vmatpush.msra.mxu0 %v4406
        %4427 = vmatmul.f32.gmra.mxu0 %v4409
        %v4428 = vpop.f32.mrf.mxu0
        %v4429 = vadd.f32 0.0, %v4428
        %4430 = vdwg.mxu0
        %4431 = vrot.lane.b32.xlu0 %v703, 112
        %v4432 = vpop.permute.xlu0 %4431
        %v4435 = vsel %vm744, %v4068, 0
        %4437 = vmatpush.msra.mxu0 0.0
        %4438 = vmatpush.msra.mxu0 0.0
        %4439 = vmatpush.msra.mxu0 0.0
        %4440 = vmatpush.msra.mxu0 0.0
        %4441 = vmatpush.msra.mxu0 0.0
        %4442 = vmatpush.msra.mxu0 0.0
        %4443 = vmatpush.msra.mxu0 0.0
        %4444 = vmatpush.msra.mxu0 0.0
        %4445 = vmatpush.msra.mxu0 0.0
        %4446 = vmatpush.msra.mxu0 0.0
        %4447 = vmatpush.msra.mxu0 0.0
        %4448 = vmatpush.msra.mxu0 0.0
        %4449 = vmatpush.msra.mxu0 0.0
        %4450 = vmatpush.msra.mxu0 0.0
        %4451 = vmatpush.msra.mxu0 0.0
        %4452 = vmatpush.msra.mxu0 %v4432
        %4453 = vmatmul.f32.gmra.mxu0 %v4435
        %v4454 = vpop.f32.mrf.mxu0
        %v4455 = vadd.f32 0.0, %v4454
        %4456 = vdwg.mxu0
        %4457 = vrot.lane.b32.xlu0 %v706, 112
        %v4458 = vpop.permute.xlu0 %4457
        %v4461 = vsel %vm744, %v4069, 0
        %4463 = vmatpush.msra.mxu0 0.0
        %4464 = vmatpush.msra.mxu0 0.0
        %4465 = vmatpush.msra.mxu0 0.0
        %4466 = vmatpush.msra.mxu0 0.0
        %4467 = vmatpush.msra.mxu0 0.0
        %4468 = vmatpush.msra.mxu0 0.0
        %4469 = vmatpush.msra.mxu0 0.0
        %4470 = vmatpush.msra.mxu0 0.0
        %4471 = vmatpush.msra.mxu0 0.0
        %4472 = vmatpush.msra.mxu0 0.0
        %4473 = vmatpush.msra.mxu0 0.0
        %4474 = vmatpush.msra.mxu0 0.0
        %4475 = vmatpush.msra.mxu0 0.0
        %4476 = vmatpush.msra.mxu0 0.0
        %4477 = vmatpush.msra.mxu0 0.0
        %4478 = vmatpush.msra.mxu0 %v4458
        %4479 = vmatmul.f32.gmra.mxu0 %v4461
        %v4480 = vpop.f32.mrf.mxu0
        %v4481 = vadd.f32 0.0, %v4480
        %4482 = vdwg.mxu0
        %4483 = vrot.lane.b32.xlu0 %v709, 112
        %v4484 = vpop.permute.xlu0 %4483
        %v4487 = vsel %vm744, %v4070, 0
        %4489 = vmatpush.msra.mxu0 0.0
        %4490 = vmatpush.msra.mxu0 0.0
        %4491 = vmatpush.msra.mxu0 0.0
        %4492 = vmatpush.msra.mxu0 0.0
        %4493 = vmatpush.msra.mxu0 0.0
        %4494 = vmatpush.msra.mxu0 0.0
        %4495 = vmatpush.msra.mxu0 0.0
        %4496 = vmatpush.msra.mxu0 0.0
        %4497 = vmatpush.msra.mxu0 0.0
        %4498 = vmatpush.msra.mxu0 0.0
        %4499 = vmatpush.msra.mxu0 0.0
        %4500 = vmatpush.msra.mxu0 0.0
        %4501 = vmatpush.msra.mxu0 0.0
        %4502 = vmatpush.msra.mxu0 0.0
        %4503 = vmatpush.msra.mxu0 0.0
        %4504 = vmatpush.msra.mxu0 %v4484
        %4505 = vmatmul.f32.gmra.mxu0 %v4487
        %v4506 = vpop.f32.mrf.mxu0
        %v4507 = vadd.f32 0.0, %v4506
        %4508 = vdwg.mxu0
        %4509 = vrot.lane.b32.xlu0 %v712, 112
        %v4510 = vpop.permute.xlu0 %4509
        %v4513 = vsel %vm744, %v4071, 0
        %4515 = vmatpush.msra.mxu0 0.0
        %4516 = vmatpush.msra.mxu0 0.0
        %4517 = vmatpush.msra.mxu0 0.0
        %4518 = vmatpush.msra.mxu0 0.0
        %4519 = vmatpush.msra.mxu0 0.0
        %4520 = vmatpush.msra.mxu0 0.0
        %4521 = vmatpush.msra.mxu0 0.0
        %4522 = vmatpush.msra.mxu0 0.0
        %4523 = vmatpush.msra.mxu0 0.0
        %4524 = vmatpush.msra.mxu0 0.0
        %4525 = vmatpush.msra.mxu0 0.0
        %4526 = vmatpush.msra.mxu0 0.0
        %4527 = vmatpush.msra.mxu0 0.0
        %4528 = vmatpush.msra.mxu0 0.0
        %4529 = vmatpush.msra.mxu0 0.0
        %4530 = vmatpush.msra.mxu0 %v4510
        %4531 = vmatmul.f32.gmra.mxu0 %v4513
        %v4532 = vpop.f32.mrf.mxu0
        %v4533 = vadd.f32 0.0, %v4532
        %4534 = vdwg.mxu0
        %4535 = vrot.lane.b32.xlu0 %v715, 112
        %v4536 = vpop.permute.xlu0 %4535
        %v4539 = vsel %vm744, %v4072, 0
        %4541 = vmatpush.msra.mxu0 0.0
        %4542 = vmatpush.msra.mxu0 0.0
        %4543 = vmatpush.msra.mxu0 0.0
        %4544 = vmatpush.msra.mxu0 0.0
        %4545 = vmatpush.msra.mxu0 0.0
        %4546 = vmatpush.msra.mxu0 0.0
        %4547 = vmatpush.msra.mxu0 0.0
        %4548 = vmatpush.msra.mxu0 0.0
        %4549 = vmatpush.msra.mxu0 0.0
        %4550 = vmatpush.msra.mxu0 0.0
        %4551 = vmatpush.msra.mxu0 0.0
        %4552 = vmatpush.msra.mxu0 0.0
        %4553 = vmatpush.msra.mxu0 0.0
        %4554 = vmatpush.msra.mxu0 0.0
        %4555 = vmatpush.msra.mxu0 0.0
        %4556 = vmatpush.msra.mxu0 %v4536
        %4557 = vmatmul.f32.gmra.mxu0 %v4539
        %v4558 = vpop.f32.mrf.mxu0
        %v4559 = vadd.f32 0.0, %v4558
        %4560 = vdwg.mxu0
        %4561 = vrot.lane.b32.xlu0 %v718, 112
        %v4562 = vpop.permute.xlu0 %4561
        %v4565 = vsel %vm744, %v4073, 0
        %4567 = vmatpush.msra.mxu0 0.0
        %4568 = vmatpush.msra.mxu0 0.0
        %4569 = vmatpush.msra.mxu0 0.0
        %4570 = vmatpush.msra.mxu0 0.0
        %4571 = vmatpush.msra.mxu0 0.0
        %4572 = vmatpush.msra.mxu0 0.0
        %4573 = vmatpush.msra.mxu0 0.0
        %4574 = vmatpush.msra.mxu0 0.0
        %4575 = vmatpush.msra.mxu0 0.0
        %4576 = vmatpush.msra.mxu0 0.0
        %4577 = vmatpush.msra.mxu0 0.0
        %4578 = vmatpush.msra.mxu0 0.0
        %4579 = vmatpush.msra.mxu0 0.0
        %4580 = vmatpush.msra.mxu0 0.0
        %4581 = vmatpush.msra.mxu0 0.0
        %4582 = vmatpush.msra.mxu0 %v4562
        %4583 = vmatmul.f32.gmra.mxu0 %v4565
        %v4584 = vpop.f32.mrf.mxu0
        %v4585 = vadd.f32 0.0, %v4584
        %4586 = vdwg.mxu0
        %4587 = vrot.lane.b32.xlu0 %v721, 112
        %v4588 = vpop.permute.xlu0 %4587
        %v4591 = vsel %vm744, %v4074, 0
        %4593 = vmatpush.msra.mxu0 0.0
        %4594 = vmatpush.msra.mxu0 0.0
        %4595 = vmatpush.msra.mxu0 0.0
        %4596 = vmatpush.msra.mxu0 0.0
        %4597 = vmatpush.msra.mxu0 0.0
        %4598 = vmatpush.msra.mxu0 0.0
        %4599 = vmatpush.msra.mxu0 0.0
        %4600 = vmatpush.msra.mxu0 0.0
        %4601 = vmatpush.msra.mxu0 0.0
        %4602 = vmatpush.msra.mxu0 0.0
        %4603 = vmatpush.msra.mxu0 0.0
        %4604 = vmatpush.msra.mxu0 0.0
        %4605 = vmatpush.msra.mxu0 0.0
        %4606 = vmatpush.msra.mxu0 0.0
        %4607 = vmatpush.msra.mxu0 0.0
        %4608 = vmatpush.msra.mxu0 %v4588
        %4609 = vmatmul.f32.gmra.mxu0 %v4591
        %v4610 = vpop.f32.mrf.mxu0
        %v4611 = vadd.f32 0.0, %v4610
        %4612 = vdwg.mxu0
        %4613 = vrot.lane.b32.xlu0 %v724, 112
        %v4614 = vpop.permute.xlu0 %4613
        %v4617 = vsel %vm744, %v4075, 0
        %4619 = vmatpush.msra.mxu0 0.0
        %4620 = vmatpush.msra.mxu0 0.0
        %4621 = vmatpush.msra.mxu0 0.0
        %4622 = vmatpush.msra.mxu0 0.0
        %4623 = vmatpush.msra.mxu0 0.0
        %4624 = vmatpush.msra.mxu0 0.0
        %4625 = vmatpush.msra.mxu0 0.0
        %4626 = vmatpush.msra.mxu0 0.0
        %4627 = vmatpush.msra.mxu0 0.0
        %4628 = vmatpush.msra.mxu0 0.0
        %4629 = vmatpush.msra.mxu0 0.0
        %4630 = vmatpush.msra.mxu0 0.0
        %4631 = vmatpush.msra.mxu0 0.0
        %4632 = vmatpush.msra.mxu0 0.0
        %4633 = vmatpush.msra.mxu0 0.0
        %4634 = vmatpush.msra.mxu0 %v4614
        %4635 = vmatmul.f32.gmra.mxu0 %v4617
        %v4636 = vpop.f32.mrf.mxu0
        %v4637 = vadd.f32 0.0, %v4636
        %4638 = vdwg.mxu0
        %4639 = vrot.lane.b32.xlu0 %v727, 112
        %v4640 = vpop.permute.xlu0 %4639
        %v4643 = vsel %vm744, %v4076, 0
        %4645 = vmatpush.msra.mxu0 0.0
        %4646 = vmatpush.msra.mxu0 0.0
        %4647 = vmatpush.msra.mxu0 0.0
        %4648 = vmatpush.msra.mxu0 0.0
        %4649 = vmatpush.msra.mxu0 0.0
        %4650 = vmatpush.msra.mxu0 0.0
        %4651 = vmatpush.msra.mxu0 0.0
        %4652 = vmatpush.msra.mxu0 0.0
        %4653 = vmatpush.msra.mxu0 0.0
        %4654 = vmatpush.msra.mxu0 0.0
        %4655 = vmatpush.msra.mxu0 0.0
        %4656 = vmatpush.msra.mxu0 0.0
        %4657 = vmatpush.msra.mxu0 0.0
        %4658 = vmatpush.msra.mxu0 0.0
        %4659 = vmatpush.msra.mxu0 0.0
        %4660 = vmatpush.msra.mxu0 %v4640
        %4661 = vmatmul.f32.gmra.mxu0 %v4643
        %v4662 = vpop.f32.mrf.mxu0
        %v4663 = vadd.f32 0.0, %v4662
        %4664 = vdwg.mxu0
        %4665 = vrot.lane.b32.xlu0 %v730, 112
        %v4666 = vpop.permute.xlu0 %4665
        %v4669 = vsel %vm744, %v4077, 0
        %4671 = vmatpush.msra.mxu0 0.0
        %4672 = vmatpush.msra.mxu0 0.0
        %4673 = vmatpush.msra.mxu0 0.0
        %4674 = vmatpush.msra.mxu0 0.0
        %4675 = vmatpush.msra.mxu0 0.0
        %4676 = vmatpush.msra.mxu0 0.0
        %4677 = vmatpush.msra.mxu0 0.0
        %4678 = vmatpush.msra.mxu0 0.0
        %4679 = vmatpush.msra.mxu0 0.0
        %4680 = vmatpush.msra.mxu0 0.0
        %4681 = vmatpush.msra.mxu0 0.0
        %4682 = vmatpush.msra.mxu0 0.0
        %4683 = vmatpush.msra.mxu0 0.0
        %4684 = vmatpush.msra.mxu0 0.0
        %4685 = vmatpush.msra.mxu0 0.0
        %4686 = vmatpush.msra.mxu0 %v4666
        %4687 = vmatmul.f32.gmra.mxu0 %v4669
        %v4688 = vpop.f32.mrf.mxu0
        %v4689 = vadd.f32 0.0, %v4688
        %4690 = vdwg.mxu0
        %4691 = vrot.lane.b32.xlu0 %v733, 112
        %v4692 = vpop.permute.xlu0 %4691
        %v4695 = vsel %vm744, %v4078, 0
        %4697 = vmatpush.msra.mxu0 0.0
        %4698 = vmatpush.msra.mxu0 0.0
        %4699 = vmatpush.msra.mxu0 0.0
        %4700 = vmatpush.msra.mxu0 0.0
        %4701 = vmatpush.msra.mxu0 0.0
        %4702 = vmatpush.msra.mxu0 0.0
        %4703 = vmatpush.msra.mxu0 0.0
        %4704 = vmatpush.msra.mxu0 0.0
        %4705 = vmatpush.msra.mxu0 0.0
        %4706 = vmatpush.msra.mxu0 0.0
        %4707 = vmatpush.msra.mxu0 0.0
        %4708 = vmatpush.msra.mxu0 0.0
        %4709 = vmatpush.msra.mxu0 0.0
        %4710 = vmatpush.msra.mxu0 0.0
        %4711 = vmatpush.msra.mxu0 0.0
        %4712 = vmatpush.msra.mxu0 %v4692
        %4713 = vmatmul.f32.gmra.mxu0 %v4695
        %v4714 = vpop.f32.mrf.mxu0
        %v4715 = vadd.f32 0.0, %v4714
        %4716 = vdwg.mxu0
        %4717 = vrot.lane.b32.xlu0 %v736, 112
        %v4718 = vpop.permute.xlu0 %4717
        %v4721 = vsel %vm744, %v4079, 0
        %4723 = vmatpush.msra.mxu0 0.0
        %4724 = vmatpush.msra.mxu0 0.0
        %4725 = vmatpush.msra.mxu0 0.0
        %4726 = vmatpush.msra.mxu0 0.0
        %4727 = vmatpush.msra.mxu0 0.0
        %4728 = vmatpush.msra.mxu0 0.0
        %4729 = vmatpush.msra.mxu0 0.0
        %4730 = vmatpush.msra.mxu0 0.0
        %4731 = vmatpush.msra.mxu0 0.0
        %4732 = vmatpush.msra.mxu0 0.0
        %4733 = vmatpush.msra.mxu0 0.0
        %4734 = vmatpush.msra.mxu0 0.0
        %4735 = vmatpush.msra.mxu0 0.0
        %4736 = vmatpush.msra.mxu0 0.0
        %4737 = vmatpush.msra.mxu0 0.0
        %4738 = vmatpush.msra.mxu0 %v4718
        %4739 = vmatmul.f32.gmra.mxu0 %v4721
        %v4740 = vpop.f32.mrf.mxu0
        %v4741 = vadd.f32 0.0, %v4740
        %4742 = vdwg.mxu0
        %4743 = vrot.lane.b32.xlu0 %v739, 112
        %v4744 = vpop.permute.xlu0 %4743
        %v4747 = vsel %vm744, %v4080, 0
        %4749 = vmatpush.msra.mxu0 0.0
        %4750 = vmatpush.msra.mxu0 0.0
        %4751 = vmatpush.msra.mxu0 0.0
        %4752 = vmatpush.msra.mxu0 0.0
        %4753 = vmatpush.msra.mxu0 0.0
        %4754 = vmatpush.msra.mxu0 0.0
        %4755 = vmatpush.msra.mxu0 0.0
        %4756 = vmatpush.msra.mxu0 0.0
        %4757 = vmatpush.msra.mxu0 0.0
        %4758 = vmatpush.msra.mxu0 0.0
        %4759 = vmatpush.msra.mxu0 0.0
        %4760 = vmatpush.msra.mxu0 0.0
        %4761 = vmatpush.msra.mxu0 0.0
        %4762 = vmatpush.msra.mxu0 0.0
        %4763 = vmatpush.msra.mxu0 0.0
        %4764 = vmatpush.msra.mxu0 %v4744
        %4765 = vmatmul.f32.gmra.mxu0 %v4747
        %v4766 = vpop.f32.mrf.mxu0
        %v4767 = vadd.f32 0.0, %v4766
        %4768 = vdwg.mxu0
        %4769 = vrot.lane.b32.xlu0 %v742, 112
        %v4770 = vpop.permute.xlu0 %4769
        %v4773 = vsel %vm744, %v4081, 0
        %4775 = vmatpush.msra.mxu0 0.0
        %4776 = vmatpush.msra.mxu0 0.0
        %4777 = vmatpush.msra.mxu0 0.0
        %4778 = vmatpush.msra.mxu0 0.0
        %4779 = vmatpush.msra.mxu0 0.0
        %4780 = vmatpush.msra.mxu0 0.0
        %4781 = vmatpush.msra.mxu0 0.0
        %4782 = vmatpush.msra.mxu0 0.0
        %4783 = vmatpush.msra.mxu0 0.0
        %4784 = vmatpush.msra.mxu0 0.0
        %4785 = vmatpush.msra.mxu0 0.0
        %4786 = vmatpush.msra.mxu0 0.0
        %4787 = vmatpush.msra.mxu0 0.0
        %4788 = vmatpush.msra.mxu0 0.0
        %4789 = vmatpush.msra.mxu0 0.0
        %4790 = vmatpush.msra.mxu0 %v4770
        %4791 = vmatmul.f32.gmra.mxu0 %v4773
        %v4792 = vpop.f32.mrf.mxu0
        %v4793 = vadd.f32 0.0, %v4792
        %4794 = vdwg.mxu0
        %4811 = vrot.lane.b32.xlu0 %v4403, 16
        %v4812 = vpop.permute.xlu0 %4811
        %4813 = vrot.lane.b32.xlu0 %v4429, 16
        %v4814 = vpop.permute.xlu0 %4813
        %4815 = vrot.lane.b32.xlu0 %v4455, 16
        %v4816 = vpop.permute.xlu0 %4815
        %4817 = vrot.lane.b32.xlu0 %v4481, 16
        %v4818 = vpop.permute.xlu0 %4817
        %4819 = vrot.lane.b32.xlu0 %v4507, 16
        %v4820 = vpop.permute.xlu0 %4819
        %4821 = vrot.lane.b32.xlu0 %v4533, 16
        %v4822 = vpop.permute.xlu0 %4821
        %4823 = vrot.lane.b32.xlu0 %v4559, 16
        %v4824 = vpop.permute.xlu0 %4823
        %4825 = vrot.lane.b32.xlu0 %v4585, 16
        %v4826 = vpop.permute.xlu0 %4825
        %4827 = vrot.lane.b32.xlu0 %v4611, 16
        %v4828 = vpop.permute.xlu0 %4827
        %4829 = vrot.lane.b32.xlu0 %v4637, 16
        %v4830 = vpop.permute.xlu0 %4829
        %4831 = vrot.lane.b32.xlu0 %v4663, 16
        %v4832 = vpop.permute.xlu0 %4831
        %4833 = vrot.lane.b32.xlu0 %v4689, 16
        %v4834 = vpop.permute.xlu0 %4833
        %4835 = vrot.lane.b32.xlu0 %v4715, 16
        %v4836 = vpop.permute.xlu0 %4835
        %4837 = vrot.lane.b32.xlu0 %v4741, 16
        %v4838 = vpop.permute.xlu0 %4837
        %4839 = vrot.lane.b32.xlu0 %v4767, 16
        %v4840 = vpop.permute.xlu0 %4839
        %4841 = vrot.lane.b32.xlu0 %v4793, 16
        %v4842 = vpop.permute.xlu0 %4841
        %vm4859 = vcmask 195712
        %4860 = vst.msk [vmem:[#allocation2] sm:$0xff] %vm4859, %v4812
        %4861 = vst.msk [vmem:[#allocation2 + $0x8] sm:$0xff] %vm4859, %v4814
        %4862 = vst.msk [vmem:[#allocation2 + $0x10] sm:$0xff] %vm4859, %v4816
        %4863 = vst.msk [vmem:[#allocation2 + $0x18] sm:$0xff] %vm4859, %v4818
        %4864 = vst.msk [vmem:[#allocation2 + $0x20] sm:$0xff] %vm4859, %v4820
        %4865 = vst.msk [vmem:[#allocation2 + $0x28] sm:$0xff] %vm4859, %v4822
        %4866 = vst.msk [vmem:[#allocation2 + $0x30] sm:$0xff] %vm4859, %v4824
        %4867 = vst.msk [vmem:[#allocation2 + $0x38] sm:$0xff] %vm4859, %v4826
        %4868 = vst.msk [vmem:[#allocation2 + $0x40] sm:$0xff] %vm4859, %v4828
        %4869 = vst.msk [vmem:[#allocation2 + $0x48] sm:$0xff] %vm4859, %v4830
        %4870 = vst.msk [vmem:[#allocation2 + $0x50] sm:$0xff] %vm4859, %v4832
        %4871 = vst.msk [vmem:[#allocation2 + $0x58] sm:$0xff] %vm4859, %v4834
        %4872 = vst.msk [vmem:[#allocation2 + $0x60] sm:$0xff] %vm4859, %v4836
        %4873 = vst.msk [vmem:[#allocation2 + $0x68] sm:$0xff] %vm4859, %v4838
        %4874 = vst.msk [vmem:[#allocation2 + $0x70] sm:$0xff] %vm4859, %v4840
        %4875 = vst.msk [vmem:[#allocation2 + $0x78] sm:$0xff] %vm4859, %v4842
        %4876 = vrot.lane.b32.xlu0 %v551, 104
        %v4877 = vpop.permute.xlu0 %4876
        %4878 = vrot.lane.b32.xlu0 %v624, 104
        %v4879 = vpop.permute.xlu0 %4878
        %v4880 = vsel %vm744, %v4877, 0
        %v4882 = vsel %vm744, %v4879, 0
        %4884 = vmatpush.xpose.msra.mxu0 0.0
        %4885 = vmatpush.xpose.msra.mxu0 0.0
        %4886 = vmatpush.xpose.msra.mxu0 0.0
        %4887 = vmatpush.xpose.msra.mxu0 0.0
        %4888 = vmatpush.xpose.msra.mxu0 0.0
        %4889 = vmatpush.xpose.msra.mxu0 0.0
        %4890 = vmatpush.xpose.msra.mxu0 0.0
        %4891 = vmatpush.xpose.msra.mxu0 0.0
        %4892 = vmatpush.xpose.msra.mxu0 0.0
        %4893 = vmatpush.xpose.msra.mxu0 0.0
        %4894 = vmatpush.xpose.msra.mxu0 0.0
        %4895 = vmatpush.xpose.msra.mxu0 0.0
        %4896 = vmatpush.xpose.msra.mxu0 0.0
        %4897 = vmatpush.xpose.msra.mxu0 0.0
        %4898 = vmatpush.xpose.msra.mxu0 0.0
        %4899 = vmatpush.xpose.msra.mxu0 %v4882
        %4900 = vmatmul.f32.gmra.mxu0 %v4880
        %v4901 = vpop.f32.mrf.mxu0
        %v4902 = vadd.f32 0.0, %v4901
        %4903 = vdwg.mxu0
        %4904 = vrot.lane.b32.xlu0 %v554, 104
        %v4905 = vpop.permute.xlu0 %4904
        %4906 = vrot.lane.b32.xlu0 %v627, 104
        %v4907 = vpop.permute.xlu0 %4906
        %v4908 = vsel %vm744, %v4905, 0
        %v4910 = vsel %vm744, %v4907, 0
        %4912 = vmatpush.xpose.msra.mxu0 0.0
        %4913 = vmatpush.xpose.msra.mxu0 0.0
        %4914 = vmatpush.xpose.msra.mxu0 0.0
        %4915 = vmatpush.xpose.msra.mxu0 0.0
        %4916 = vmatpush.xpose.msra.mxu0 0.0
        %4917 = vmatpush.xpose.msra.mxu0 0.0
        %4918 = vmatpush.xpose.msra.mxu0 0.0
        %4919 = vmatpush.xpose.msra.mxu0 0.0
        %4920 = vmatpush.xpose.msra.mxu0 0.0
        %4921 = vmatpush.xpose.msra.mxu0 0.0
        %4922 = vmatpush.xpose.msra.mxu0 0.0
        %4923 = vmatpush.xpose.msra.mxu0 0.0
        %4924 = vmatpush.xpose.msra.mxu0 0.0
        %4925 = vmatpush.xpose.msra.mxu0 0.0
        %4926 = vmatpush.xpose.msra.mxu0 0.0
        %4927 = vmatpush.xpose.msra.mxu0 %v4910
        %4928 = vmatmul.f32.gmra.mxu0 %v4908
        %v4929 = vpop.f32.mrf.mxu0
        %v4930 = vadd.f32 0.0, %v4929
        %4931 = vdwg.mxu0
        %4932 = vrot.lane.b32.xlu0 %v557, 104
        %v4933 = vpop.permute.xlu0 %4932
        %4934 = vrot.lane.b32.xlu0 %v630, 104
        %v4935 = vpop.permute.xlu0 %4934
        %v4936 = vsel %vm744, %v4933, 0
        %v4938 = vsel %vm744, %v4935, 0
        %4940 = vmatpush.xpose.msra.mxu0 0.0
        %4941 = vmatpush.xpose.msra.mxu0 0.0
        %4942 = vmatpush.xpose.msra.mxu0 0.0
        %4943 = vmatpush.xpose.msra.mxu0 0.0
        %4944 = vmatpush.xpose.msra.mxu0 0.0
        %4945 = vmatpush.xpose.msra.mxu0 0.0
        %4946 = vmatpush.xpose.msra.mxu0 0.0
        %4947 = vmatpush.xpose.msra.mxu0 0.0
        %4948 = vmatpush.xpose.msra.mxu0 0.0
        %4949 = vmatpush.xpose.msra.mxu0 0.0
        %4950 = vmatpush.xpose.msra.mxu0 0.0
        %4951 = vmatpush.xpose.msra.mxu0 0.0
        %4952 = vmatpush.xpose.msra.mxu0 0.0
        %4953 = vmatpush.xpose.msra.mxu0 0.0
        %4954 = vmatpush.xpose.msra.mxu0 0.0
        %4955 = vmatpush.xpose.msra.mxu0 %v4938
        %4956 = vmatmul.f32.gmra.mxu0 %v4936
        %v4957 = vpop.f32.mrf.mxu0
        %v4958 = vadd.f32 0.0, %v4957
        %4959 = vdwg.mxu0
        %4960 = vrot.lane.b32.xlu0 %v560, 104
        %v4961 = vpop.permute.xlu0 %4960
        %4962 = vrot.lane.b32.xlu0 %v633, 104
        %v4963 = vpop.permute.xlu0 %4962
        %v4964 = vsel %vm744, %v4961, 0
        %v4966 = vsel %vm744, %v4963, 0
        %4968 = vmatpush.xpose.msra.mxu0 0.0
        %4969 = vmatpush.xpose.msra.mxu0 0.0
        %4970 = vmatpush.xpose.msra.mxu0 0.0
        %4971 = vmatpush.xpose.msra.mxu0 0.0
        %4972 = vmatpush.xpose.msra.mxu0 0.0
        %4973 = vmatpush.xpose.msra.mxu0 0.0
        %4974 = vmatpush.xpose.msra.mxu0 0.0
        %4975 = vmatpush.xpose.msra.mxu0 0.0
        %4976 = vmatpush.xpose.msra.mxu0 0.0
        %4977 = vmatpush.xpose.msra.mxu0 0.0
        %4978 = vmatpush.xpose.msra.mxu0 0.0
        %4979 = vmatpush.xpose.msra.mxu0 0.0
        %4980 = vmatpush.xpose.msra.mxu0 0.0
        %4981 = vmatpush.xpose.msra.mxu0 0.0
        %4982 = vmatpush.xpose.msra.mxu0 0.0
        %4983 = vmatpush.xpose.msra.mxu0 %v4966
        %4984 = vmatmul.f32.gmra.mxu0 %v4964
        %v4985 = vpop.f32.mrf.mxu0
        %v4986 = vadd.f32 0.0, %v4985
        %4987 = vdwg.mxu0
        %4988 = vrot.lane.b32.xlu0 %v563, 104
        %v4989 = vpop.permute.xlu0 %4988
        %4990 = vrot.lane.b32.xlu0 %v636, 104
        %v4991 = vpop.permute.xlu0 %4990
        %v4992 = vsel %vm744, %v4989, 0
        %v4994 = vsel %vm744, %v4991, 0
        %4996 = vmatpush.xpose.msra.mxu0 0.0
        %4997 = vmatpush.xpose.msra.mxu0 0.0
        %4998 = vmatpush.xpose.msra.mxu0 0.0
        %4999 = vmatpush.xpose.msra.mxu0 0.0
        %5000 = vmatpush.xpose.msra.mxu0 0.0
        %5001 = vmatpush.xpose.msra.mxu0 0.0
        %5002 = vmatpush.xpose.msra.mxu0 0.0
        %5003 = vmatpush.xpose.msra.mxu0 0.0
        %5004 = vmatpush.xpose.msra.mxu0 0.0
        %5005 = vmatpush.xpose.msra.mxu0 0.0
        %5006 = vmatpush.xpose.msra.mxu0 0.0
        %5007 = vmatpush.xpose.msra.mxu0 0.0
        %5008 = vmatpush.xpose.msra.mxu0 0.0
        %5009 = vmatpush.xpose.msra.mxu0 0.0
        %5010 = vmatpush.xpose.msra.mxu0 0.0
        %5011 = vmatpush.xpose.msra.mxu0 %v4994
        %5012 = vmatmul.f32.gmra.mxu0 %v4992
        %v5013 = vpop.f32.mrf.mxu0
        %v5014 = vadd.f32 0.0, %v5013
        %5015 = vdwg.mxu0
        %5016 = vrot.lane.b32.xlu0 %v566, 104
        %v5017 = vpop.permute.xlu0 %5016
        %5018 = vrot.lane.b32.xlu0 %v639, 104
        %v5019 = vpop.permute.xlu0 %5018
        %v5020 = vsel %vm744, %v5017, 0
        %v5022 = vsel %vm744, %v5019, 0
        %5024 = vmatpush.xpose.msra.mxu0 0.0
        %5025 = vmatpush.xpose.msra.mxu0 0.0
        %5026 = vmatpush.xpose.msra.mxu0 0.0
        %5027 = vmatpush.xpose.msra.mxu0 0.0
        %5028 = vmatpush.xpose.msra.mxu0 0.0
        %5029 = vmatpush.xpose.msra.mxu0 0.0
        %5030 = vmatpush.xpose.msra.mxu0 0.0
        %5031 = vmatpush.xpose.msra.mxu0 0.0
        %5032 = vmatpush.xpose.msra.mxu0 0.0
        %5033 = vmatpush.xpose.msra.mxu0 0.0
        %5034 = vmatpush.xpose.msra.mxu0 0.0
        %5035 = vmatpush.xpose.msra.mxu0 0.0
        %5036 = vmatpush.xpose.msra.mxu0 0.0
        %5037 = vmatpush.xpose.msra.mxu0 0.0
        %5038 = vmatpush.xpose.msra.mxu0 0.0
        %5039 = vmatpush.xpose.msra.mxu0 %v5022
        %5040 = vmatmul.f32.gmra.mxu0 %v5020
        %v5041 = vpop.f32.mrf.mxu0
        %v5042 = vadd.f32 0.0, %v5041
        %5043 = vdwg.mxu0
        %5044 = vrot.lane.b32.xlu0 %v569, 104
        %v5045 = vpop.permute.xlu0 %5044
        %5046 = vrot.lane.b32.xlu0 %v642, 104
        %v5047 = vpop.permute.xlu0 %5046
        %v5048 = vsel %vm744, %v5045, 0
        %v5050 = vsel %vm744, %v5047, 0
        %5052 = vmatpush.xpose.msra.mxu0 0.0
        %5053 = vmatpush.xpose.msra.mxu0 0.0
        %5054 = vmatpush.xpose.msra.mxu0 0.0
        %5055 = vmatpush.xpose.msra.mxu0 0.0
        %5056 = vmatpush.xpose.msra.mxu0 0.0
        %5057 = vmatpush.xpose.msra.mxu0 0.0
        %5058 = vmatpush.xpose.msra.mxu0 0.0
        %5059 = vmatpush.xpose.msra.mxu0 0.0
        %5060 = vmatpush.xpose.msra.mxu0 0.0
        %5061 = vmatpush.xpose.msra.mxu0 0.0
        %5062 = vmatpush.xpose.msra.mxu0 0.0
        %5063 = vmatpush.xpose.msra.mxu0 0.0
        %5064 = vmatpush.xpose.msra.mxu0 0.0
        %5065 = vmatpush.xpose.msra.mxu0 0.0
        %5066 = vmatpush.xpose.msra.mxu0 0.0
        %5067 = vmatpush.xpose.msra.mxu0 %v5050
        %5068 = vmatmul.f32.gmra.mxu0 %v5048
        %v5069 = vpop.f32.mrf.mxu0
        %v5070 = vadd.f32 0.0, %v5069
        %5071 = vdwg.mxu0
        %5072 = vrot.lane.b32.xlu0 %v572, 104
        %v5073 = vpop.permute.xlu0 %5072
        %5074 = vrot.lane.b32.xlu0 %v645, 104
        %v5075 = vpop.permute.xlu0 %5074
        %v5076 = vsel %vm744, %v5073, 0
        %v5078 = vsel %vm744, %v5075, 0
        %5080 = vmatpush.xpose.msra.mxu0 0.0
        %5081 = vmatpush.xpose.msra.mxu0 0.0
        %5082 = vmatpush.xpose.msra.mxu0 0.0
        %5083 = vmatpush.xpose.msra.mxu0 0.0
        %5084 = vmatpush.xpose.msra.mxu0 0.0
        %5085 = vmatpush.xpose.msra.mxu0 0.0
        %5086 = vmatpush.xpose.msra.mxu0 0.0
        %5087 = vmatpush.xpose.msra.mxu0 0.0
        %5088 = vmatpush.xpose.msra.mxu0 0.0
        %5089 = vmatpush.xpose.msra.mxu0 0.0
        %5090 = vmatpush.xpose.msra.mxu0 0.0
        %5091 = vmatpush.xpose.msra.mxu0 0.0
        %5092 = vmatpush.xpose.msra.mxu0 0.0
        %5093 = vmatpush.xpose.msra.mxu0 0.0
        %5094 = vmatpush.xpose.msra.mxu0 0.0
        %5095 = vmatpush.xpose.msra.mxu0 %v5078
        %5096 = vmatmul.f32.gmra.mxu0 %v5076
        %v5097 = vpop.f32.mrf.mxu0
        %v5098 = vadd.f32 0.0, %v5097
        %5099 = vdwg.mxu0
        %5100 = vrot.lane.b32.xlu0 %v575, 104
        %v5101 = vpop.permute.xlu0 %5100
        %5102 = vrot.lane.b32.xlu0 %v648, 104
        %v5103 = vpop.permute.xlu0 %5102
        %v5104 = vsel %vm744, %v5101, 0
        %v5106 = vsel %vm744, %v5103, 0
        %5108 = vmatpush.xpose.msra.mxu0 0.0
        %5109 = vmatpush.xpose.msra.mxu0 0.0
        %5110 = vmatpush.xpose.msra.mxu0 0.0
        %5111 = vmatpush.xpose.msra.mxu0 0.0
        %5112 = vmatpush.xpose.msra.mxu0 0.0
        %5113 = vmatpush.xpose.msra.mxu0 0.0
        %5114 = vmatpush.xpose.msra.mxu0 0.0
        %5115 = vmatpush.xpose.msra.mxu0 0.0
        %5116 = vmatpush.xpose.msra.mxu0 0.0
        %5117 = vmatpush.xpose.msra.mxu0 0.0
        %5118 = vmatpush.xpose.msra.mxu0 0.0
        %5119 = vmatpush.xpose.msra.mxu0 0.0
        %5120 = vmatpush.xpose.msra.mxu0 0.0
        %5121 = vmatpush.xpose.msra.mxu0 0.0
        %5122 = vmatpush.xpose.msra.mxu0 0.0
        %5123 = vmatpush.xpose.msra.mxu0 %v5106
        %5124 = vmatmul.f32.gmra.mxu0 %v5104
        %v5125 = vpop.f32.mrf.mxu0
        %v5126 = vadd.f32 0.0, %v5125
        %5127 = vdwg.mxu0
        %5128 = vrot.lane.b32.xlu0 %v578, 104
        %v5129 = vpop.permute.xlu0 %5128
        %5130 = vrot.lane.b32.xlu0 %v651, 104
        %v5131 = vpop.permute.xlu0 %5130
        %v5132 = vsel %vm744, %v5129, 0
        %v5134 = vsel %vm744, %v5131, 0
        %5136 = vmatpush.xpose.msra.mxu0 0.0
        %5137 = vmatpush.xpose.msra.mxu0 0.0
        %5138 = vmatpush.xpose.msra.mxu0 0.0
        %5139 = vmatpush.xpose.msra.mxu0 0.0
        %5140 = vmatpush.xpose.msra.mxu0 0.0
        %5141 = vmatpush.xpose.msra.mxu0 0.0
        %5142 = vmatpush.xpose.msra.mxu0 0.0
        %5143 = vmatpush.xpose.msra.mxu0 0.0
        %5144 = vmatpush.xpose.msra.mxu0 0.0
        %5145 = vmatpush.xpose.msra.mxu0 0.0
        %5146 = vmatpush.xpose.msra.mxu0 0.0
        %5147 = vmatpush.xpose.msra.mxu0 0.0
        %5148 = vmatpush.xpose.msra.mxu0 0.0
        %5149 = vmatpush.xpose.msra.mxu0 0.0
        %5150 = vmatpush.xpose.msra.mxu0 0.0
        %5151 = vmatpush.xpose.msra.mxu0 %v5134
        %5152 = vmatmul.f32.gmra.mxu0 %v5132
        %v5153 = vpop.f32.mrf.mxu0
        %v5154 = vadd.f32 0.0, %v5153
        %5155 = vdwg.mxu0
        %5156 = vrot.lane.b32.xlu0 %v581, 104
        %v5157 = vpop.permute.xlu0 %5156
        %5158 = vrot.lane.b32.xlu0 %v654, 104
        %v5159 = vpop.permute.xlu0 %5158
        %v5160 = vsel %vm744, %v5157, 0
        %v5162 = vsel %vm744, %v5159, 0
        %5164 = vmatpush.xpose.msra.mxu0 0.0
        %5165 = vmatpush.xpose.msra.mxu0 0.0
        %5166 = vmatpush.xpose.msra.mxu0 0.0
        %5167 = vmatpush.xpose.msra.mxu0 0.0
        %5168 = vmatpush.xpose.msra.mxu0 0.0
        %5169 = vmatpush.xpose.msra.mxu0 0.0
        %5170 = vmatpush.xpose.msra.mxu0 0.0
        %5171 = vmatpush.xpose.msra.mxu0 0.0
        %5172 = vmatpush.xpose.msra.mxu0 0.0
        %5173 = vmatpush.xpose.msra.mxu0 0.0
        %5174 = vmatpush.xpose.msra.mxu0 0.0
        %5175 = vmatpush.xpose.msra.mxu0 0.0
        %5176 = vmatpush.xpose.msra.mxu0 0.0
        %5177 = vmatpush.xpose.msra.mxu0 0.0
        %5178 = vmatpush.xpose.msra.mxu0 0.0
        %5179 = vmatpush.xpose.msra.mxu0 %v5162
        %5180 = vmatmul.f32.gmra.mxu0 %v5160
        %v5181 = vpop.f32.mrf.mxu0
        %v5182 = vadd.f32 0.0, %v5181
        %5183 = vdwg.mxu0
        %5184 = vrot.lane.b32.xlu0 %v584, 104
        %v5185 = vpop.permute.xlu0 %5184
        %5186 = vrot.lane.b32.xlu0 %v657, 104
        %v5187 = vpop.permute.xlu0 %5186
        %v5188 = vsel %vm744, %v5185, 0
        %v5190 = vsel %vm744, %v5187, 0
        %5192 = vmatpush.xpose.msra.mxu0 0.0
        %5193 = vmatpush.xpose.msra.mxu0 0.0
        %5194 = vmatpush.xpose.msra.mxu0 0.0
        %5195 = vmatpush.xpose.msra.mxu0 0.0
        %5196 = vmatpush.xpose.msra.mxu0 0.0
        %5197 = vmatpush.xpose.msra.mxu0 0.0
        %5198 = vmatpush.xpose.msra.mxu0 0.0
        %5199 = vmatpush.xpose.msra.mxu0 0.0
        %5200 = vmatpush.xpose.msra.mxu0 0.0
        %5201 = vmatpush.xpose.msra.mxu0 0.0
        %5202 = vmatpush.xpose.msra.mxu0 0.0
        %5203 = vmatpush.xpose.msra.mxu0 0.0
        %5204 = vmatpush.xpose.msra.mxu0 0.0
        %5205 = vmatpush.xpose.msra.mxu0 0.0
        %5206 = vmatpush.xpose.msra.mxu0 0.0
        %5207 = vmatpush.xpose.msra.mxu0 %v5190
        %5208 = vmatmul.f32.gmra.mxu0 %v5188
        %v5209 = vpop.f32.mrf.mxu0
        %v5210 = vadd.f32 0.0, %v5209
        %5211 = vdwg.mxu0
        %5212 = vrot.lane.b32.xlu0 %v587, 104
        %v5213 = vpop.permute.xlu0 %5212
        %5214 = vrot.lane.b32.xlu0 %v660, 104
        %v5215 = vpop.permute.xlu0 %5214
        %v5216 = vsel %vm744, %v5213, 0
        %v5218 = vsel %vm744, %v5215, 0
        %5220 = vmatpush.xpose.msra.mxu0 0.0
        %5221 = vmatpush.xpose.msra.mxu0 0.0
        %5222 = vmatpush.xpose.msra.mxu0 0.0
        %5223 = vmatpush.xpose.msra.mxu0 0.0
        %5224 = vmatpush.xpose.msra.mxu0 0.0
        %5225 = vmatpush.xpose.msra.mxu0 0.0
        %5226 = vmatpush.xpose.msra.mxu0 0.0
        %5227 = vmatpush.xpose.msra.mxu0 0.0
        %5228 = vmatpush.xpose.msra.mxu0 0.0
        %5229 = vmatpush.xpose.msra.mxu0 0.0
        %5230 = vmatpush.xpose.msra.mxu0 0.0
        %5231 = vmatpush.xpose.msra.mxu0 0.0
        %5232 = vmatpush.xpose.msra.mxu0 0.0
        %5233 = vmatpush.xpose.msra.mxu0 0.0
        %5234 = vmatpush.xpose.msra.mxu0 0.0
        %5235 = vmatpush.xpose.msra.mxu0 %v5218
        %5236 = vmatmul.f32.gmra.mxu0 %v5216
        %v5237 = vpop.f32.mrf.mxu0
        %v5238 = vadd.f32 0.0, %v5237
        %5239 = vdwg.mxu0
        %5240 = vrot.lane.b32.xlu0 %v590, 104
        %v5241 = vpop.permute.xlu0 %5240
        %5242 = vrot.lane.b32.xlu0 %v663, 104
        %v5243 = vpop.permute.xlu0 %5242
        %v5244 = vsel %vm744, %v5241, 0
        %v5246 = vsel %vm744, %v5243, 0
        %5248 = vmatpush.xpose.msra.mxu0 0.0
        %5249 = vmatpush.xpose.msra.mxu0 0.0
        %5250 = vmatpush.xpose.msra.mxu0 0.0
        %5251 = vmatpush.xpose.msra.mxu0 0.0
        %5252 = vmatpush.xpose.msra.mxu0 0.0
        %5253 = vmatpush.xpose.msra.mxu0 0.0
        %5254 = vmatpush.xpose.msra.mxu0 0.0
        %5255 = vmatpush.xpose.msra.mxu0 0.0
        %5256 = vmatpush.xpose.msra.mxu0 0.0
        %5257 = vmatpush.xpose.msra.mxu0 0.0
        %5258 = vmatpush.xpose.msra.mxu0 0.0
        %5259 = vmatpush.xpose.msra.mxu0 0.0
        %5260 = vmatpush.xpose.msra.mxu0 0.0
        %5261 = vmatpush.xpose.msra.mxu0 0.0
        %5262 = vmatpush.xpose.msra.mxu0 0.0
        %5263 = vmatpush.xpose.msra.mxu0 %v5246
        %5264 = vmatmul.f32.gmra.mxu0 %v5244
        %v5265 = vpop.f32.mrf.mxu0
        %v5266 = vadd.f32 0.0, %v5265
        %5267 = vdwg.mxu0
        %5268 = vrot.lane.b32.xlu0 %v593, 104
        %v5269 = vpop.permute.xlu0 %5268
        %5270 = vrot.lane.b32.xlu0 %v666, 104
        %v5271 = vpop.permute.xlu0 %5270
        %v5272 = vsel %vm744, %v5269, 0
        %v5274 = vsel %vm744, %v5271, 0
        %5276 = vmatpush.xpose.msra.mxu0 0.0
        %5277 = vmatpush.xpose.msra.mxu0 0.0
        %5278 = vmatpush.xpose.msra.mxu0 0.0
        %5279 = vmatpush.xpose.msra.mxu0 0.0
        %5280 = vmatpush.xpose.msra.mxu0 0.0
        %5281 = vmatpush.xpose.msra.mxu0 0.0
        %5282 = vmatpush.xpose.msra.mxu0 0.0
        %5283 = vmatpush.xpose.msra.mxu0 0.0
        %5284 = vmatpush.xpose.msra.mxu0 0.0
        %5285 = vmatpush.xpose.msra.mxu0 0.0
        %5286 = vmatpush.xpose.msra.mxu0 0.0
        %5287 = vmatpush.xpose.msra.mxu0 0.0
        %5288 = vmatpush.xpose.msra.mxu0 0.0
        %5289 = vmatpush.xpose.msra.mxu0 0.0
        %5290 = vmatpush.xpose.msra.mxu0 0.0
        %5291 = vmatpush.xpose.msra.mxu0 %v5274
        %5292 = vmatmul.f32.gmra.mxu0 %v5272
        %v5293 = vpop.f32.mrf.mxu0
        %v5294 = vadd.f32 0.0, %v5293
        %5295 = vdwg.mxu0
        %5296 = vrot.lane.b32.xlu0 %v596, 104
        %v5297 = vpop.permute.xlu0 %5296
        %5298 = vrot.lane.b32.xlu0 %v669, 104
        %v5299 = vpop.permute.xlu0 %5298
        %v5300 = vsel %vm744, %v5297, 0
        %v5302 = vsel %vm744, %v5299, 0
        %5304 = vmatpush.xpose.msra.mxu0 0.0
        %5305 = vmatpush.xpose.msra.mxu0 0.0
        %5306 = vmatpush.xpose.msra.mxu0 0.0
        %5307 = vmatpush.xpose.msra.mxu0 0.0
        %5308 = vmatpush.xpose.msra.mxu0 0.0
        %5309 = vmatpush.xpose.msra.mxu0 0.0
        %5310 = vmatpush.xpose.msra.mxu0 0.0
        %5311 = vmatpush.xpose.msra.mxu0 0.0
        %5312 = vmatpush.xpose.msra.mxu0 0.0
        %5313 = vmatpush.xpose.msra.mxu0 0.0
        %5314 = vmatpush.xpose.msra.mxu0 0.0
        %5315 = vmatpush.xpose.msra.mxu0 0.0
        %5316 = vmatpush.xpose.msra.mxu0 0.0
        %5317 = vmatpush.xpose.msra.mxu0 0.0
        %5318 = vmatpush.xpose.msra.mxu0 0.0
        %5319 = vmatpush.xpose.msra.mxu0 %v5302
        %5320 = vmatmul.f32.gmra.mxu0 %v5300
        %v5321 = vpop.f32.mrf.mxu0
        %v5322 = vadd.f32 0.0, %v5321
        %5323 = vdwg.mxu0
        %v5324 = vsel %vm744, %v4902, -inf
        %5325 = vmax.xlane.f32.xlu0 %v5324
        %v5326 = vpop.xlane.xlu0 %5325
        %v5327 = vsel %vm744, %v4930, -inf
        %5328 = vmax.xlane.f32.xlu0 %v5327
        %v5329 = vpop.xlane.xlu0 %5328
        %v5330 = vsel %vm744, %v4958, -inf
        %5331 = vmax.xlane.f32.xlu0 %v5330
        %v5332 = vpop.xlane.xlu0 %5331
        %v5333 = vsel %vm744, %v4986, -inf
        %5334 = vmax.xlane.f32.xlu0 %v5333
        %v5335 = vpop.xlane.xlu0 %5334
        %v5336 = vsel %vm744, %v5014, -inf
        %5337 = vmax.xlane.f32.xlu0 %v5336
        %v5338 = vpop.xlane.xlu0 %5337
        %v5339 = vsel %vm744, %v5042, -inf
        %5340 = vmax.xlane.f32.xlu0 %v5339
        %v5341 = vpop.xlane.xlu0 %5340
        %v5342 = vsel %vm744, %v5070, -inf
        %5343 = vmax.xlane.f32.xlu0 %v5342
        %v5344 = vpop.xlane.xlu0 %5343
        %v5345 = vsel %vm744, %v5098, -inf
        %5346 = vmax.xlane.f32.xlu0 %v5345
        %v5347 = vpop.xlane.xlu0 %5346
        %v5348 = vsel %vm744, %v5126, -inf
        %5349 = vmax.xlane.f32.xlu0 %v5348
        %v5350 = vpop.xlane.xlu0 %5349
        %v5351 = vsel %vm744, %v5154, -inf
        %5352 = vmax.xlane.f32.xlu0 %v5351
        %v5353 = vpop.xlane.xlu0 %5352
        %v5354 = vsel %vm744, %v5182, -inf
        %5355 = vmax.xlane.f32.xlu0 %v5354
        %v5356 = vpop.xlane.xlu0 %5355
        %v5357 = vsel %vm744, %v5210, -inf
        %5358 = vmax.xlane.f32.xlu0 %v5357
        %v5359 = vpop.xlane.xlu0 %5358
        %v5360 = vsel %vm744, %v5238, -inf
        %5361 = vmax.xlane.f32.xlu0 %v5360
        %v5362 = vpop.xlane.xlu0 %5361
        %v5363 = vsel %vm744, %v5266, -inf
        %5364 = vmax.xlane.f32.xlu0 %v5363
        %v5365 = vpop.xlane.xlu0 %5364
        %v5366 = vsel %vm744, %v5294, -inf
        %5367 = vmax.xlane.f32.xlu0 %v5366
        %v5368 = vpop.xlane.xlu0 %5367
        %v5369 = vsel %vm744, %v5322, -inf
        %5370 = vmax.xlane.f32.xlu0 %v5369
        %v5371 = vpop.xlane.xlu0 %5370
        %v5372 = vsub.f32 %v4902, %v5326
        %v5373 = vsub.f32 %v4930, %v5329
        %v5374 = vsub.f32 %v4958, %v5332
        %v5375 = vsub.f32 %v4986, %v5335
        %v5376 = vsub.f32 %v5014, %v5338
        %v5377 = vsub.f32 %v5042, %v5341
        %v5378 = vsub.f32 %v5070, %v5344
        %v5379 = vsub.f32 %v5098, %v5347
        %v5380 = vsub.f32 %v5126, %v5350
        %v5381 = vsub.f32 %v5154, %v5353
        %v5382 = vsub.f32 %v5182, %v5356
        %v5383 = vsub.f32 %v5210, %v5359
        %v5384 = vsub.f32 %v5238, %v5362
        %v5385 = vsub.f32 %v5266, %v5365
        %v5386 = vsub.f32 %v5294, %v5368
        %v5387 = vsub.f32 %v5322, %v5371
        %v5388 = vmul.f32 %v5372, 1.442695
        %v5389 = vpow.pop %v5388
        %v5390 = vmul.f32 %v5373, 1.442695
        %v5391 = vpow.pop %v5390
        %v5392 = vmul.f32 %v5374, 1.442695
        %v5393 = vpow.pop %v5392
        %v5394 = vmul.f32 %v5375, 1.442695
        %v5395 = vpow.pop %v5394
        %v5396 = vmul.f32 %v5376, 1.442695
        %v5397 = vpow.pop %v5396
        %v5398 = vmul.f32 %v5377, 1.442695
        %v5399 = vpow.pop %v5398
        %v5400 = vmul.f32 %v5378, 1.442695
        %v5401 = vpow.pop %v5400
        %v5402 = vmul.f32 %v5379, 1.442695
        %v5403 = vpow.pop %v5402
        %v5404 = vmul.f32 %v5380, 1.442695
        %v5405 = vpow.pop %v5404
        %v5406 = vmul.f32 %v5381, 1.442695
        %v5407 = vpow.pop %v5406
        %v5408 = vmul.f32 %v5382, 1.442695
        %v5409 = vpow.pop %v5408
        %v5410 = vmul.f32 %v5383, 1.442695
        %v5411 = vpow.pop %v5410
        %v5412 = vmul.f32 %v5384, 1.442695
        %v5413 = vpow.pop %v5412
        %v5414 = vmul.f32 %v5385, 1.442695
        %v5415 = vpow.pop %v5414
        %v5416 = vmul.f32 %v5386, 1.442695
        %v5417 = vpow.pop %v5416
        %v5418 = vmul.f32 %v5387, 1.442695
        %v5419 = vpow.pop %v5418
        %v5420 = vsel %vm744, %v5389, 0.0
        %5421 = vadd.xlane.f32.xlu0 %v5420
        %v5422 = vpop.xlane.xlu0 %5421
        %v5423 = vsel %vm744, %v5391, 0.0
        %5424 = vadd.xlane.f32.xlu0 %v5423
        %v5425 = vpop.xlane.xlu0 %5424
        %v5426 = vsel %vm744, %v5393, 0.0
        %5427 = vadd.xlane.f32.xlu0 %v5426
        %v5428 = vpop.xlane.xlu0 %5427
        %v5429 = vsel %vm744, %v5395, 0.0
        %5430 = vadd.xlane.f32.xlu0 %v5429
        %v5431 = vpop.xlane.xlu0 %5430
        %v5432 = vsel %vm744, %v5397, 0.0
        %5433 = vadd.xlane.f32.xlu0 %v5432
        %v5434 = vpop.xlane.xlu0 %5433
        %v5435 = vsel %vm744, %v5399, 0.0
        %5436 = vadd.xlane.f32.xlu0 %v5435
        %v5437 = vpop.xlane.xlu0 %5436
        %v5438 = vsel %vm744, %v5401, 0.0
        %5439 = vadd.xlane.f32.xlu0 %v5438
        %v5440 = vpop.xlane.xlu0 %5439
        %v5441 = vsel %vm744, %v5403, 0.0
        %5442 = vadd.xlane.f32.xlu0 %v5441
        %v5443 = vpop.xlane.xlu0 %5442
        %v5444 = vsel %vm744, %v5405, 0.0
        %5445 = vadd.xlane.f32.xlu0 %v5444
        %v5446 = vpop.xlane.xlu0 %5445
        %v5447 = vsel %vm744, %v5407, 0.0
        %5448 = vadd.xlane.f32.xlu0 %v5447
        %v5449 = vpop.xlane.xlu0 %5448
        %v5450 = vsel %vm744, %v5409, 0.0
        %5451 = vadd.xlane.f32.xlu0 %v5450
        %v5452 = vpop.xlane.xlu0 %5451
        %v5453 = vsel %vm744, %v5411, 0.0
        %5454 = vadd.xlane.f32.xlu0 %v5453
        %v5455 = vpop.xlane.xlu0 %5454
        %v5456 = vsel %vm744, %v5413, 0.0
        %5457 = vadd.xlane.f32.xlu0 %v5456
        %v5458 = vpop.xlane.xlu0 %5457
        %v5459 = vsel %vm744, %v5415, 0.0
        %5460 = vadd.xlane.f32.xlu0 %v5459
        %v5461 = vpop.xlane.xlu0 %5460
        %v5462 = vsel %vm744, %v5417, 0.0
        %5463 = vadd.xlane.f32.xlu0 %v5462
        %v5464 = vpop.xlane.xlu0 %5463
        %v5465 = vsel %vm744, %v5419, 0.0
        %5466 = vadd.xlane.f32.xlu0 %v5465
        %v5467 = vpop.xlane.xlu0 %5466
        %v5468 = vrcp.pop %v5422
        %v5469 = vrcp.pop %v5425
        %v5470 = vrcp.pop %v5428
        %v5471 = vrcp.pop %v5431
        %v5472 = vrcp.pop %v5434
        %v5473 = vrcp.pop %v5437
        %v5474 = vrcp.pop %v5440
        %v5475 = vrcp.pop %v5443
        %v5476 = vrcp.pop %v5446
        %v5477 = vrcp.pop %v5449
        %v5478 = vrcp.pop %v5452
        %v5479 = vrcp.pop %v5455
        %v5480 = vrcp.pop %v5458
        %v5481 = vrcp.pop %v5461
        %v5482 = vrcp.pop %v5464
        %v5483 = vrcp.pop %v5467
        %v5484 = vmul.f32 %v5389, %v5468
        %v5485 = vmul.f32 %v5391, %v5469
        %v5486 = vmul.f32 %v5393, %v5470
        %v5487 = vmul.f32 %v5395, %v5471
        %v5488 = vmul.f32 %v5397, %v5472
        %v5489 = vmul.f32 %v5399, %v5473
        %v5490 = vmul.f32 %v5401, %v5474
        %v5491 = vmul.f32 %v5403, %v5475
        %v5492 = vmul.f32 %v5405, %v5476
        %v5493 = vmul.f32 %v5407, %v5477
        %v5494 = vmul.f32 %v5409, %v5478
        %v5495 = vmul.f32 %v5411, %v5479
        %v5496 = vmul.f32 %v5413, %v5480
        %v5497 = vmul.f32 %v5415, %v5481
        %v5498 = vmul.f32 %v5417, %v5482
        %v5499 = vmul.f32 %v5419, %v5483
        %v5500 = vrot.slane %v5486, 4
        %v5501 = vsel %vm1338, %v5500, %v5484
        %v5502 = vrot.slane %v5484, 4
        %v5503 = vsel %vm1338, %v5486, %v5502
        %v5505 = vunpack.c.l.s4 1983009808
        %v5506 = vunpack.c.0.s8 %v5505
        %v5507 = vperm.slane %v5501, %v5506
        %v5509 = vunpack.c.l.s4 1983009808
        %v5510 = vunpack.c.0.s8 %v5509
        %v5511 = vperm.slane %v5503, %v5510
        %v5512 = vrot.slane %v5487, 4
        %v5513 = vsel %vm1338, %v5512, %v5485
        %v5514 = vrot.slane %v5485, 4
        %v5515 = vsel %vm1338, %v5487, %v5514
        %v5517 = vunpack.c.l.s4 1983009808
        %v5518 = vunpack.c.0.s8 %v5517
        %v5519 = vperm.slane %v5513, %v5518
        %v5521 = vunpack.c.l.s4 1983009808
        %v5522 = vunpack.c.0.s8 %v5521
        %v5523 = vperm.slane %v5515, %v5522
        %v5524 = vrot.slane %v5490, 4
        %v5525 = vsel %vm1338, %v5524, %v5488
        %v5526 = vrot.slane %v5488, 4
        %v5527 = vsel %vm1338, %v5490, %v5526
        %v5529 = vunpack.c.l.s4 1983009808
        %v5530 = vunpack.c.0.s8 %v5529
        %v5531 = vperm.slane %v5525, %v5530
        %v5533 = vunpack.c.l.s4 1983009808
        %v5534 = vunpack.c.0.s8 %v5533
        %v5535 = vperm.slane %v5527, %v5534
        %v5536 = vrot.slane %v5491, 4
        %v5537 = vsel %vm1338, %v5536, %v5489
        %v5538 = vrot.slane %v5489, 4
        %v5539 = vsel %vm1338, %v5491, %v5538
        %v5541 = vunpack.c.l.s4 1983009808
        %v5542 = vunpack.c.0.s8 %v5541
        %v5543 = vperm.slane %v5537, %v5542
        %v5545 = vunpack.c.l.s4 1983009808
        %v5546 = vunpack.c.0.s8 %v5545
        %v5547 = vperm.slane %v5539, %v5546
        %v5548 = vrot.slane %v5519, 4
        %v5549 = vsel %vm1338, %v5548, %v5507
        %v5550 = vrot.slane %v5507, 4
        %v5551 = vsel %vm1338, %v5519, %v5550
        %v5553 = vunpack.c.l.s4 1934713408
        %v5554 = vunpack.c.0.s8 %v5553
        %v5555 = vperm.slane %v5549, %v5554
        %v5557 = vunpack.c.l.s4 1934713408
        %v5558 = vunpack.c.0.s8 %v5557
        %v5559 = vperm.slane %v5551, %v5558
        %v5560 = vrot.slane %v5523, 4
        %v5561 = vsel %vm1338, %v5560, %v5511
        %v5562 = vrot.slane %v5511, 4
        %v5563 = vsel %vm1338, %v5523, %v5562
        %v5565 = vunpack.c.l.s4 1934713408
        %v5566 = vunpack.c.0.s8 %v5565
        %v5567 = vperm.slane %v5561, %v5566
        %v5569 = vunpack.c.l.s4 1934713408
        %v5570 = vunpack.c.0.s8 %v5569
        %v5571 = vperm.slane %v5563, %v5570
        %v5572 = vrot.slane %v5543, 4
        %v5573 = vsel %vm1338, %v5572, %v5531
        %v5574 = vrot.slane %v5531, 4
        %v5575 = vsel %vm1338, %v5543, %v5574
        %v5577 = vunpack.c.l.s4 1934713408
        %v5578 = vunpack.c.0.s8 %v5577
        %v5579 = vperm.slane %v5573, %v5578
        %v5581 = vunpack.c.l.s4 1934713408
        %v5582 = vunpack.c.0.s8 %v5581
        %v5583 = vperm.slane %v5575, %v5582
        %v5584 = vrot.slane %v5547, 4
        %v5585 = vsel %vm1338, %v5584, %v5535
        %v5586 = vrot.slane %v5535, 4
        %v5587 = vsel %vm1338, %v5547, %v5586
        %v5589 = vunpack.c.l.s4 1934713408
        %v5590 = vunpack.c.0.s8 %v5589
        %v5591 = vperm.slane %v5585, %v5590
        %v5593 = vunpack.c.l.s4 1934713408
        %v5594 = vunpack.c.0.s8 %v5593
        %v5595 = vperm.slane %v5587, %v5594
        %v5596 = vrot.slane %v5579, 4
        %v5597 = vsel %vm1338, %v5596, %v5555
        %v5598 = vrot.slane %v5555, 4
        %v5599 = vsel %vm1338, %v5579, %v5598
        %v5600 = vrot.slane %v5583, 4
        %v5601 = vsel %vm1338, %v5600, %v5559
        %v5602 = vrot.slane %v5559, 4
        %v5603 = vsel %vm1338, %v5583, %v5602
        %v5604 = vrot.slane %v5591, 4
        %v5605 = vsel %vm1338, %v5604, %v5567
        %v5606 = vrot.slane %v5567, 4
        %v5607 = vsel %vm1338, %v5591, %v5606
        %v5608 = vrot.slane %v5595, 4
        %v5609 = vsel %vm1338, %v5608, %v5571
        %v5610 = vrot.slane %v5571, 4
        %v5611 = vsel %vm1338, %v5595, %v5610
        %v5612 = vrot.slane %v5494, 4
        %v5613 = vsel %vm1338, %v5612, %v5492
        %v5614 = vrot.slane %v5492, 4
        %v5615 = vsel %vm1338, %v5494, %v5614
        %v5617 = vunpack.c.l.s4 1983009808
        %v5618 = vunpack.c.0.s8 %v5617
        %v5619 = vperm.slane %v5613, %v5618
        %v5621 = vunpack.c.l.s4 1983009808
        %v5622 = vunpack.c.0.s8 %v5621
        %v5623 = vperm.slane %v5615, %v5622
        %v5624 = vrot.slane %v5495, 4
        %v5625 = vsel %vm1338, %v5624, %v5493
        %v5626 = vrot.slane %v5493, 4
        %v5627 = vsel %vm1338, %v5495, %v5626
        %v5629 = vunpack.c.l.s4 1983009808
        %v5630 = vunpack.c.0.s8 %v5629
        %v5631 = vperm.slane %v5625, %v5630
        %v5633 = vunpack.c.l.s4 1983009808
        %v5634 = vunpack.c.0.s8 %v5633
        %v5635 = vperm.slane %v5627, %v5634
        %v5636 = vrot.slane %v5498, 4
        %v5637 = vsel %vm1338, %v5636, %v5496
        %v5638 = vrot.slane %v5496, 4
        %v5639 = vsel %vm1338, %v5498, %v5638
        %v5641 = vunpack.c.l.s4 1983009808
        %v5642 = vunpack.c.0.s8 %v5641
        %v5643 = vperm.slane %v5637, %v5642
        %v5645 = vunpack.c.l.s4 1983009808
        %v5646 = vunpack.c.0.s8 %v5645
        %v5647 = vperm.slane %v5639, %v5646
        %v5648 = vrot.slane %v5499, 4
        %v5649 = vsel %vm1338, %v5648, %v5497
        %v5650 = vrot.slane %v5497, 4
        %v5651 = vsel %vm1338, %v5499, %v5650
        %v5653 = vunpack.c.l.s4 1983009808
        %v5654 = vunpack.c.0.s8 %v5653
        %v5655 = vperm.slane %v5649, %v5654
        %v5657 = vunpack.c.l.s4 1983009808
        %v5658 = vunpack.c.0.s8 %v5657
        %v5659 = vperm.slane %v5651, %v5658
        %v5660 = vrot.slane %v5631, 4
        %v5661 = vsel %vm1338, %v5660, %v5619
        %v5662 = vrot.slane %v5619, 4
        %v5663 = vsel %vm1338, %v5631, %v5662
        %v5665 = vunpack.c.l.s4 1934713408
        %v5666 = vunpack.c.0.s8 %v5665
        %v5667 = vperm.slane %v5661, %v5666
        %v5669 = vunpack.c.l.s4 1934713408
        %v5670 = vunpack.c.0.s8 %v5669
        %v5671 = vperm.slane %v5663, %v5670
        %v5672 = vrot.slane %v5635, 4
        %v5673 = vsel %vm1338, %v5672, %v5623
        %v5674 = vrot.slane %v5623, 4
        %v5675 = vsel %vm1338, %v5635, %v5674
        %v5677 = vunpack.c.l.s4 1934713408
        %v5678 = vunpack.c.0.s8 %v5677
        %v5679 = vperm.slane %v5673, %v5678
        %v5681 = vunpack.c.l.s4 1934713408
        %v5682 = vunpack.c.0.s8 %v5681
        %v5683 = vperm.slane %v5675, %v5682
        %v5684 = vrot.slane %v5655, 4
        %v5685 = vsel %vm1338, %v5684, %v5643
        %v5686 = vrot.slane %v5643, 4
        %v5687 = vsel %vm1338, %v5655, %v5686
        %v5689 = vunpack.c.l.s4 1934713408
        %v5690 = vunpack.c.0.s8 %v5689
        %v5691 = vperm.slane %v5685, %v5690
        %v5693 = vunpack.c.l.s4 1934713408
        %v5694 = vunpack.c.0.s8 %v5693
        %v5695 = vperm.slane %v5687, %v5694
        %v5696 = vrot.slane %v5659, 4
        %v5697 = vsel %vm1338, %v5696, %v5647
        %v5698 = vrot.slane %v5647, 4
        %v5699 = vsel %vm1338, %v5659, %v5698
        %v5701 = vunpack.c.l.s4 1934713408
        %v5702 = vunpack.c.0.s8 %v5701
        %v5703 = vperm.slane %v5697, %v5702
        %v5705 = vunpack.c.l.s4 1934713408
        %v5706 = vunpack.c.0.s8 %v5705
        %v5707 = vperm.slane %v5699, %v5706
        %v5708 = vrot.slane %v5691, 4
        %v5709 = vsel %vm1338, %v5708, %v5667
        %v5710 = vrot.slane %v5667, 4
        %v5711 = vsel %vm1338, %v5691, %v5710
        %v5712 = vrot.slane %v5695, 4
        %v5713 = vsel %vm1338, %v5712, %v5671
        %v5714 = vrot.slane %v5671, 4
        %v5715 = vsel %vm1338, %v5695, %v5714
        %v5716 = vrot.slane %v5703, 4
        %v5717 = vsel %vm1338, %v5716, %v5679
        %v5718 = vrot.slane %v5679, 4
        %v5719 = vsel %vm1338, %v5703, %v5718
        %v5720 = vrot.slane %v5707, 4
        %v5721 = vsel %vm1338, %v5720, %v5683
        %v5722 = vrot.slane %v5683, 4
        %v5723 = vsel %vm1338, %v5707, %v5722
        %5726 = vrot.lane.b32.xlu0 %v5599, 8
        %v5727 = vpop.permute.xlu0 %5726
        %5728 = vrot.lane.b32.xlu0 %v5711, 8
        %v5729 = vpop.permute.xlu0 %5728
        %5734 = vrot.lane.b32.xlu0 %v5601, 16
        %v5735 = vpop.permute.xlu0 %5734
        %5736 = vrot.lane.b32.xlu0 %v5713, 16
        %v5737 = vpop.permute.xlu0 %5736
        %5742 = vrot.lane.b32.xlu0 %v5603, 24
        %v5743 = vpop.permute.xlu0 %5742
        %5744 = vrot.lane.b32.xlu0 %v5715, 24
        %v5745 = vpop.permute.xlu0 %5744
        %5750 = vrot.lane.b32.xlu0 %v5605, 32
        %v5751 = vpop.permute.xlu0 %5750
        %5752 = vrot.lane.b32.xlu0 %v5717, 32
        %v5753 = vpop.permute.xlu0 %5752
        %5758 = vrot.lane.b32.xlu0 %v5607, 40
        %v5759 = vpop.permute.xlu0 %5758
        %5760 = vrot.lane.b32.xlu0 %v5719, 40
        %v5761 = vpop.permute.xlu0 %5760
        %5766 = vrot.lane.b32.xlu0 %v5609, 48
        %v5767 = vpop.permute.xlu0 %5766
        %5768 = vrot.lane.b32.xlu0 %v5721, 48
        %v5769 = vpop.permute.xlu0 %5768
        %5774 = vrot.lane.b32.xlu0 %v5611, 56
        %v5775 = vpop.permute.xlu0 %5774
        %5776 = vrot.lane.b32.xlu0 %v5723, 56
        %v5777 = vpop.permute.xlu0 %5776
        %v5780 = vsel %vm744, %v5597, %v5727
        %v5781 = vsel %vm744, %v5709, %v5729
        %v5782 = vsel %vm1620, %v5780, %v5735
        %v5783 = vsel %vm1620, %v5781, %v5737
        %v5784 = vsel %vm1623, %v5782, %v5743
        %v5785 = vsel %vm1623, %v5783, %v5745
        %v5786 = vsel %vm484, %v5784, %v5751
        %v5787 = vsel %vm484, %v5785, %v5753
        %v5788 = vsel %vm1628, %v5786, %v5759
        %v5789 = vsel %vm1628, %v5787, %v5761
        %v5790 = vsel %vm1631, %v5788, %v5767
        %v5791 = vsel %vm1631, %v5789, %v5769
        %v5792 = vsel %vm1634, %v5790, %v5775
        %v5793 = vsel %vm1634, %v5791, %v5777
        %s5794 = scalar_lea.vmem %s456, 48 [#allocation13]
        %5795 = vst.msk [vmem:[%s5794] sm:$0xff] %vm1637, %v5792
        %5796 = vst.msk [vmem:[%s5794 + $0x8] sm:$0xff] %vm1637, %v5793
        %5797 = vrot.lane.b32.xlu0 %v697, 104
        %v5798 = vpop.permute.xlu0 %5797
        %v5801 = vsel %vm744, %v5484, 0
        %5803 = vmatpush.msra.mxu0 0.0
        %5804 = vmatpush.msra.mxu0 0.0
        %5805 = vmatpush.msra.mxu0 0.0
        %5806 = vmatpush.msra.mxu0 0.0
        %5807 = vmatpush.msra.mxu0 0.0
        %5808 = vmatpush.msra.mxu0 0.0
        %5809 = vmatpush.msra.mxu0 0.0
        %5810 = vmatpush.msra.mxu0 0.0
        %5811 = vmatpush.msra.mxu0 0.0
        %5812 = vmatpush.msra.mxu0 0.0
        %5813 = vmatpush.msra.mxu0 0.0
        %5814 = vmatpush.msra.mxu0 0.0
        %5815 = vmatpush.msra.mxu0 0.0
        %5816 = vmatpush.msra.mxu0 0.0
        %5817 = vmatpush.msra.mxu0 0.0
        %5818 = vmatpush.msra.mxu0 %v5798
        %5819 = vmatmul.f32.gmra.mxu0 %v5801
        %v5820 = vpop.f32.mrf.mxu0
        %v5821 = vadd.f32 0.0, %v5820
        %5822 = vdwg.mxu0
        %5823 = vrot.lane.b32.xlu0 %v700, 104
        %v5824 = vpop.permute.xlu0 %5823
        %v5827 = vsel %vm744, %v5485, 0
        %5829 = vmatpush.msra.mxu0 0.0
        %5830 = vmatpush.msra.mxu0 0.0
        %5831 = vmatpush.msra.mxu0 0.0
        %5832 = vmatpush.msra.mxu0 0.0
        %5833 = vmatpush.msra.mxu0 0.0
        %5834 = vmatpush.msra.mxu0 0.0
        %5835 = vmatpush.msra.mxu0 0.0
        %5836 = vmatpush.msra.mxu0 0.0
        %5837 = vmatpush.msra.mxu0 0.0
        %5838 = vmatpush.msra.mxu0 0.0
        %5839 = vmatpush.msra.mxu0 0.0
        %5840 = vmatpush.msra.mxu0 0.0
        %5841 = vmatpush.msra.mxu0 0.0
        %5842 = vmatpush.msra.mxu0 0.0
        %5843 = vmatpush.msra.mxu0 0.0
        %5844 = vmatpush.msra.mxu0 %v5824
        %5845 = vmatmul.f32.gmra.mxu0 %v5827
        %v5846 = vpop.f32.mrf.mxu0
        %v5847 = vadd.f32 0.0, %v5846
        %5848 = vdwg.mxu0
        %5849 = vrot.lane.b32.xlu0 %v703, 104
        %v5850 = vpop.permute.xlu0 %5849
        %v5853 = vsel %vm744, %v5486, 0
        %5855 = vmatpush.msra.mxu0 0.0
        %5856 = vmatpush.msra.mxu0 0.0
        %5857 = vmatpush.msra.mxu0 0.0
        %5858 = vmatpush.msra.mxu0 0.0
        %5859 = vmatpush.msra.mxu0 0.0
        %5860 = vmatpush.msra.mxu0 0.0
        %5861 = vmatpush.msra.mxu0 0.0
        %5862 = vmatpush.msra.mxu0 0.0
        %5863 = vmatpush.msra.mxu0 0.0
        %5864 = vmatpush.msra.mxu0 0.0
        %5865 = vmatpush.msra.mxu0 0.0
        %5866 = vmatpush.msra.mxu0 0.0
        %5867 = vmatpush.msra.mxu0 0.0
        %5868 = vmatpush.msra.mxu0 0.0
        %5869 = vmatpush.msra.mxu0 0.0
        %5870 = vmatpush.msra.mxu0 %v5850
        %5871 = vmatmul.f32.gmra.mxu0 %v5853
        %v5872 = vpop.f32.mrf.mxu0
        %v5873 = vadd.f32 0.0, %v5872
        %5874 = vdwg.mxu0
        %5875 = vrot.lane.b32.xlu0 %v706, 104
        %v5876 = vpop.permute.xlu0 %5875
        %v5879 = vsel %vm744, %v5487, 0
        %5881 = vmatpush.msra.mxu0 0.0
        %5882 = vmatpush.msra.mxu0 0.0
        %5883 = vmatpush.msra.mxu0 0.0
        %5884 = vmatpush.msra.mxu0 0.0
        %5885 = vmatpush.msra.mxu0 0.0
        %5886 = vmatpush.msra.mxu0 0.0
        %5887 = vmatpush.msra.mxu0 0.0
        %5888 = vmatpush.msra.mxu0 0.0
        %5889 = vmatpush.msra.mxu0 0.0
        %5890 = vmatpush.msra.mxu0 0.0
        %5891 = vmatpush.msra.mxu0 0.0
        %5892 = vmatpush.msra.mxu0 0.0
        %5893 = vmatpush.msra.mxu0 0.0
        %5894 = vmatpush.msra.mxu0 0.0
        %5895 = vmatpush.msra.mxu0 0.0
        %5896 = vmatpush.msra.mxu0 %v5876
        %5897 = vmatmul.f32.gmra.mxu0 %v5879
        %v5898 = vpop.f32.mrf.mxu0
        %v5899 = vadd.f32 0.0, %v5898
        %5900 = vdwg.mxu0
        %5901 = vrot.lane.b32.xlu0 %v709, 104
        %v5902 = vpop.permute.xlu0 %5901
        %v5905 = vsel %vm744, %v5488, 0
        %5907 = vmatpush.msra.mxu0 0.0
        %5908 = vmatpush.msra.mxu0 0.0
        %5909 = vmatpush.msra.mxu0 0.0
        %5910 = vmatpush.msra.mxu0 0.0
        %5911 = vmatpush.msra.mxu0 0.0
        %5912 = vmatpush.msra.mxu0 0.0
        %5913 = vmatpush.msra.mxu0 0.0
        %5914 = vmatpush.msra.mxu0 0.0
        %5915 = vmatpush.msra.mxu0 0.0
        %5916 = vmatpush.msra.mxu0 0.0
        %5917 = vmatpush.msra.mxu0 0.0
        %5918 = vmatpush.msra.mxu0 0.0
        %5919 = vmatpush.msra.mxu0 0.0
        %5920 = vmatpush.msra.mxu0 0.0
        %5921 = vmatpush.msra.mxu0 0.0
        %5922 = vmatpush.msra.mxu0 %v5902
        %5923 = vmatmul.f32.gmra.mxu0 %v5905
        %v5924 = vpop.f32.mrf.mxu0
        %v5925 = vadd.f32 0.0, %v5924
        %5926 = vdwg.mxu0
        %5927 = vrot.lane.b32.xlu0 %v712, 104
        %v5928 = vpop.permute.xlu0 %5927
        %v5931 = vsel %vm744, %v5489, 0
        %5933 = vmatpush.msra.mxu0 0.0
        %5934 = vmatpush.msra.mxu0 0.0
        %5935 = vmatpush.msra.mxu0 0.0
        %5936 = vmatpush.msra.mxu0 0.0
        %5937 = vmatpush.msra.mxu0 0.0
        %5938 = vmatpush.msra.mxu0 0.0
        %5939 = vmatpush.msra.mxu0 0.0
        %5940 = vmatpush.msra.mxu0 0.0
        %5941 = vmatpush.msra.mxu0 0.0
        %5942 = vmatpush.msra.mxu0 0.0
        %5943 = vmatpush.msra.mxu0 0.0
        %5944 = vmatpush.msra.mxu0 0.0
        %5945 = vmatpush.msra.mxu0 0.0
        %5946 = vmatpush.msra.mxu0 0.0
        %5947 = vmatpush.msra.mxu0 0.0
        %5948 = vmatpush.msra.mxu0 %v5928
        %5949 = vmatmul.f32.gmra.mxu0 %v5931
        %v5950 = vpop.f32.mrf.mxu0
        %v5951 = vadd.f32 0.0, %v5950
        %5952 = vdwg.mxu0
        %5953 = vrot.lane.b32.xlu0 %v715, 104
        %v5954 = vpop.permute.xlu0 %5953
        %v5957 = vsel %vm744, %v5490, 0
        %5959 = vmatpush.msra.mxu0 0.0
        %5960 = vmatpush.msra.mxu0 0.0
        %5961 = vmatpush.msra.mxu0 0.0
        %5962 = vmatpush.msra.mxu0 0.0
        %5963 = vmatpush.msra.mxu0 0.0
        %5964 = vmatpush.msra.mxu0 0.0
        %5965 = vmatpush.msra.mxu0 0.0
        %5966 = vmatpush.msra.mxu0 0.0
        %5967 = vmatpush.msra.mxu0 0.0
        %5968 = vmatpush.msra.mxu0 0.0
        %5969 = vmatpush.msra.mxu0 0.0
        %5970 = vmatpush.msra.mxu0 0.0
        %5971 = vmatpush.msra.mxu0 0.0
        %5972 = vmatpush.msra.mxu0 0.0
        %5973 = vmatpush.msra.mxu0 0.0
        %5974 = vmatpush.msra.mxu0 %v5954
        %5975 = vmatmul.f32.gmra.mxu0 %v5957
        %v5976 = vpop.f32.mrf.mxu0
        %v5977 = vadd.f32 0.0, %v5976
        %5978 = vdwg.mxu0
        %5979 = vrot.lane.b32.xlu0 %v718, 104
        %v5980 = vpop.permute.xlu0 %5979
        %v5983 = vsel %vm744, %v5491, 0
        %5985 = vmatpush.msra.mxu0 0.0
        %5986 = vmatpush.msra.mxu0 0.0
        %5987 = vmatpush.msra.mxu0 0.0
        %5988 = vmatpush.msra.mxu0 0.0
        %5989 = vmatpush.msra.mxu0 0.0
        %5990 = vmatpush.msra.mxu0 0.0
        %5991 = vmatpush.msra.mxu0 0.0
        %5992 = vmatpush.msra.mxu0 0.0
        %5993 = vmatpush.msra.mxu0 0.0
        %5994 = vmatpush.msra.mxu0 0.0
        %5995 = vmatpush.msra.mxu0 0.0
        %5996 = vmatpush.msra.mxu0 0.0
        %5997 = vmatpush.msra.mxu0 0.0
        %5998 = vmatpush.msra.mxu0 0.0
        %5999 = vmatpush.msra.mxu0 0.0
        %6000 = vmatpush.msra.mxu0 %v5980
        %6001 = vmatmul.f32.gmra.mxu0 %v5983
        %v6002 = vpop.f32.mrf.mxu0
        %v6003 = vadd.f32 0.0, %v6002
        %6004 = vdwg.mxu0
        %6005 = vrot.lane.b32.xlu0 %v721, 104
        %v6006 = vpop.permute.xlu0 %6005
        %v6009 = vsel %vm744, %v5492, 0
        %6011 = vmatpush.msra.mxu0 0.0
        %6012 = vmatpush.msra.mxu0 0.0
        %6013 = vmatpush.msra.mxu0 0.0
        %6014 = vmatpush.msra.mxu0 0.0
        %6015 = vmatpush.msra.mxu0 0.0
        %6016 = vmatpush.msra.mxu0 0.0
        %6017 = vmatpush.msra.mxu0 0.0
        %6018 = vmatpush.msra.mxu0 0.0
        %6019 = vmatpush.msra.mxu0 0.0
        %6020 = vmatpush.msra.mxu0 0.0
        %6021 = vmatpush.msra.mxu0 0.0
        %6022 = vmatpush.msra.mxu0 0.0
        %6023 = vmatpush.msra.mxu0 0.0
        %6024 = vmatpush.msra.mxu0 0.0
        %6025 = vmatpush.msra.mxu0 0.0
        %6026 = vmatpush.msra.mxu0 %v6006
        %6027 = vmatmul.f32.gmra.mxu0 %v6009
        %v6028 = vpop.f32.mrf.mxu0
        %v6029 = vadd.f32 0.0, %v6028
        %6030 = vdwg.mxu0
        %6031 = vrot.lane.b32.xlu0 %v724, 104
        %v6032 = vpop.permute.xlu0 %6031
        %v6035 = vsel %vm744, %v5493, 0
        %6037 = vmatpush.msra.mxu0 0.0
        %6038 = vmatpush.msra.mxu0 0.0
        %6039 = vmatpush.msra.mxu0 0.0
        %6040 = vmatpush.msra.mxu0 0.0
        %6041 = vmatpush.msra.mxu0 0.0
        %6042 = vmatpush.msra.mxu0 0.0
        %6043 = vmatpush.msra.mxu0 0.0
        %6044 = vmatpush.msra.mxu0 0.0
        %6045 = vmatpush.msra.mxu0 0.0
        %6046 = vmatpush.msra.mxu0 0.0
        %6047 = vmatpush.msra.mxu0 0.0
        %6048 = vmatpush.msra.mxu0 0.0
        %6049 = vmatpush.msra.mxu0 0.0
        %6050 = vmatpush.msra.mxu0 0.0
        %6051 = vmatpush.msra.mxu0 0.0
        %6052 = vmatpush.msra.mxu0 %v6032
        %6053 = vmatmul.f32.gmra.mxu0 %v6035
        %v6054 = vpop.f32.mrf.mxu0
        %v6055 = vadd.f32 0.0, %v6054
        %6056 = vdwg.mxu0
        %6057 = vrot.lane.b32.xlu0 %v727, 104
        %v6058 = vpop.permute.xlu0 %6057
        %v6061 = vsel %vm744, %v5494, 0
        %6063 = vmatpush.msra.mxu0 0.0
        %6064 = vmatpush.msra.mxu0 0.0
        %6065 = vmatpush.msra.mxu0 0.0
        %6066 = vmatpush.msra.mxu0 0.0
        %6067 = vmatpush.msra.mxu0 0.0
        %6068 = vmatpush.msra.mxu0 0.0
        %6069 = vmatpush.msra.mxu0 0.0
        %6070 = vmatpush.msra.mxu0 0.0
        %6071 = vmatpush.msra.mxu0 0.0
        %6072 = vmatpush.msra.mxu0 0.0
        %6073 = vmatpush.msra.mxu0 0.0
        %6074 = vmatpush.msra.mxu0 0.0
        %6075 = vmatpush.msra.mxu0 0.0
        %6076 = vmatpush.msra.mxu0 0.0
        %6077 = vmatpush.msra.mxu0 0.0
        %6078 = vmatpush.msra.mxu0 %v6058
        %6079 = vmatmul.f32.gmra.mxu0 %v6061
        %v6080 = vpop.f32.mrf.mxu0
        %v6081 = vadd.f32 0.0, %v6080
        %6082 = vdwg.mxu0
        %6083 = vrot.lane.b32.xlu0 %v730, 104
        %v6084 = vpop.permute.xlu0 %6083
        %v6087 = vsel %vm744, %v5495, 0
        %6089 = vmatpush.msra.mxu0 0.0
        %6090 = vmatpush.msra.mxu0 0.0
        %6091 = vmatpush.msra.mxu0 0.0
        %6092 = vmatpush.msra.mxu0 0.0
        %6093 = vmatpush.msra.mxu0 0.0
        %6094 = vmatpush.msra.mxu0 0.0
        %6095 = vmatpush.msra.mxu0 0.0
        %6096 = vmatpush.msra.mxu0 0.0
        %6097 = vmatpush.msra.mxu0 0.0
        %6098 = vmatpush.msra.mxu0 0.0
        %6099 = vmatpush.msra.mxu0 0.0
        %6100 = vmatpush.msra.mxu0 0.0
        %6101 = vmatpush.msra.mxu0 0.0
        %6102 = vmatpush.msra.mxu0 0.0
        %6103 = vmatpush.msra.mxu0 0.0
        %6104 = vmatpush.msra.mxu0 %v6084
        %6105 = vmatmul.f32.gmra.mxu0 %v6087
        %v6106 = vpop.f32.mrf.mxu0
        %v6107 = vadd.f32 0.0, %v6106
        %6108 = vdwg.mxu0
        %6109 = vrot.lane.b32.xlu0 %v733, 104
        %v6110 = vpop.permute.xlu0 %6109
        %v6113 = vsel %vm744, %v5496, 0
        %6115 = vmatpush.msra.mxu0 0.0
        %6116 = vmatpush.msra.mxu0 0.0
        %6117 = vmatpush.msra.mxu0 0.0
        %6118 = vmatpush.msra.mxu0 0.0
        %6119 = vmatpush.msra.mxu0 0.0
        %6120 = vmatpush.msra.mxu0 0.0
        %6121 = vmatpush.msra.mxu0 0.0
        %6122 = vmatpush.msra.mxu0 0.0
        %6123 = vmatpush.msra.mxu0 0.0
        %6124 = vmatpush.msra.mxu0 0.0
        %6125 = vmatpush.msra.mxu0 0.0
        %6126 = vmatpush.msra.mxu0 0.0
        %6127 = vmatpush.msra.mxu0 0.0
        %6128 = vmatpush.msra.mxu0 0.0
        %6129 = vmatpush.msra.mxu0 0.0
        %6130 = vmatpush.msra.mxu0 %v6110
        %6131 = vmatmul.f32.gmra.mxu0 %v6113
        %v6132 = vpop.f32.mrf.mxu0
        %v6133 = vadd.f32 0.0, %v6132
        %6134 = vdwg.mxu0
        %6135 = vrot.lane.b32.xlu0 %v736, 104
        %v6136 = vpop.permute.xlu0 %6135
        %v6139 = vsel %vm744, %v5497, 0
        %6141 = vmatpush.msra.mxu0 0.0
        %6142 = vmatpush.msra.mxu0 0.0
        %6143 = vmatpush.msra.mxu0 0.0
        %6144 = vmatpush.msra.mxu0 0.0
        %6145 = vmatpush.msra.mxu0 0.0
        %6146 = vmatpush.msra.mxu0 0.0
        %6147 = vmatpush.msra.mxu0 0.0
        %6148 = vmatpush.msra.mxu0 0.0
        %6149 = vmatpush.msra.mxu0 0.0
        %6150 = vmatpush.msra.mxu0 0.0
        %6151 = vmatpush.msra.mxu0 0.0
        %6152 = vmatpush.msra.mxu0 0.0
        %6153 = vmatpush.msra.mxu0 0.0
        %6154 = vmatpush.msra.mxu0 0.0
        %6155 = vmatpush.msra.mxu0 0.0
        %6156 = vmatpush.msra.mxu0 %v6136
        %6157 = vmatmul.f32.gmra.mxu0 %v6139
        %v6158 = vpop.f32.mrf.mxu0
        %v6159 = vadd.f32 0.0, %v6158
        %6160 = vdwg.mxu0
        %6161 = vrot.lane.b32.xlu0 %v739, 104
        %v6162 = vpop.permute.xlu0 %6161
        %v6165 = vsel %vm744, %v5498, 0
        %6167 = vmatpush.msra.mxu0 0.0
        %6168 = vmatpush.msra.mxu0 0.0
        %6169 = vmatpush.msra.mxu0 0.0
        %6170 = vmatpush.msra.mxu0 0.0
        %6171 = vmatpush.msra.mxu0 0.0
        %6172 = vmatpush.msra.mxu0 0.0
        %6173 = vmatpush.msra.mxu0 0.0
        %6174 = vmatpush.msra.mxu0 0.0
        %6175 = vmatpush.msra.mxu0 0.0
        %6176 = vmatpush.msra.mxu0 0.0
        %6177 = vmatpush.msra.mxu0 0.0
        %6178 = vmatpush.msra.mxu0 0.0
        %6179 = vmatpush.msra.mxu0 0.0
        %6180 = vmatpush.msra.mxu0 0.0
        %6181 = vmatpush.msra.mxu0 0.0
        %6182 = vmatpush.msra.mxu0 %v6162
        %6183 = vmatmul.f32.gmra.mxu0 %v6165
        %v6184 = vpop.f32.mrf.mxu0
        %v6185 = vadd.f32 0.0, %v6184
        %6186 = vdwg.mxu0
        %6187 = vrot.lane.b32.xlu0 %v742, 104
        %v6188 = vpop.permute.xlu0 %6187
        %v6191 = vsel %vm744, %v5499, 0
        %6193 = vmatpush.msra.mxu0 0.0
        %6194 = vmatpush.msra.mxu0 0.0
        %6195 = vmatpush.msra.mxu0 0.0
        %6196 = vmatpush.msra.mxu0 0.0
        %6197 = vmatpush.msra.mxu0 0.0
        %6198 = vmatpush.msra.mxu0 0.0
        %6199 = vmatpush.msra.mxu0 0.0
        %6200 = vmatpush.msra.mxu0 0.0
        %6201 = vmatpush.msra.mxu0 0.0
        %6202 = vmatpush.msra.mxu0 0.0
        %6203 = vmatpush.msra.mxu0 0.0
        %6204 = vmatpush.msra.mxu0 0.0
        %6205 = vmatpush.msra.mxu0 0.0
        %6206 = vmatpush.msra.mxu0 0.0
        %6207 = vmatpush.msra.mxu0 0.0
        %6208 = vmatpush.msra.mxu0 %v6188
        %6209 = vmatmul.f32.gmra.mxu0 %v6191
        %v6210 = vpop.f32.mrf.mxu0
        %v6211 = vadd.f32 0.0, %v6210
        %6212 = vdwg.mxu0
        %6229 = vrot.lane.b32.xlu0 %v5821, 24
        %v6230 = vpop.permute.xlu0 %6229
        %6231 = vrot.lane.b32.xlu0 %v5847, 24
        %v6232 = vpop.permute.xlu0 %6231
        %6233 = vrot.lane.b32.xlu0 %v5873, 24
        %v6234 = vpop.permute.xlu0 %6233
        %6235 = vrot.lane.b32.xlu0 %v5899, 24
        %v6236 = vpop.permute.xlu0 %6235
        %6237 = vrot.lane.b32.xlu0 %v5925, 24
        %v6238 = vpop.permute.xlu0 %6237
        %6239 = vrot.lane.b32.xlu0 %v5951, 24
        %v6240 = vpop.permute.xlu0 %6239
        %6241 = vrot.lane.b32.xlu0 %v5977, 24
        %v6242 = vpop.permute.xlu0 %6241
        %6243 = vrot.lane.b32.xlu0 %v6003, 24
        %v6244 = vpop.permute.xlu0 %6243
        %6245 = vrot.lane.b32.xlu0 %v6029, 24
        %v6246 = vpop.permute.xlu0 %6245
        %6247 = vrot.lane.b32.xlu0 %v6055, 24
        %v6248 = vpop.permute.xlu0 %6247
        %6249 = vrot.lane.b32.xlu0 %v6081, 24
        %v6250 = vpop.permute.xlu0 %6249
        %6251 = vrot.lane.b32.xlu0 %v6107, 24
        %v6252 = vpop.permute.xlu0 %6251
        %6253 = vrot.lane.b32.xlu0 %v6133, 24
        %v6254 = vpop.permute.xlu0 %6253
        %6255 = vrot.lane.b32.xlu0 %v6159, 24
        %v6256 = vpop.permute.xlu0 %6255
        %6257 = vrot.lane.b32.xlu0 %v6185, 24
        %v6258 = vpop.permute.xlu0 %6257
        %6259 = vrot.lane.b32.xlu0 %v6211, 24
        %v6260 = vpop.permute.xlu0 %6259
        %vm6277 = vcmask 261312
        %6278 = vst.msk [vmem:[#allocation2] sm:$0xff] %vm6277, %v6230
        %6279 = vst.msk [vmem:[#allocation2 + $0x8] sm:$0xff] %vm6277, %v6232
        %6280 = vst.msk [vmem:[#allocation2 + $0x10] sm:$0xff] %vm6277, %v6234
        %6281 = vst.msk [vmem:[#allocation2 + $0x18] sm:$0xff] %vm6277, %v6236
        %6282 = vst.msk [vmem:[#allocation2 + $0x20] sm:$0xff] %vm6277, %v6238
        %6283 = vst.msk [vmem:[#allocation2 + $0x28] sm:$0xff] %vm6277, %v6240
        %6284 = vst.msk [vmem:[#allocation2 + $0x30] sm:$0xff] %vm6277, %v6242
        %6285 = vst.msk [vmem:[#allocation2 + $0x38] sm:$0xff] %vm6277, %v6244
        %6286 = vst.msk [vmem:[#allocation2 + $0x40] sm:$0xff] %vm6277, %v6246
        %6287 = vst.msk [vmem:[#allocation2 + $0x48] sm:$0xff] %vm6277, %v6248
        %6288 = vst.msk [vmem:[#allocation2 + $0x50] sm:$0xff] %vm6277, %v6250
        %6289 = vst.msk [vmem:[#allocation2 + $0x58] sm:$0xff] %vm6277, %v6252
        %6290 = vst.msk [vmem:[#allocation2 + $0x60] sm:$0xff] %vm6277, %v6254
        %6291 = vst.msk [vmem:[#allocation2 + $0x68] sm:$0xff] %vm6277, %v6256
        %6292 = vst.msk [vmem:[#allocation2 + $0x70] sm:$0xff] %vm6277, %v6258
        %6293 = vst.msk [vmem:[#allocation2 + $0x78] sm:$0xff] %vm6277, %v6260
        %v6294 = vld [vmem:[#allocation2] sm:$0xff]
        %v6295 = vld [vmem:[#allocation2 + $0x8] sm:$0xff]
        %v6296 = vld [vmem:[#allocation2 + $0x10] sm:$0xff]
        %v6297 = vld [vmem:[#allocation2 + $0x18] sm:$0xff]
        %v6298 = vld [vmem:[#allocation2 + $0x20] sm:$0xff]
        %v6299 = vld [vmem:[#allocation2 + $0x28] sm:$0xff]
        %v6300 = vld [vmem:[#allocation2 + $0x30] sm:$0xff]
        %v6301 = vld [vmem:[#allocation2 + $0x38] sm:$0xff]
        %v6302 = vld [vmem:[#allocation2 + $0x40] sm:$0xff]
        %v6303 = vld [vmem:[#allocation2 + $0x48] sm:$0xff]
        %v6304 = vld [vmem:[#allocation2 + $0x50] sm:$0xff]
        %v6305 = vld [vmem:[#allocation2 + $0x58] sm:$0xff]
        %v6306 = vld [vmem:[#allocation2 + $0x60] sm:$0xff]
        %v6307 = vld [vmem:[#allocation2 + $0x68] sm:$0xff]
        %v6308 = vld [vmem:[#allocation2 + $0x70] sm:$0xff]
        %v6309 = vld [vmem:[#allocation2 + $0x78] sm:$0xff]
        %v6310 = vld [vmem:[#allocation11] sm:$0xff]
        %v6311 = vld [vmem:[#allocation11 + $0x8] sm:$0xff]
        %v6312 = vld [vmem:[#allocation11 + $0x10] sm:$0xff]
        %v6313 = vld [vmem:[#allocation11 + $0x18] sm:$0xff]
        %v6314 = vld [vmem:[%s8] sm:$0x1]
        %v6316 = vperm.slane %v6314, 0
        %v6319 = vsel %vm484, %v6294, 0
        %v6322 = vsel %vm484, %v6295, 0
        %v6325 = vsel %vm484, %v6296, 0
        %v6328 = vsel %vm484, %v6297, 0
        %v6331 = vsel %vm484, %v6298, 0
        %v6334 = vsel %vm484, %v6299, 0
        %v6337 = vsel %vm484, %v6300, 0
        %v6340 = vsel %vm484, %v6301, 0
        %v6343 = vsel %vm484, %v6302, 0
        %v6346 = vsel %vm484, %v6303, 0
        %v6349 = vsel %vm484, %v6304, 0
        %v6352 = vsel %vm484, %v6305, 0
        %v6355 = vsel %vm484, %v6306, 0
        %v6358 = vsel %vm484, %v6307, 0
        %v6361 = vsel %vm484, %v6308, 0
        %v6364 = vsel %vm484, %v6309, 0
        %6366 = vmatpush.msra.mxu0 0.0
        %6367 = vmatpush.msra.mxu0 0.0
        %6368 = vmatpush.msra.mxu0 0.0
        %6369 = vmatpush.msra.mxu0 0.0
        %6370 = vmatpush.msra.mxu0 0.0
        %6371 = vmatpush.msra.mxu0 0.0
        %6372 = vmatpush.msra.mxu0 0.0
        %6373 = vmatpush.msra.mxu0 0.0
        %6374 = vmatpush.msra.mxu0 0.0
        %6375 = vmatpush.msra.mxu0 0.0
        %6376 = vmatpush.msra.mxu0 0.0
        %6377 = vmatpush.msra.mxu0 0.0
        %6378 = vmatpush.msra.mxu0 %v6313
        %6379 = vmatpush.msra.mxu0 %v6312
        %6380 = vmatpush.msra.mxu0 %v6311
        %6381 = vmatpush.msra.mxu0 %v6310
        %6382 = vmatmul.f32.gmra.mxu0 %v6319
        %v6383 = vpop.f32.mrf.mxu0
        %v6384 = vadd.f32 %v6316, %v6383
        %6385 = vmatmul.f32.gmra.mxu0 %v6322
        %v6386 = vpop.f32.mrf.mxu0
        %v6387 = vadd.f32 %v6316, %v6386
        %6388 = vmatmul.f32.gmra.mxu0 %v6325
        %v6389 = vpop.f32.mrf.mxu0
        %v6390 = vadd.f32 %v6316, %v6389
        %6391 = vmatmul.f32.gmra.mxu0 %v6328
        %v6392 = vpop.f32.mrf.mxu0
        %v6393 = vadd.f32 %v6316, %v6392
        %6394 = vmatmul.f32.gmra.mxu0 %v6331
        %v6395 = vpop.f32.mrf.mxu0
        %v6396 = vadd.f32 %v6316, %v6395
        %6397 = vmatmul.f32.gmra.mxu0 %v6334
        %v6398 = vpop.f32.mrf.mxu0
        %v6399 = vadd.f32 %v6316, %v6398
        %6400 = vmatmul.f32.gmra.mxu0 %v6337
        %v6401 = vpop.f32.mrf.mxu0
        %v6402 = vadd.f32 %v6316, %v6401
        %6403 = vmatmul.f32.gmra.mxu0 %v6340
        %v6404 = vpop.f32.mrf.mxu0
        %v6405 = vadd.f32 %v6316, %v6404
        %6406 = vmatmul.f32.gmra.mxu0 %v6343
        %v6407 = vpop.f32.mrf.mxu0
        %v6408 = vadd.f32 %v6316, %v6407
        %6409 = vmatmul.f32.gmra.mxu0 %v6346
        %v6410 = vpop.f32.mrf.mxu0
        %v6411 = vadd.f32 %v6316, %v6410
        %6412 = vmatmul.f32.gmra.mxu0 %v6349
        %v6413 = vpop.f32.mrf.mxu0
        %v6414 = vadd.f32 %v6316, %v6413
        %6415 = vmatmul.f32.gmra.mxu0 %v6352
        %v6416 = vpop.f32.mrf.mxu0
        %v6417 = vadd.f32 %v6316, %v6416
        %6418 = vmatmul.f32.gmra.mxu0 %v6355
        %v6419 = vpop.f32.mrf.mxu0
        %v6420 = vadd.f32 %v6316, %v6419
        %6421 = vmatmul.f32.gmra.mxu0 %v6358
        %v6422 = vpop.f32.mrf.mxu0
        %v6423 = vadd.f32 %v6316, %v6422
        %6424 = vmatmul.f32.gmra.mxu0 %v6361
        %v6425 = vpop.f32.mrf.mxu0
        %v6426 = vadd.f32 %v6316, %v6425
        %6427 = vmatmul.f32.gmra.mxu0 %v6364
        %v6428 = vpop.f32.mrf.mxu0
        %v6429 = vadd.f32 %v6316, %v6428
        %6430 = vdwg.mxu0
        %6431 = vst.msk [vmem:[%s449] sm:$0xff] %vm484, %v6384
        %6432 = vst.msk [vmem:[%s449 + $0x8] sm:$0xff] %vm484, %v6387
        %6433 = vst.msk [vmem:[%s449 + $0x10] sm:$0xff] %vm484, %v6390
        %6434 = vst.msk [vmem:[%s449 + $0x18] sm:$0xff] %vm484, %v6393
        %6435 = vst.msk [vmem:[%s449 + $0x20] sm:$0xff] %vm484, %v6396
        %6436 = vst.msk [vmem:[%s449 + $0x28] sm:$0xff] %vm484, %v6399
        %6437 = vst.msk [vmem:[%s449 + $0x30] sm:$0xff] %vm484, %v6402
        %6438 = vst.msk [vmem:[%s449 + $0x38] sm:$0xff] %vm484, %v6405
        %6439 = vst.msk [vmem:[%s449 + $0x40] sm:$0xff] %vm484, %v6408
        %6440 = vst.msk [vmem:[%s449 + $0x48] sm:$0xff] %vm484, %v6411
        %6441 = vst.msk [vmem:[%s449 + $0x50] sm:$0xff] %vm484, %v6414
        %6442 = vst.msk [vmem:[%s449 + $0x58] sm:$0xff] %vm484, %v6417
        %6443 = vst.msk [vmem:[%s449 + $0x60] sm:$0xff] %vm484, %v6420
        %6444 = vst.msk [vmem:[%s449 + $0x68] sm:$0xff] %vm484, %v6423
        %6445 = vst.msk [vmem:[%s449 + $0x70] sm:$0xff] %vm484, %v6426
        %6446 = vst.msk [vmem:[%s449 + $0x78] sm:$0xff] %vm484, %v6429
        %s6447 = sand.u32 %s235, 1
        %s6448 = scalar_lea.sflag [#allocation5], %s6447
        %s6449 = sand.u32 %s235, 1
        %s6450 = smul.addr %s6449, 128
        %s6451 = scalar_lea.vmem [#allocation12], %s6450
        %s6452 = sand.u32 %s261, 1
        %s6453 = scalar_lea.sflag [#allocation14], %s6452
        %s6454 = sand.u32 %s261, 1
        %s6455 = smul.addr %s6454, 64
        %s6456 = scalar_lea.vmem [#allocation13], %s6455
        // Predicated region
        $region77: #{tpu_custom_call.1} parent=55 // pred_check
          %p6457 = pneg %p245
        $region78: #{tpu_custom_call.1} parent=55 // pred_check_branch
          %6459 = sbr.rel (%p6457) target = $region80
        $region79: #{tpu_custom_call.1} parent=55 // pred_region
          %s6460 = smul.u32 16, %s33
          %6462 = vsyncadd %s6448, 0
          %s6463 = smul.addr %s6460, 8
          %s6464 = scalar_lea.hbm %s9, %s6463
          %s6465 = sshll.u32 %s6451, 4
          %s6466 = int_to_ptr.vmem [resolvable:$true] %s6465
          %s6467 = sshll.u32 %s6464, 4
          %s6468 = int_to_ptr.hbm [resolvable:$true] %s6467
          %6473 = dma.vmem_to_hbm [thread:$0]  %s6466, 2048, %s6468, %s6448, 128, 128, 8
        $region80: #{tpu_custom_call.1} parent=55 // pred_fallthru
          _
        // Predicated region
        $region81: #{tpu_custom_call.1} parent=55 // pred_check
          %p6474 = pneg %p271
        $region82: #{tpu_custom_call.1} parent=55 // pred_check_branch
          %6476 = sbr.rel (%p6474) target = $region84
        $region83: #{tpu_custom_call.1} parent=55 // pred_region
          #allocation16 [shape = 'u32[6]{0}', space=smem, size = 0x18, scoped, tag = 'DMA stride descriptor']
          %s6477 = smul.u32 2, %s33
          %6479 = vsyncadd %s6453, 0
          %s6480 = smul.addr %s6477, 8
          %s6481 = scalar_lea.hbm %s10, %s6480
          %s6483 = sshll.u32 1, 14
          %s6484 = sxor.u32 4294967295, %s6483
          %s6487 = sshll.u32 7, 18
          %s6488 = sxor.u32 4294967295, %s6487
          %s6489 = sand.u32 0, %s6488
          %s6491 = sor.u32 %s6489, 0
          %s6492 = sshll.u32 %s6456, 4
          %s6493 = int_to_ptr.vmem [resolvable:$true] %s6492
          %s6494 = sshll.u32 %s6481, 4
          %s6495 = int_to_ptr.hbm [resolvable:$true] %s6494
          %6501 = sst [smem:[#allocation16]] 256
          %s6502 = scalar_lea.smem [#allocation16], 1
          %6503 = sst [smem:[%s6502]] 512
          %s6504 = scalar_lea.smem [#allocation16], 2
          %6505 = sst [smem:[%s6504]] 2
          %s6506 = scalar_lea.smem [#allocation16], 3
          %6507 = sst [smem:[%s6506]] 128
          %s6508 = scalar_lea.smem [#allocation16], 4
          %6509 = sst [smem:[%s6508]] 128
          %s6510 = scalar_lea.smem [#allocation16], 5
          %6511 = sst [smem:[%s6510]] 8
          %6513 = dma.general %s6493, 1024, %s6495, %s6453, [#allocation15], [#allocation16], %s6491, 0
        $region84: #{tpu_custom_call.1} parent=55 // pred_fallthru
          _
      $region56: #{tpu_custom_call.1} parent=5 // pred_fallthru
        _
      %p6514 = scmp.le.s32.totalorder 2, %s28
      // Predicated region
      $region85: #{tpu_custom_call.1} parent=5 // pred_check
        %p6515 = pneg %p6514
      $region86: #{tpu_custom_call.1} parent=5 // pred_check_branch
        %6517 = sbr.rel (%p6515) target = $region88
      $region87: #{tpu_custom_call.1} parent=5 // pred_region
        %s6518 = ssub.s32 %s28, 2
        // Predicated region
        $region89: #{tpu_custom_call.1} parent=87 // pred_check
          %p6519 = pneg %p251
        $region90: #{tpu_custom_call.1} parent=87 // pred_check_branch
          %6521 = sbr.rel (%p6519) target = $region92
        $region91: #{tpu_custom_call.1} parent=87 // pred_region
          %s6522 = sand.u32 %s236, 1
          %s6523 = scalar_lea.sflag [#allocation5], %s6522
          %s6524 = sand.u32 %s236, 1
          %s6525 = smul.addr %s6524, 128
          %s6526 = scalar_lea.vmem [#allocation12], %s6525
          %6528 = dma.done %s6523, 2048
        $region92: #{tpu_custom_call.1} parent=87 // pred_fallthru
          _
        // Predicated region
        $region93: #{tpu_custom_call.1} parent=87 // pred_check
          %p6529 = pneg %p277
        $region94: #{tpu_custom_call.1} parent=87 // pred_check_branch
          %6531 = sbr.rel (%p6529) target = $region96
        $region95: #{tpu_custom_call.1} parent=87 // pred_region
          %s6532 = sand.u32 %s262, 1
          %s6533 = scalar_lea.sflag [#allocation14], %s6532
          %s6534 = sand.u32 %s262, 1
          %s6535 = smul.addr %s6534, 64
          %s6536 = scalar_lea.vmem [#allocation13], %s6535
          %6538 = dma.done %s6533, 1024
        $region96: #{tpu_custom_call.1} parent=87 // pred_fallthru
          _
      $region88: #{tpu_custom_call.1} parent=5 // pred_fallthru
        _
    $region6: #{tpu_custom_call.1} parent=1 // loop_footer
      %s32 = sadd.s32 1, %s28
    $region7: #{tpu_custom_call.1} parent=1 // loop_footer_branch
      %27 = sbr.rel target = $region3
    $region8: #{tpu_custom_call.1} parent=1 // loop_exit
      _
    %6539 = vsyncpa [#allocation4], 1
    %s6540 = scalar_lea.sflag [#allocation4], 1
    %6541 = vsyncpa %s6540, 1
    %6542 = vsyncpa [#allocation7], 1
    %6543 = vsyncpa [#allocation10], 1
    %6544 = vsyncpa [#allocation5], 1
    %s6545 = scalar_lea.sflag [#allocation5], 1
    %6546 = vsyncpa %s6545, 1
    %6547 = vsyncpa [#allocation14], 1
    %s6548 = scalar_lea.sflag [#allocation14], 1
    %6549 = vsyncpa %s6548, 1

</llo_original>
